<compile_context>
chip_gen: v5e
topology: v5e:2x2
jax: 0.10.0
libtpu: 0.0.40
codegen_flags: <defaults>
</compile_context>

<pallas_src>
import functools

import jax
import jax.numpy as jnp
from jax.experimental import pallas as pl
from jax.experimental.pallas import tpu as pltpu

EPS = 1e-5          # torch.nn.LayerNorm default
LANE = 128          # pad final logits to a full lane width for unmasked stores
AFF_W = 256         # width of the packed affine buffer (max channel count)
DIMS_TAIL = [256, 256, 128, 64, 32]   # Mapper.dims[1:]


def _ln(h, g, b):
    """LayerNorm over the last dim; g/b are (1, C).
    d = h - mean is computed once and reused for the variance reduce and the
    output; rsqrt(var + eps) stays a (tb, 1) per-row factor."""
    mean = jnp.mean(h, axis=-1, keepdims=True)
    d = h - mean
    var = jnp.mean(d * d, axis=-1, keepdims=True)
    inv = jax.lax.rsqrt(var + EPS)
    return d * (inv * g) + b


def mapper_kernel(x_ref,
                  ws_ref,
                  w1a_ref, w1b_ref,
                  w2ad_ref, w2b_ref,
                  w3a_ref, w3d_ref, w3b_ref,
                  w4a_ref, w4d_ref, w4b_ref,
                  wl_ref, aff_ref,
                  o_ref):
    def aff(i, c):
        # packed gamma/beta: rows 2*i / 2*i+1, first c lanes are valid
        return aff_ref[2 * i:2 * i + 1, :c], aff_ref[2 * i + 1:2 * i + 2, :c]

    def dot(a, w_ref):
        # bf16 MXU operands, f32 accumulation
        return jnp.dot(a.astype(jnp.bfloat16), w_ref[...],
                       preferred_element_type=jnp.float32)

    x = x_ref[...].astype(jnp.float32)

    # stem: linear_1 -> ReLU -> LayerNorm -> Dropout(identity)
    g, b = aff(0, 256)
    h = _ln(jnp.maximum(dot(x, ws_ref), 0.0), g, b)

    # layer_1: 256 -> 256 (identity skip; lin_down not applied)
    ga, ba = aff(1, 256)
    gb, bb = aff(2, 256)
    t = jnp.maximum(_ln(dot(h, w1a_ref), ga, ba), 0.0)   # lin_1->norm->act->drop
    t = _ln(dot(t, w1b_ref), gb, bb)                     # lin_2->norm
    h = jnp.maximum(t + h, 0.0)                          # skip add -> act -> drop

    # layer_2: 256 -> 128 (projection skip). lin_1 / lin_down fused into one
    # 256-lane matmul; the split lands exactly on the 128-lane tile boundary.
    ga, ba = aff(3, 128)
    gb, bb = aff(4, 128)
    gd, bd = aff(5, 128)
    had = dot(h, w2ad_ref)                               # (tb, 256)
    t = jnp.maximum(_ln(had[:, :128], ga, ba), 0.0)
    t = _ln(dot(t, w2b_ref), gb, bb)
    hd = _ln(had[:, 128:], gd, bd)                       # norm_down(lin_down(x))
    h = jnp.maximum(t + hd, 0.0)

    # layer_3: 128 -> 64 (projection skip). Separate matmuls: a fused 128-wide
    # result would need sub-128-lane slices (XLU relayout) for zero MXU win.
    ga, ba = aff(6, 64)
    gb, bb = aff(7, 64)
    gd, bd = aff(8, 64)
    t = jnp.maximum(_ln(dot(h, w3a_ref), ga, ba), 0.0)
    t = _ln(dot(t, w3b_ref), gb, bb)
    hd = _ln(dot(h, w3d_ref), gd, bd)
    h = jnp.maximum(t + hd, 0.0)

    # layer_4: 64 -> 32 (projection skip)
    ga, ba = aff(9, 32)
    gb, bb = aff(10, 32)
    gd, bd = aff(11, 32)
    t = jnp.maximum(_ln(dot(h, w4a_ref), ga, ba), 0.0)
    t = _ln(dot(t, w4b_ref), gb, bb)
    hd = _ln(dot(h, w4d_ref), gd, bd)
    h = jnp.maximum(t + hd, 0.0)

    # linear_last (with bias); weight/bias zero-padded to 128 lanes so the
    # output store is a full-lane (unmasked) vst.
    logits = dot(h, wl_ref) + aff_ref[24:25, :LANE]
    o_ref[...] = logits.astype(o_ref.dtype)


def _choose_tiling(batch, cap=512):
    """Pad the batch to a multiple of the row tile instead of searching
    divisors of B.  Small batches run as a single full-tile step (no forced
    split on single-TC v5e/v6e); batches > cap use tb=cap, which yields >= 2
    'parallel' steps so v7x's two TensorCores both get full-MXU tiles."""
    bp = ((batch + 7) // 8) * 8          # rows padded to sublane multiple
    if bp <= cap:
        return bp, bp
    tb = cap
    bp = ((bp + tb - 1) // tb) * tb
    return tb, bp


@functools.partial(jax.jit, static_argnames=("num_classes",))
def mapper_forward(x, params, *, num_classes):
    """params: tuple of kernel operands from pack_params (bf16 weights,
    transposed / concatenated / lane-padded, plus one packed affine array)."""
    B, z_dim = x.shape
    tb, Bp = _choose_tiling(B)
    if Bp != B:
        x = jnp.pad(x, ((0, Bp - B), (0, 0)))

    const = lambda p: pl.BlockSpec(p.shape, lambda i: (0, 0))
    in_specs = [pl.BlockSpec((tb, z_dim), lambda i: (i, 0))]
    in_specs += [const(p) for p in params]

    out = pl.pallas_call(
        mapper_kernel,
        out_shape=jax.ShapeDtypeStruct((Bp, LANE), x.dtype),
        grid_spec=pltpu.PrefetchScalarGridSpec(
            num_scalar_prefetch=0,
            grid=(Bp // tb,),
            in_specs=in_specs,
            out_specs=pl.BlockSpec((tb, LANE), lambda i: (i, 0)),
        ),
        compiler_params=pltpu.CompilerParams(
            dimension_semantics=("parallel",)),
    )(x, *params)
    return out[:B, :num_classes]


# ---------------------------------------------------------------------------
# Parameter construction (PyTorch layout: Linear weight is (out, in)).
# ---------------------------------------------------------------------------
def init_params(key, z_dim, num_classes):
    dims = [z_dim] + DIMS_TAIL
    keys = iter(jax.random.split(key, 64))

    def lin(cout, cin):
        bound = cin ** -0.5
        return jax.random.uniform(next(keys), (cout, cin), jnp.float32,
                                  -bound, bound)

    def ln_aff(c):
        # random affine so the test exercises gamma/beta (torch init is 1/0)
        g = 1.0 + 0.1 * jax.random.normal(next(keys), (1, c), jnp.float32)
        b = 0.1 * jax.random.normal(next(keys), (1, c), jnp.float32)
        return g, b

    p = {}
    p["Ws"] = lin(dims[1], dims[0])
    p["gs"], p["bs"] = ln_aff(dims[1])
    for L in (1, 2, 3, 4):
        cin, cout = dims[L], dims[L + 1]
        p[f"W{L}a"] = lin(cout, cin)
        p[f"g{L}a"], p[f"b{L}a"] = ln_aff(cout)
        p[f"W{L}b"] = lin(cout, cout)
        p[f"g{L}b"], p[f"b{L}b"] = ln_aff(cout)
        if cin != cout:
            p[f"W{L}d"] = lin(cout, cin)
            p[f"g{L}d"], p[f"b{L}d"] = ln_aff(cout)
    bound = dims[5] ** -0.5
    p["Wl"] = jax.random.uniform(next(keys), (num_classes, dims[5]),
                                 jnp.float32, -bound, bound)
    p["bl"] = jax.random.uniform(next(keys), (num_classes,),
                                 jnp.float32, -bound, bound)
    return p


# Order of LayerNorm affines inside the packed (25, 256) buffer.
_AFF_ORDER = [("gs", "bs"),
              ("g1a", "b1a"), ("g1b", "b1b"),
              ("g2a", "b2a"), ("g2b", "b2b"), ("g2d", "b2d"),
              ("g3a", "b3a"), ("g3b", "b3b"), ("g3d", "b3d"),
              ("g4a", "b4a"), ("g4b", "b4b"), ("g4d", "b4d")]


def pack_params(p):
    """Transpose to (in, out) and cast weights to bf16; concatenate
    [W2a^T | W2d^T] for layer_2 only; pad the classifier to LANE output
    columns; pack all gamma/beta (+ classifier bias) into one (25,256) f32."""
    b16 = lambda w: w.T.astype(jnp.bfloat16)

    ws = b16(p["Ws"])
    w1a, w1b = b16(p["W1a"]), b16(p["W1b"])
    w2ad = jnp.concatenate([p["W2a"].T, p["W2d"].T], axis=1).astype(jnp.bfloat16)
    w2b = b16(p["W2b"])
    w3a, w3d, w3b = b16(p["W3a"]), b16(p["W3d"]), b16(p["W3b"])
    w4a, w4d, w4b = b16(p["W4a"]), b16(p["W4d"]), b16(p["W4b"])

    nc, cin = p["Wl"].shape
    assert nc <= LANE
    wl = (jnp.zeros((cin, LANE), jnp.float32)
          .at[:, :nc].set(p["Wl"].T)).astype(jnp.bfloat16)

    aff = jnp.zeros((25, AFF_W), jnp.float32)
    for i, (gk, bk) in enumerate(_AFF_ORDER):
        c = p[gk].shape[-1]
        aff = aff.at[2 * i, :c].set(p[gk][0])
        aff = aff.at[2 * i + 1, :c].set(p[bk][0])
    aff = aff.at[24, :nc].set(p["bl"])

    return (ws, w1a, w1b, w2ad, w2b, w3a, w3d, w3b, w4a, w4d, w4b, wl, aff)


def reference(x, p, *, bf16=True):
    """Pure-JAX forward matching the PyTorch module (eval mode), unfused.
    With bf16=True it mirrors the kernel's bf16-operand / f32-accumulate dots
    (so the allclose check is tight); bf16=False is the exact-f32 module."""
    cast = (lambda a: a.astype(jnp.bfloat16)) if bf16 else (lambda a: a)

    def mm(a, w):   # w in torch layout (out, in)
        return jnp.dot(cast(a), cast(w.T), preferred_element_type=jnp.float32)

    def ln(h, g, b):
        m = jnp.mean(h, -1, keepdims=True)
        d = h - m
        v = jnp.mean(d * d, -1, keepdims=True)
        return d * jax.lax.rsqrt(v + EPS) * g + b

    relu = lambda t: jnp.maximum(t, 0.0)

    h = ln(relu(mm(x, p["Ws"])), p["gs"], p["bs"])
    # layer_1 (identity skip)
    t = relu(ln(mm(h, p["W1a"]), p["g1a"], p["b1a"]))
    t = ln(mm(t, p["W1b"]), p["g1b"], p["b1b"])
    h = relu(t + h)
    # layer_2..4 (projection skip)
    for L in (2, 3, 4):
        t = relu(ln(mm(h, p[f"W{L}a"]), p[f"g{L}a"], p[f"b{L}a"]))
        t = ln(mm(t, p[f"W{L}b"]), p[f"g{L}b"], p[f"b{L}b"])
        hd = ln(mm(h, p[f"W{L}d"]), p[f"g{L}d"], p[f"b{L}d"])
        h = relu(t + hd)
    return mm(h, p["Wl"]) + p["bl"][None, :]


if __name__ == "__main__":
    # B deliberately not a multiple of 8 to exercise the batch-padding path.
    B, z_dim, num_classes = 50, 32, 10

    key = jax.random.PRNGKey(0)
    kx, kp = jax.random.split(key)
    x = jax.random.normal(kx, (B, z_dim), dtype=jnp.float32)

    raw = init_params(kp, z_dim, num_classes)
    ops = pack_params(raw)

    out = mapper_forward(x, ops, num_classes=num_classes)
    out = jax.block_until_ready(out)
    assert out.shape == (B, num_classes)

    # tight check vs. a reference using the same bf16-operand dots
    ref_bf16 = reference(x, raw, bf16=True)
    err = jnp.max(jnp.abs(out - ref_bf16))
    assert jnp.allclose(out, ref_bf16, atol=5e-3, rtol=5e-3), \
        f"mismatch vs bf16-dot reference, max err {err}"

    # informational: distance to the exact-f32 module forward
    ref_f32 = reference(x, raw, bf16=False)
    err_f32 = jnp.max(jnp.abs(out - ref_f32))
    # (bf16 MXU rounding; expected to be O(1e-2) on O(1) logits)
    _ = err_f32

    print("KERNEL_OK")
</pallas_src>

<mosaic_0001>
module attributes {stable_mosaic.version = 11 : i64} {
  func.func @mapper_kernel(%arg0: i32, %arg1: memref<56x32xf32, #tpu.memory_space<vmem>>, %arg2: memref<32x256xbf16, #tpu.memory_space<vmem>>, %arg3: memref<256x256xbf16, #tpu.memory_space<vmem>>, %arg4: memref<256x256xbf16, #tpu.memory_space<vmem>>, %arg5: memref<256x256xbf16, #tpu.memory_space<vmem>>, %arg6: memref<128x128xbf16, #tpu.memory_space<vmem>>, %arg7: memref<128x64xbf16, #tpu.memory_space<vmem>>, %arg8: memref<128x64xbf16, #tpu.memory_space<vmem>>, %arg9: memref<64x64xbf16, #tpu.memory_space<vmem>>, %arg10: memref<64x32xbf16, #tpu.memory_space<vmem>>, %arg11: memref<64x32xbf16, #tpu.memory_space<vmem>>, %arg12: memref<32x32xbf16, #tpu.memory_space<vmem>>, %arg13: memref<32x128xbf16, #tpu.memory_space<vmem>>, %arg14: memref<25x256xf32, #tpu.memory_space<vmem>>, %arg15: memref<56x128xf32, #tpu.memory_space<vmem>>) attributes {dimension_semantics = [#tpu.dimension_semantics<parallel>], iteration_bounds = array<i64: 1>, scalar_prefetch = 0 : i64, scratch_operands = 0 : i64, tpu.core_type = #tpu.core_type<tc>, window_params = [{transform_indices = @transform_0, window_bounds = array<i64: 56, 32>}, {pipeline_mode = #tpu.pipeline_mode<synchronous>, transform_indices = @transform_1, window_bounds = array<i64: 32, 256>}, {pipeline_mode = #tpu.pipeline_mode<synchronous>, transform_indices = @transform_2, window_bounds = array<i64: 256, 256>}, {pipeline_mode = #tpu.pipeline_mode<synchronous>, transform_indices = @transform_3, window_bounds = array<i64: 256, 256>}, {pipeline_mode = #tpu.pipeline_mode<synchronous>, transform_indices = @transform_4, window_bounds = array<i64: 256, 256>}, {pipeline_mode = #tpu.pipeline_mode<synchronous>, transform_indices = @transform_5, window_bounds = array<i64: 128, 128>}, {pipeline_mode = #tpu.pipeline_mode<synchronous>, transform_indices = @transform_6, window_bounds = array<i64: 128, 64>}, {pipeline_mode = #tpu.pipeline_mode<synchronous>, transform_indices = @transform_7, window_bounds = array<i64: 128, 64>}, {pipeline_mode = #tpu.pipeline_mode<synchronous>, transform_indices = @transform_8, window_bounds = array<i64: 64, 64>}, {pipeline_mode = #tpu.pipeline_mode<synchronous>, transform_indices = @transform_9, window_bounds = array<i64: 64, 32>}, {pipeline_mode = #tpu.pipeline_mode<synchronous>, transform_indices = @transform_10, window_bounds = array<i64: 64, 32>}, {pipeline_mode = #tpu.pipeline_mode<synchronous>, transform_indices = @transform_11, window_bounds = array<i64: 32, 32>}, {pipeline_mode = #tpu.pipeline_mode<synchronous>, transform_indices = @transform_12, window_bounds = array<i64: 32, 128>}, {pipeline_mode = #tpu.pipeline_mode<synchronous>, transform_indices = @transform_13, window_bounds = array<i64: 25, 256>}, {transform_indices = @transform_14, window_bounds = array<i64: 56, 128>}]} {
    %c0 = arith.constant 0 : index
    %c0_0 = arith.constant 0 : index
    %0 = vector.load %arg1[%c0, %c0_0] : memref<56x32xf32, #tpu.memory_space<vmem>>, vector<56x32xf32>
    %c0_1 = arith.constant 0 : index
    %c0_2 = arith.constant 0 : index
    %1 = vector.load %arg14[%c0_1, %c0_2] : memref<25x256xf32, #tpu.memory_space<vmem>>, vector<1x256xf32>
    %c1 = arith.constant 1 : index
    %c0_3 = arith.constant 0 : index
    %2 = vector.load %arg14[%c1, %c0_3] : memref<25x256xf32, #tpu.memory_space<vmem>>, vector<1x256xf32>
    %3 = arith.truncf %0 : vector<56x32xf32> to vector<56x32xbf16>
    %c0_4 = arith.constant 0 : index
    %c0_5 = arith.constant 0 : index
    %4 = vector.load %arg2[%c0_4, %c0_5] : memref<32x256xbf16, #tpu.memory_space<vmem>>, vector<32x256xbf16>
    %cst = arith.constant dense<0.000000e+00> : vector<56x256xf32>
    %5 = tpu.matmul %3, %4, %cst {dimension_numbers = #tpu.dot_dimension_numbers<[1], [0], [0], [1], [0, 0, 1, 1], [], []>} : vector<56x32xbf16>, vector<32x256xbf16>, vector<56x256xf32> -> vector<56x256xf32>
    %cst_6 = arith.constant 0.000000e+00 : f32
    %6 = vector.broadcast %cst_6 : f32 to vector<56x256xf32>
    %7 = arith.maximumf %5, %6 : vector<56x256xf32>
    %cst_7 = arith.constant dense<0.000000e+00> : vector<56xf32>
    %8 = vector.multi_reduction <add>, %7, %cst_7 [1] : vector<56x256xf32> to vector<56xf32>
    %9 = vector.shape_cast %8 : vector<56xf32> to vector<56x1xf32>
    %cst_8 = arith.constant 2.560000e+02 : f32
    %10 = vector.broadcast %cst_8 : f32 to vector<56x1xf32>
    %11 = arith.divf %9, %10 : vector<56x1xf32>
    %12 = vector.broadcast %11 : vector<56x1xf32> to vector<56x256xf32>
    %13 = arith.subf %7, %12 : vector<56x256xf32>
    %14 = arith.mulf %13, %13 : vector<56x256xf32>
    %cst_9 = arith.constant dense<0.000000e+00> : vector<56xf32>
    %15 = vector.multi_reduction <add>, %14, %cst_9 [1] : vector<56x256xf32> to vector<56xf32>
    %16 = vector.shape_cast %15 : vector<56xf32> to vector<56x1xf32>
    %cst_10 = arith.constant 2.560000e+02 : f32
    %17 = vector.broadcast %cst_10 : f32 to vector<56x1xf32>
    %18 = arith.divf %16, %17 : vector<56x1xf32>
    %cst_11 = arith.constant 9.99999974E-6 : f32
    %19 = vector.broadcast %cst_11 : f32 to vector<56x1xf32>
    %20 = arith.addf %18, %19 : vector<56x1xf32>
    %21 = math.rsqrt %20 : vector<56x1xf32>
    %22 = vector.broadcast %21 : vector<56x1xf32> to vector<56x256xf32>
    %23 = vector.broadcast %1 : vector<1x256xf32> to vector<56x256xf32>
    %24 = arith.mulf %22, %23 : vector<56x256xf32>
    %25 = arith.mulf %13, %24 : vector<56x256xf32>
    %26 = vector.broadcast %2 : vector<1x256xf32> to vector<56x256xf32>
    %27 = arith.addf %25, %26 : vector<56x256xf32>
    %c2 = arith.constant 2 : index
    %c0_12 = arith.constant 0 : index
    %28 = vector.load %arg14[%c2, %c0_12] : memref<25x256xf32, #tpu.memory_space<vmem>>, vector<1x256xf32>
    %c3 = arith.constant 3 : index
    %c0_13 = arith.constant 0 : index
    %29 = vector.load %arg14[%c3, %c0_13] : memref<25x256xf32, #tpu.memory_space<vmem>>, vector<1x256xf32>
    %c4 = arith.constant 4 : index
    %c0_14 = arith.constant 0 : index
    %30 = vector.load %arg14[%c4, %c0_14] : memref<25x256xf32, #tpu.memory_space<vmem>>, vector<1x256xf32>
    %c5 = arith.constant 5 : index
    %c0_15 = arith.constant 0 : index
    %31 = vector.load %arg14[%c5, %c0_15] : memref<25x256xf32, #tpu.memory_space<vmem>>, vector<1x256xf32>
    %32 = arith.truncf %27 : vector<56x256xf32> to vector<56x256xbf16>
    %c0_16 = arith.constant 0 : index
    %c0_17 = arith.constant 0 : index
    %33 = vector.load %arg3[%c0_16, %c0_17] : memref<256x256xbf16, #tpu.memory_space<vmem>>, vector<256x256xbf16>
    %cst_18 = arith.constant dense<0.000000e+00> : vector<56x256xf32>
    %34 = tpu.matmul %32, %33, %cst_18 {dimension_numbers = #tpu.dot_dimension_numbers<[1], [0], [0], [1], [0, 0, 1, 1], [], []>} : vector<56x256xbf16>, vector<256x256xbf16>, vector<56x256xf32> -> vector<56x256xf32>
    %cst_19 = arith.constant dense<0.000000e+00> : vector<56xf32>
    %35 = vector.multi_reduction <add>, %34, %cst_19 [1] : vector<56x256xf32> to vector<56xf32>
    %36 = vector.shape_cast %35 : vector<56xf32> to vector<56x1xf32>
    %cst_20 = arith.constant 2.560000e+02 : f32
    %37 = vector.broadcast %cst_20 : f32 to vector<56x1xf32>
    %38 = arith.divf %36, %37 : vector<56x1xf32>
    %39 = vector.broadcast %38 : vector<56x1xf32> to vector<56x256xf32>
    %40 = arith.subf %34, %39 : vector<56x256xf32>
    %41 = arith.mulf %40, %40 : vector<56x256xf32>
    %cst_21 = arith.constant dense<0.000000e+00> : vector<56xf32>
    %42 = vector.multi_reduction <add>, %41, %cst_21 [1] : vector<56x256xf32> to vector<56xf32>
    %43 = vector.shape_cast %42 : vector<56xf32> to vector<56x1xf32>
    %cst_22 = arith.constant 2.560000e+02 : f32
    %44 = vector.broadcast %cst_22 : f32 to vector<56x1xf32>
    %45 = arith.divf %43, %44 : vector<56x1xf32>
    %cst_23 = arith.constant 9.99999974E-6 : f32
    %46 = vector.broadcast %cst_23 : f32 to vector<56x1xf32>
    %47 = arith.addf %45, %46 : vector<56x1xf32>
    %48 = math.rsqrt %47 : vector<56x1xf32>
    %49 = vector.broadcast %48 : vector<56x1xf32> to vector<56x256xf32>
    %50 = vector.broadcast %28 : vector<1x256xf32> to vector<56x256xf32>
    %51 = arith.mulf %49, %50 : vector<56x256xf32>
    %52 = arith.mulf %40, %51 : vector<56x256xf32>
    %53 = vector.broadcast %29 : vector<1x256xf32> to vector<56x256xf32>
    %54 = arith.addf %52, %53 : vector<56x256xf32>
    %cst_24 = arith.constant 0.000000e+00 : f32
    %55 = vector.broadcast %cst_24 : f32 to vector<56x256xf32>
    %56 = arith.maximumf %54, %55 : vector<56x256xf32>
    %57 = arith.truncf %56 : vector<56x256xf32> to vector<56x256xbf16>
    %c0_25 = arith.constant 0 : index
    %c0_26 = arith.constant 0 : index
    %58 = vector.load %arg4[%c0_25, %c0_26] : memref<256x256xbf16, #tpu.memory_space<vmem>>, vector<256x256xbf16>
    %cst_27 = arith.constant dense<0.000000e+00> : vector<56x256xf32>
    %59 = tpu.matmul %57, %58, %cst_27 {dimension_numbers = #tpu.dot_dimension_numbers<[1], [0], [0], [1], [0, 0, 1, 1], [], []>} : vector<56x256xbf16>, vector<256x256xbf16>, vector<56x256xf32> -> vector<56x256xf32>
    %cst_28 = arith.constant dense<0.000000e+00> : vector<56xf32>
    %60 = vector.multi_reduction <add>, %59, %cst_28 [1] : vector<56x256xf32> to vector<56xf32>
    %61 = vector.shape_cast %60 : vector<56xf32> to vector<56x1xf32>
    %cst_29 = arith.constant 2.560000e+02 : f32
    %62 = vector.broadcast %cst_29 : f32 to vector<56x1xf32>
    %63 = arith.divf %61, %62 : vector<56x1xf32>
    %64 = vector.broadcast %63 : vector<56x1xf32> to vector<56x256xf32>
    %65 = arith.subf %59, %64 : vector<56x256xf32>
    %66 = arith.mulf %65, %65 : vector<56x256xf32>
    %cst_30 = arith.constant dense<0.000000e+00> : vector<56xf32>
    %67 = vector.multi_reduction <add>, %66, %cst_30 [1] : vector<56x256xf32> to vector<56xf32>
    %68 = vector.shape_cast %67 : vector<56xf32> to vector<56x1xf32>
    %cst_31 = arith.constant 2.560000e+02 : f32
    %69 = vector.broadcast %cst_31 : f32 to vector<56x1xf32>
    %70 = arith.divf %68, %69 : vector<56x1xf32>
    %cst_32 = arith.constant 9.99999974E-6 : f32
    %71 = vector.broadcast %cst_32 : f32 to vector<56x1xf32>
    %72 = arith.addf %70, %71 : vector<56x1xf32>
    %73 = math.rsqrt %72 : vector<56x1xf32>
    %74 = vector.broadcast %73 : vector<56x1xf32> to vector<56x256xf32>
    %75 = vector.broadcast %30 : vector<1x256xf32> to vector<56x256xf32>
    %76 = arith.mulf %74, %75 : vector<56x256xf32>
    %77 = arith.mulf %65, %76 : vector<56x256xf32>
    %78 = vector.broadcast %31 : vector<1x256xf32> to vector<56x256xf32>
    %79 = arith.addf %77, %78 : vector<56x256xf32>
    %80 = arith.addf %79, %27 : vector<56x256xf32>
    %cst_33 = arith.constant 0.000000e+00 : f32
    %81 = vector.broadcast %cst_33 : f32 to vector<56x256xf32>
    %82 = arith.maximumf %80, %81 : vector<56x256xf32>
    %c6 = arith.constant 6 : index
    %c0_34 = arith.constant 0 : index
    %83 = vector.load %arg14[%c6, %c0_34] : memref<25x256xf32, #tpu.memory_space<vmem>>, vector<1x128xf32>
    %c7 = arith.constant 7 : index
    %c0_35 = arith.constant 0 : index
    %84 = vector.load %arg14[%c7, %c0_35] : memref<25x256xf32, #tpu.memory_space<vmem>>, vector<1x128xf32>
    %c8 = arith.constant 8 : index
    %c0_36 = arith.constant 0 : index
    %85 = vector.load %arg14[%c8, %c0_36] : memref<25x256xf32, #tpu.memory_space<vmem>>, vector<1x128xf32>
    %c9 = arith.constant 9 : index
    %c0_37 = arith.constant 0 : index
    %86 = vector.load %arg14[%c9, %c0_37] : memref<25x256xf32, #tpu.memory_space<vmem>>, vector<1x128xf32>
    %c10 = arith.constant 10 : index
    %c0_38 = arith.constant 0 : index
    %87 = vector.load %arg14[%c10, %c0_38] : memref<25x256xf32, #tpu.memory_space<vmem>>, vector<1x128xf32>
    %c11 = arith.constant 11 : index
    %c0_39 = arith.constant 0 : index
    %88 = vector.load %arg14[%c11, %c0_39] : memref<25x256xf32, #tpu.memory_space<vmem>>, vector<1x128xf32>
    %89 = arith.truncf %82 : vector<56x256xf32> to vector<56x256xbf16>
    %c0_40 = arith.constant 0 : index
    %c0_41 = arith.constant 0 : index
    %90 = vector.load %arg5[%c0_40, %c0_41] : memref<256x256xbf16, #tpu.memory_space<vmem>>, vector<256x256xbf16>
    %cst_42 = arith.constant dense<0.000000e+00> : vector<56x256xf32>
    %91 = tpu.matmul %89, %90, %cst_42 {dimension_numbers = #tpu.dot_dimension_numbers<[1], [0], [0], [1], [0, 0, 1, 1], [], []>} : vector<56x256xbf16>, vector<256x256xbf16>, vector<56x256xf32> -> vector<56x256xf32>
    %92 = vector.extract_strided_slice %91 {offsets = [0, 0], sizes = [56, 128], strides = [1, 1]} : vector<56x256xf32> to vector<56x128xf32>
    %cst_43 = arith.constant dense<0.000000e+00> : vector<56xf32>
    %93 = vector.multi_reduction <add>, %92, %cst_43 [1] : vector<56x128xf32> to vector<56xf32>
    %94 = vector.shape_cast %93 : vector<56xf32> to vector<56x1xf32>
    %cst_44 = arith.constant 1.280000e+02 : f32
    %95 = vector.broadcast %cst_44 : f32 to vector<56x1xf32>
    %96 = arith.divf %94, %95 : vector<56x1xf32>
    %97 = vector.broadcast %96 : vector<56x1xf32> to vector<56x128xf32>
    %98 = arith.subf %92, %97 : vector<56x128xf32>
    %99 = arith.mulf %98, %98 : vector<56x128xf32>
    %cst_45 = arith.constant dense<0.000000e+00> : vector<56xf32>
    %100 = vector.multi_reduction <add>, %99, %cst_45 [1] : vector<56x128xf32> to vector<56xf32>
    %101 = vector.shape_cast %100 : vector<56xf32> to vector<56x1xf32>
    %cst_46 = arith.constant 1.280000e+02 : f32
    %102 = vector.broadcast %cst_46 : f32 to vector<56x1xf32>
    %103 = arith.divf %101, %102 : vector<56x1xf32>
    %cst_47 = arith.constant 9.99999974E-6 : f32
    %104 = vector.broadcast %cst_47 : f32 to vector<56x1xf32>
    %105 = arith.addf %103, %104 : vector<56x1xf32>
    %106 = math.rsqrt %105 : vector<56x1xf32>
    %107 = vector.broadcast %106 : vector<56x1xf32> to vector<56x128xf32>
    %108 = vector.broadcast %83 : vector<1x128xf32> to vector<56x128xf32>
    %109 = arith.mulf %107, %108 : vector<56x128xf32>
    %110 = arith.mulf %98, %109 : vector<56x128xf32>
    %111 = vector.broadcast %84 : vector<1x128xf32> to vector<56x128xf32>
    %112 = arith.addf %110, %111 : vector<56x128xf32>
    %cst_48 = arith.constant 0.000000e+00 : f32
    %113 = vector.broadcast %cst_48 : f32 to vector<56x128xf32>
    %114 = arith.maximumf %112, %113 : vector<56x128xf32>
    %115 = arith.truncf %114 : vector<56x128xf32> to vector<56x128xbf16>
    %c0_49 = arith.constant 0 : index
    %c0_50 = arith.constant 0 : index
    %116 = vector.load %arg6[%c0_49, %c0_50] : memref<128x128xbf16, #tpu.memory_space<vmem>>, vector<128x128xbf16>
    %cst_51 = arith.constant dense<0.000000e+00> : vector<56x128xf32>
    %117 = tpu.matmul %115, %116, %cst_51 {dimension_numbers = #tpu.dot_dimension_numbers<[1], [0], [0], [1], [0, 0, 1, 1], [], []>} : vector<56x128xbf16>, vector<128x128xbf16>, vector<56x128xf32> -> vector<56x128xf32>
    %cst_52 = arith.constant dense<0.000000e+00> : vector<56xf32>
    %118 = vector.multi_reduction <add>, %117, %cst_52 [1] : vector<56x128xf32> to vector<56xf32>
    %119 = vector.shape_cast %118 : vector<56xf32> to vector<56x1xf32>
    %cst_53 = arith.constant 1.280000e+02 : f32
    %120 = vector.broadcast %cst_53 : f32 to vector<56x1xf32>
    %121 = arith.divf %119, %120 : vector<56x1xf32>
    %122 = vector.broadcast %121 : vector<56x1xf32> to vector<56x128xf32>
    %123 = arith.subf %117, %122 : vector<56x128xf32>
    %124 = arith.mulf %123, %123 : vector<56x128xf32>
    %cst_54 = arith.constant dense<0.000000e+00> : vector<56xf32>
    %125 = vector.multi_reduction <add>, %124, %cst_54 [1] : vector<56x128xf32> to vector<56xf32>
    %126 = vector.shape_cast %125 : vector<56xf32> to vector<56x1xf32>
    %cst_55 = arith.constant 1.280000e+02 : f32
    %127 = vector.broadcast %cst_55 : f32 to vector<56x1xf32>
    %128 = arith.divf %126, %127 : vector<56x1xf32>
    %cst_56 = arith.constant 9.99999974E-6 : f32
    %129 = vector.broadcast %cst_56 : f32 to vector<56x1xf32>
    %130 = arith.addf %128, %129 : vector<56x1xf32>
    %131 = math.rsqrt %130 : vector<56x1xf32>
    %132 = vector.broadcast %131 : vector<56x1xf32> to vector<56x128xf32>
    %133 = vector.broadcast %85 : vector<1x128xf32> to vector<56x128xf32>
    %134 = arith.mulf %132, %133 : vector<56x128xf32>
    %135 = arith.mulf %123, %134 : vector<56x128xf32>
    %136 = vector.broadcast %86 : vector<1x128xf32> to vector<56x128xf32>
    %137 = arith.addf %135, %136 : vector<56x128xf32>
    %138 = vector.extract_strided_slice %91 {offsets = [0, 128], sizes = [56, 128], strides = [1, 1]} : vector<56x256xf32> to vector<56x128xf32>
    %cst_57 = arith.constant dense<0.000000e+00> : vector<56xf32>
    %139 = vector.multi_reduction <add>, %138, %cst_57 [1] : vector<56x128xf32> to vector<56xf32>
    %140 = vector.shape_cast %139 : vector<56xf32> to vector<56x1xf32>
    %cst_58 = arith.constant 1.280000e+02 : f32
    %141 = vector.broadcast %cst_58 : f32 to vector<56x1xf32>
    %142 = arith.divf %140, %141 : vector<56x1xf32>
    %143 = vector.broadcast %142 : vector<56x1xf32> to vector<56x128xf32>
    %144 = arith.subf %138, %143 : vector<56x128xf32>
    %145 = arith.mulf %144, %144 : vector<56x128xf32>
    %cst_59 = arith.constant dense<0.000000e+00> : vector<56xf32>
    %146 = vector.multi_reduction <add>, %145, %cst_59 [1] : vector<56x128xf32> to vector<56xf32>
    %147 = vector.shape_cast %146 : vector<56xf32> to vector<56x1xf32>
    %cst_60 = arith.constant 1.280000e+02 : f32
    %148 = vector.broadcast %cst_60 : f32 to vector<56x1xf32>
    %149 = arith.divf %147, %148 : vector<56x1xf32>
    %cst_61 = arith.constant 9.99999974E-6 : f32
    %150 = vector.broadcast %cst_61 : f32 to vector<56x1xf32>
    %151 = arith.addf %149, %150 : vector<56x1xf32>
    %152 = math.rsqrt %151 : vector<56x1xf32>
    %153 = vector.broadcast %152 : vector<56x1xf32> to vector<56x128xf32>
    %154 = vector.broadcast %87 : vector<1x128xf32> to vector<56x128xf32>
    %155 = arith.mulf %153, %154 : vector<56x128xf32>
    %156 = arith.mulf %144, %155 : vector<56x128xf32>
    %157 = vector.broadcast %88 : vector<1x128xf32> to vector<56x128xf32>
    %158 = arith.addf %156, %157 : vector<56x128xf32>
    %159 = arith.addf %137, %158 : vector<56x128xf32>
    %cst_62 = arith.constant 0.000000e+00 : f32
    %160 = vector.broadcast %cst_62 : f32 to vector<56x128xf32>
    %161 = arith.maximumf %159, %160 : vector<56x128xf32>
    %c12 = arith.constant 12 : index
    %c0_63 = arith.constant 0 : index
    %162 = vector.load %arg14[%c12, %c0_63] : memref<25x256xf32, #tpu.memory_space<vmem>>, vector<1x64xf32>
    %c13 = arith.constant 13 : index
    %c0_64 = arith.constant 0 : index
    %163 = vector.load %arg14[%c13, %c0_64] : memref<25x256xf32, #tpu.memory_space<vmem>>, vector<1x64xf32>
    %c14 = arith.constant 14 : index
    %c0_65 = arith.constant 0 : index
    %164 = vector.load %arg14[%c14, %c0_65] : memref<25x256xf32, #tpu.memory_space<vmem>>, vector<1x64xf32>
    %c15 = arith.constant 15 : index
    %c0_66 = arith.constant 0 : index
    %165 = vector.load %arg14[%c15, %c0_66] : memref<25x256xf32, #tpu.memory_space<vmem>>, vector<1x64xf32>
    %c16 = arith.constant 16 : index
    %c0_67 = arith.constant 0 : index
    %166 = vector.load %arg14[%c16, %c0_67] : memref<25x256xf32, #tpu.memory_space<vmem>>, vector<1x64xf32>
    %c17 = arith.constant 17 : index
    %c0_68 = arith.constant 0 : index
    %167 = vector.load %arg14[%c17, %c0_68] : memref<25x256xf32, #tpu.memory_space<vmem>>, vector<1x64xf32>
    %168 = arith.truncf %161 : vector<56x128xf32> to vector<56x128xbf16>
    %c0_69 = arith.constant 0 : index
    %c0_70 = arith.constant 0 : index
    %169 = vector.load %arg7[%c0_69, %c0_70] : memref<128x64xbf16, #tpu.memory_space<vmem>>, vector<128x64xbf16>
    %cst_71 = arith.constant dense<0.000000e+00> : vector<56x64xf32>
    %170 = tpu.matmul %168, %169, %cst_71 {dimension_numbers = #tpu.dot_dimension_numbers<[1], [0], [0], [1], [0, 0, 1, 1], [], []>} : vector<56x128xbf16>, vector<128x64xbf16>, vector<56x64xf32> -> vector<56x64xf32>
    %cst_72 = arith.constant dense<0.000000e+00> : vector<56xf32>
    %171 = vector.multi_reduction <add>, %170, %cst_72 [1] : vector<56x64xf32> to vector<56xf32>
    %172 = vector.shape_cast %171 : vector<56xf32> to vector<56x1xf32>
    %cst_73 = arith.constant 6.400000e+01 : f32
    %173 = vector.broadcast %cst_73 : f32 to vector<56x1xf32>
    %174 = arith.divf %172, %173 : vector<56x1xf32>
    %175 = vector.broadcast %174 : vector<56x1xf32> to vector<56x64xf32>
    %176 = arith.subf %170, %175 : vector<56x64xf32>
    %177 = arith.mulf %176, %176 : vector<56x64xf32>
    %cst_74 = arith.constant dense<0.000000e+00> : vector<56xf32>
    %178 = vector.multi_reduction <add>, %177, %cst_74 [1] : vector<56x64xf32> to vector<56xf32>
    %179 = vector.shape_cast %178 : vector<56xf32> to vector<56x1xf32>
    %cst_75 = arith.constant 6.400000e+01 : f32
    %180 = vector.broadcast %cst_75 : f32 to vector<56x1xf32>
    %181 = arith.divf %179, %180 : vector<56x1xf32>
    %cst_76 = arith.constant 9.99999974E-6 : f32
    %182 = vector.broadcast %cst_76 : f32 to vector<56x1xf32>
    %183 = arith.addf %181, %182 : vector<56x1xf32>
    %184 = math.rsqrt %183 : vector<56x1xf32>
    %185 = vector.broadcast %184 : vector<56x1xf32> to vector<56x64xf32>
    %186 = vector.broadcast %162 : vector<1x64xf32> to vector<56x64xf32>
    %187 = arith.mulf %185, %186 : vector<56x64xf32>
    %188 = arith.mulf %176, %187 : vector<56x64xf32>
    %189 = vector.broadcast %163 : vector<1x64xf32> to vector<56x64xf32>
    %190 = arith.addf %188, %189 : vector<56x64xf32>
    %cst_77 = arith.constant 0.000000e+00 : f32
    %191 = vector.broadcast %cst_77 : f32 to vector<56x64xf32>
    %192 = arith.maximumf %190, %191 : vector<56x64xf32>
    %193 = arith.truncf %192 : vector<56x64xf32> to vector<56x64xbf16>
    %c0_78 = arith.constant 0 : index
    %c0_79 = arith.constant 0 : index
    %194 = vector.load %arg9[%c0_78, %c0_79] : memref<64x64xbf16, #tpu.memory_space<vmem>>, vector<64x64xbf16>
    %cst_80 = arith.constant dense<0.000000e+00> : vector<56x64xf32>
    %195 = tpu.matmul %193, %194, %cst_80 {dimension_numbers = #tpu.dot_dimension_numbers<[1], [0], [0], [1], [0, 0, 1, 1], [], []>} : vector<56x64xbf16>, vector<64x64xbf16>, vector<56x64xf32> -> vector<56x64xf32>
    %cst_81 = arith.constant dense<0.000000e+00> : vector<56xf32>
    %196 = vector.multi_reduction <add>, %195, %cst_81 [1] : vector<56x64xf32> to vector<56xf32>
    %197 = vector.shape_cast %196 : vector<56xf32> to vector<56x1xf32>
    %cst_82 = arith.constant 6.400000e+01 : f32
    %198 = vector.broadcast %cst_82 : f32 to vector<56x1xf32>
    %199 = arith.divf %197, %198 : vector<56x1xf32>
    %200 = vector.broadcast %199 : vector<56x1xf32> to vector<56x64xf32>
    %201 = arith.subf %195, %200 : vector<56x64xf32>
    %202 = arith.mulf %201, %201 : vector<56x64xf32>
    %cst_83 = arith.constant dense<0.000000e+00> : vector<56xf32>
    %203 = vector.multi_reduction <add>, %202, %cst_83 [1] : vector<56x64xf32> to vector<56xf32>
    %204 = vector.shape_cast %203 : vector<56xf32> to vector<56x1xf32>
    %cst_84 = arith.constant 6.400000e+01 : f32
    %205 = vector.broadcast %cst_84 : f32 to vector<56x1xf32>
    %206 = arith.divf %204, %205 : vector<56x1xf32>
    %cst_85 = arith.constant 9.99999974E-6 : f32
    %207 = vector.broadcast %cst_85 : f32 to vector<56x1xf32>
    %208 = arith.addf %206, %207 : vector<56x1xf32>
    %209 = math.rsqrt %208 : vector<56x1xf32>
    %210 = vector.broadcast %209 : vector<56x1xf32> to vector<56x64xf32>
    %211 = vector.broadcast %164 : vector<1x64xf32> to vector<56x64xf32>
    %212 = arith.mulf %210, %211 : vector<56x64xf32>
    %213 = arith.mulf %201, %212 : vector<56x64xf32>
    %214 = vector.broadcast %165 : vector<1x64xf32> to vector<56x64xf32>
    %215 = arith.addf %213, %214 : vector<56x64xf32>
    %216 = arith.truncf %161 : vector<56x128xf32> to vector<56x128xbf16>
    %c0_86 = arith.constant 0 : index
    %c0_87 = arith.constant 0 : index
    %217 = vector.load %arg8[%c0_86, %c0_87] : memref<128x64xbf16, #tpu.memory_space<vmem>>, vector<128x64xbf16>
    %cst_88 = arith.constant dense<0.000000e+00> : vector<56x64xf32>
    %218 = tpu.matmul %216, %217, %cst_88 {dimension_numbers = #tpu.dot_dimension_numbers<[1], [0], [0], [1], [0, 0, 1, 1], [], []>} : vector<56x128xbf16>, vector<128x64xbf16>, vector<56x64xf32> -> vector<56x64xf32>
    %cst_89 = arith.constant dense<0.000000e+00> : vector<56xf32>
    %219 = vector.multi_reduction <add>, %218, %cst_89 [1] : vector<56x64xf32> to vector<56xf32>
    %220 = vector.shape_cast %219 : vector<56xf32> to vector<56x1xf32>
    %cst_90 = arith.constant 6.400000e+01 : f32
    %221 = vector.broadcast %cst_90 : f32 to vector<56x1xf32>
    %222 = arith.divf %220, %221 : vector<56x1xf32>
    %223 = vector.broadcast %222 : vector<56x1xf32> to vector<56x64xf32>
    %224 = arith.subf %218, %223 : vector<56x64xf32>
    %225 = arith.mulf %224, %224 : vector<56x64xf32>
    %cst_91 = arith.constant dense<0.000000e+00> : vector<56xf32>
    %226 = vector.multi_reduction <add>, %225, %cst_91 [1] : vector<56x64xf32> to vector<56xf32>
    %227 = vector.shape_cast %226 : vector<56xf32> to vector<56x1xf32>
    %cst_92 = arith.constant 6.400000e+01 : f32
    %228 = vector.broadcast %cst_92 : f32 to vector<56x1xf32>
    %229 = arith.divf %227, %228 : vector<56x1xf32>
    %cst_93 = arith.constant 9.99999974E-6 : f32
    %230 = vector.broadcast %cst_93 : f32 to vector<56x1xf32>
    %231 = arith.addf %229, %230 : vector<56x1xf32>
    %232 = math.rsqrt %231 : vector<56x1xf32>
    %233 = vector.broadcast %232 : vector<56x1xf32> to vector<56x64xf32>
    %234 = vector.broadcast %166 : vector<1x64xf32> to vector<56x64xf32>
    %235 = arith.mulf %233, %234 : vector<56x64xf32>
    %236 = arith.mulf %224, %235 : vector<56x64xf32>
    %237 = vector.broadcast %167 : vector<1x64xf32> to vector<56x64xf32>
    %238 = arith.addf %236, %237 : vector<56x64xf32>
    %239 = arith.addf %215, %238 : vector<56x64xf32>
    %cst_94 = arith.constant 0.000000e+00 : f32
    %240 = vector.broadcast %cst_94 : f32 to vector<56x64xf32>
    %241 = arith.maximumf %239, %240 : vector<56x64xf32>
    %c18 = arith.constant 18 : index
    %c0_95 = arith.constant 0 : index
    %242 = vector.load %arg14[%c18, %c0_95] : memref<25x256xf32, #tpu.memory_space<vmem>>, vector<1x32xf32>
    %c19 = arith.constant 19 : index
    %c0_96 = arith.constant 0 : index
    %243 = vector.load %arg14[%c19, %c0_96] : memref<25x256xf32, #tpu.memory_space<vmem>>, vector<1x32xf32>
    %c20 = arith.constant 20 : index
    %c0_97 = arith.constant 0 : index
    %244 = vector.load %arg14[%c20, %c0_97] : memref<25x256xf32, #tpu.memory_space<vmem>>, vector<1x32xf32>
    %c21 = arith.constant 21 : index
    %c0_98 = arith.constant 0 : index
    %245 = vector.load %arg14[%c21, %c0_98] : memref<25x256xf32, #tpu.memory_space<vmem>>, vector<1x32xf32>
    %c22 = arith.constant 22 : index
    %c0_99 = arith.constant 0 : index
    %246 = vector.load %arg14[%c22, %c0_99] : memref<25x256xf32, #tpu.memory_space<vmem>>, vector<1x32xf32>
    %c23 = arith.constant 23 : index
    %c0_100 = arith.constant 0 : index
    %247 = vector.load %arg14[%c23, %c0_100] : memref<25x256xf32, #tpu.memory_space<vmem>>, vector<1x32xf32>
    %248 = arith.truncf %241 : vector<56x64xf32> to vector<56x64xbf16>
    %c0_101 = arith.constant 0 : index
    %c0_102 = arith.constant 0 : index
    %249 = vector.load %arg10[%c0_101, %c0_102] : memref<64x32xbf16, #tpu.memory_space<vmem>>, vector<64x32xbf16>
    %cst_103 = arith.constant dense<0.000000e+00> : vector<56x32xf32>
    %250 = tpu.matmul %248, %249, %cst_103 {dimension_numbers = #tpu.dot_dimension_numbers<[1], [0], [0], [1], [0, 0, 1, 1], [], []>} : vector<56x64xbf16>, vector<64x32xbf16>, vector<56x32xf32> -> vector<56x32xf32>
    %cst_104 = arith.constant dense<0.000000e+00> : vector<56xf32>
    %251 = vector.multi_reduction <add>, %250, %cst_104 [1] : vector<56x32xf32> to vector<56xf32>
    %252 = vector.shape_cast %251 : vector<56xf32> to vector<56x1xf32>
    %cst_105 = arith.constant 3.200000e+01 : f32
    %253 = vector.broadcast %cst_105 : f32 to vector<56x1xf32>
    %254 = arith.divf %252, %253 : vector<56x1xf32>
    %255 = vector.broadcast %254 : vector<56x1xf32> to vector<56x32xf32>
    %256 = arith.subf %250, %255 : vector<56x32xf32>
    %257 = arith.mulf %256, %256 : vector<56x32xf32>
    %cst_106 = arith.constant dense<0.000000e+00> : vector<56xf32>
    %258 = vector.multi_reduction <add>, %257, %cst_106 [1] : vector<56x32xf32> to vector<56xf32>
    %259 = vector.shape_cast %258 : vector<56xf32> to vector<56x1xf32>
    %cst_107 = arith.constant 3.200000e+01 : f32
    %260 = vector.broadcast %cst_107 : f32 to vector<56x1xf32>
    %261 = arith.divf %259, %260 : vector<56x1xf32>
    %cst_108 = arith.constant 9.99999974E-6 : f32
    %262 = vector.broadcast %cst_108 : f32 to vector<56x1xf32>
    %263 = arith.addf %261, %262 : vector<56x1xf32>
    %264 = math.rsqrt %263 : vector<56x1xf32>
    %265 = vector.broadcast %264 : vector<56x1xf32> to vector<56x32xf32>
    %266 = vector.broadcast %242 : vector<1x32xf32> to vector<56x32xf32>
    %267 = arith.mulf %265, %266 : vector<56x32xf32>
    %268 = arith.mulf %256, %267 : vector<56x32xf32>
    %269 = vector.broadcast %243 : vector<1x32xf32> to vector<56x32xf32>
    %270 = arith.addf %268, %269 : vector<56x32xf32>
    %cst_109 = arith.constant 0.000000e+00 : f32
    %271 = vector.broadcast %cst_109 : f32 to vector<56x32xf32>
    %272 = arith.maximumf %270, %271 : vector<56x32xf32>
    %273 = arith.truncf %272 : vector<56x32xf32> to vector<56x32xbf16>
    %c0_110 = arith.constant 0 : index
    %c0_111 = arith.constant 0 : index
    %274 = vector.load %arg12[%c0_110, %c0_111] : memref<32x32xbf16, #tpu.memory_space<vmem>>, vector<32x32xbf16>
    %cst_112 = arith.constant dense<0.000000e+00> : vector<56x32xf32>
    %275 = tpu.matmul %273, %274, %cst_112 {dimension_numbers = #tpu.dot_dimension_numbers<[1], [0], [0], [1], [0, 0, 1, 1], [], []>} : vector<56x32xbf16>, vector<32x32xbf16>, vector<56x32xf32> -> vector<56x32xf32>
    %cst_113 = arith.constant dense<0.000000e+00> : vector<56xf32>
    %276 = vector.multi_reduction <add>, %275, %cst_113 [1] : vector<56x32xf32> to vector<56xf32>
    %277 = vector.shape_cast %276 : vector<56xf32> to vector<56x1xf32>
    %cst_114 = arith.constant 3.200000e+01 : f32
    %278 = vector.broadcast %cst_114 : f32 to vector<56x1xf32>
    %279 = arith.divf %277, %278 : vector<56x1xf32>
    %280 = vector.broadcast %279 : vector<56x1xf32> to vector<56x32xf32>
    %281 = arith.subf %275, %280 : vector<56x32xf32>
    %282 = arith.mulf %281, %281 : vector<56x32xf32>
    %cst_115 = arith.constant dense<0.000000e+00> : vector<56xf32>
    %283 = vector.multi_reduction <add>, %282, %cst_115 [1] : vector<56x32xf32> to vector<56xf32>
    %284 = vector.shape_cast %283 : vector<56xf32> to vector<56x1xf32>
    %cst_116 = arith.constant 3.200000e+01 : f32
    %285 = vector.broadcast %cst_116 : f32 to vector<56x1xf32>
    %286 = arith.divf %284, %285 : vector<56x1xf32>
    %cst_117 = arith.constant 9.99999974E-6 : f32
    %287 = vector.broadcast %cst_117 : f32 to vector<56x1xf32>
    %288 = arith.addf %286, %287 : vector<56x1xf32>
    %289 = math.rsqrt %288 : vector<56x1xf32>
    %290 = vector.broadcast %289 : vector<56x1xf32> to vector<56x32xf32>
    %291 = vector.broadcast %244 : vector<1x32xf32> to vector<56x32xf32>
    %292 = arith.mulf %290, %291 : vector<56x32xf32>
    %293 = arith.mulf %281, %292 : vector<56x32xf32>
    %294 = vector.broadcast %245 : vector<1x32xf32> to vector<56x32xf32>
    %295 = arith.addf %293, %294 : vector<56x32xf32>
    %296 = arith.truncf %241 : vector<56x64xf32> to vector<56x64xbf16>
    %c0_118 = arith.constant 0 : index
    %c0_119 = arith.constant 0 : index
    %297 = vector.load %arg11[%c0_118, %c0_119] : memref<64x32xbf16, #tpu.memory_space<vmem>>, vector<64x32xbf16>
    %cst_120 = arith.constant dense<0.000000e+00> : vector<56x32xf32>
    %298 = tpu.matmul %296, %297, %cst_120 {dimension_numbers = #tpu.dot_dimension_numbers<[1], [0], [0], [1], [0, 0, 1, 1], [], []>} : vector<56x64xbf16>, vector<64x32xbf16>, vector<56x32xf32> -> vector<56x32xf32>
    %cst_121 = arith.constant dense<0.000000e+00> : vector<56xf32>
    %299 = vector.multi_reduction <add>, %298, %cst_121 [1] : vector<56x32xf32> to vector<56xf32>
    %300 = vector.shape_cast %299 : vector<56xf32> to vector<56x1xf32>
    %cst_122 = arith.constant 3.200000e+01 : f32
    %301 = vector.broadcast %cst_122 : f32 to vector<56x1xf32>
    %302 = arith.divf %300, %301 : vector<56x1xf32>
    %303 = vector.broadcast %302 : vector<56x1xf32> to vector<56x32xf32>
    %304 = arith.subf %298, %303 : vector<56x32xf32>
    %305 = arith.mulf %304, %304 : vector<56x32xf32>
    %cst_123 = arith.constant dense<0.000000e+00> : vector<56xf32>
    %306 = vector.multi_reduction <add>, %305, %cst_123 [1] : vector<56x32xf32> to vector<56xf32>
    %307 = vector.shape_cast %306 : vector<56xf32> to vector<56x1xf32>
    %cst_124 = arith.constant 3.200000e+01 : f32
    %308 = vector.broadcast %cst_124 : f32 to vector<56x1xf32>
    %309 = arith.divf %307, %308 : vector<56x1xf32>
    %cst_125 = arith.constant 9.99999974E-6 : f32
    %310 = vector.broadcast %cst_125 : f32 to vector<56x1xf32>
    %311 = arith.addf %309, %310 : vector<56x1xf32>
    %312 = math.rsqrt %311 : vector<56x1xf32>
    %313 = vector.broadcast %312 : vector<56x1xf32> to vector<56x32xf32>
    %314 = vector.broadcast %246 : vector<1x32xf32> to vector<56x32xf32>
    %315 = arith.mulf %313, %314 : vector<56x32xf32>
    %316 = arith.mulf %304, %315 : vector<56x32xf32>
    %317 = vector.broadcast %247 : vector<1x32xf32> to vector<56x32xf32>
    %318 = arith.addf %316, %317 : vector<56x32xf32>
    %319 = arith.addf %295, %318 : vector<56x32xf32>
    %cst_126 = arith.constant 0.000000e+00 : f32
    %320 = vector.broadcast %cst_126 : f32 to vector<56x32xf32>
    %321 = arith.maximumf %319, %320 : vector<56x32xf32>
    %322 = arith.truncf %321 : vector<56x32xf32> to vector<56x32xbf16>
    %c0_127 = arith.constant 0 : index
    %c0_128 = arith.constant 0 : index
    %323 = vector.load %arg13[%c0_127, %c0_128] : memref<32x128xbf16, #tpu.memory_space<vmem>>, vector<32x128xbf16>
    %cst_129 = arith.constant dense<0.000000e+00> : vector<56x128xf32>
    %324 = tpu.matmul %322, %323, %cst_129 {dimension_numbers = #tpu.dot_dimension_numbers<[1], [0], [0], [1], [0, 0, 1, 1], [], []>} : vector<56x32xbf16>, vector<32x128xbf16>, vector<56x128xf32> -> vector<56x128xf32>
    %c24 = arith.constant 24 : index
    %c0_130 = arith.constant 0 : index
    %325 = vector.load %arg14[%c24, %c0_130] : memref<25x256xf32, #tpu.memory_space<vmem>>, vector<1x128xf32>
    %326 = vector.broadcast %325 : vector<1x128xf32> to vector<56x128xf32>
    %327 = arith.addf %324, %326 : vector<56x128xf32>
    %c0_131 = arith.constant 0 : index
    %c0_132 = arith.constant 0 : index
    %328 = vector.load %arg15[%c0_131, %c0_132] : memref<56x128xf32, #tpu.memory_space<vmem>>, vector<56x128xf32>
    tpu.vector_store %arg15[%c0_131, %c0_132], %327 {strides = array<i32>} : memref<56x128xf32, #tpu.memory_space<vmem>>, vector<56x128xf32>,
    return
  }
  func.func @transform_0(%arg0: i32) -> (i32, i32) {
    %c0_i32 = arith.constant 0 : i32
    %c0_i32_0 = arith.constant 0 : i32
    return %arg0, %c0_i32 : i32, i32
  }
  func.func @transform_1(%arg0: i32) -> (i32, i32) {
    %c0_i32 = arith.constant 0 : i32
    %c0_i32_0 = arith.constant 0 : i32
    %c0_i32_1 = arith.constant 0 : i32
    return %c0_i32, %c0_i32_0 : i32, i32
  }
  func.func @transform_2(%arg0: i32) -> (i32, i32) {
    %c0_i32 = arith.constant 0 : i32
    %c0_i32_0 = arith.constant 0 : i32
    %c0_i32_1 = arith.constant 0 : i32
    return %c0_i32, %c0_i32_0 : i32, i32
  }
  func.func @transform_3(%arg0: i32) -> (i32, i32) {
    %c0_i32 = arith.constant 0 : i32
    %c0_i32_0 = arith.constant 0 : i32
    %c0_i32_1 = arith.constant 0 : i32
    return %c0_i32, %c0_i32_0 : i32, i32
  }
  func.func @transform_4(%arg0: i32) -> (i32, i32) {
    %c0_i32 = arith.constant 0 : i32
    %c0_i32_0 = arith.constant 0 : i32
    %c0_i32_1 = arith.constant 0 : i32
    return %c0_i32, %c0_i32_0 : i32, i32
  }
  func.func @transform_5(%arg0: i32) -> (i32, i32) {
    %c0_i32 = arith.constant 0 : i32
    %c0_i32_0 = arith.constant 0 : i32
    %c0_i32_1 = arith.constant 0 : i32
    return %c0_i32, %c0_i32_0 : i32, i32
  }
  func.func @transform_6(%arg0: i32) -> (i32, i32) {
    %c0_i32 = arith.constant 0 : i32
    %c0_i32_0 = arith.constant 0 : i32
    %c0_i32_1 = arith.constant 0 : i32
    return %c0_i32, %c0_i32_0 : i32, i32
  }
  func.func @transform_7(%arg0: i32) -> (i32, i32) {
    %c0_i32 = arith.constant 0 : i32
    %c0_i32_0 = arith.constant 0 : i32
    %c0_i32_1 = arith.constant 0 : i32
    return %c0_i32, %c0_i32_0 : i32, i32
  }
  func.func @transform_8(%arg0: i32) -> (i32, i32) {
    %c0_i32 = arith.constant 0 : i32
    %c0_i32_0 = arith.constant 0 : i32
    %c0_i32_1 = arith.constant 0 : i32
    return %c0_i32, %c0_i32_0 : i32, i32
  }
  func.func @transform_9(%arg0: i32) -> (i32, i32) {
    %c0_i32 = arith.constant 0 : i32
    %c0_i32_0 = arith.constant 0 : i32
    %c0_i32_1 = arith.constant 0 : i32
    return %c0_i32, %c0_i32_0 : i32, i32
  }
  func.func @transform_10(%arg0: i32) -> (i32, i32) {
    %c0_i32 = arith.constant 0 : i32
    %c0_i32_0 = arith.constant 0 : i32
    %c0_i32_1 = arith.constant 0 : i32
    return %c0_i32, %c0_i32_0 : i32, i32
  }
  func.func @transform_11(%arg0: i32) -> (i32, i32) {
    %c0_i32 = arith.constant 0 : i32
    %c0_i32_0 = arith.constant 0 : i32
    %c0_i32_1 = arith.constant 0 : i32
    return %c0_i32, %c0_i32_0 : i32, i32
  }
  func.func @transform_12(%arg0: i32) -> (i32, i32) {
    %c0_i32 = arith.constant 0 : i32
    %c0_i32_0 = arith.constant 0 : i32
    %c0_i32_1 = arith.constant 0 : i32
    return %c0_i32, %c0_i32_0 : i32, i32
  }
  func.func @transform_13(%arg0: i32) -> (i32, i32) {
    %c0_i32 = arith.constant 0 : i32
    %c0_i32_0 = arith.constant 0 : i32
    %c0_i32_1 = arith.constant 0 : i32
    return %c0_i32, %c0_i32_0 : i32, i32
  }
  func.func @transform_14(%arg0: i32) -> (i32, i32) {
    %c0_i32 = arith.constant 0 : i32
    %c0_i32_0 = arith.constant 0 : i32
    return %arg0, %c0_i32 : i32, i32
  }
}

</mosaic_0001>

<llo_original>
// kernel: mapper_forward.1
$region0: #{mapper_forward.1}
  #allocation0 [shape = 'u32[]', space=smem, size = 0x4, offset = 0x4, fixed_abs, tag = 'smem constant byte address 0x4 - core index']
  #allocation1 [shape = 'u32[72,128]{1,0:T(1,128)}', space=vmem, size = 0x9000, scoped, tag = 'internal scratch']
  %s0 = inlined_call_operand.vmem [shape: f32[56,32], index: 0, kind: input, shape index: {}]
  %s1 = inlined_call_operand.vmem [shape: bf16[32,256], index: 1, kind: input, shape index: {}]
  %s2 = inlined_call_operand.hbm [shape: bf16[256,256], index: 2, kind: input, shape index: {}]
  %s3 = inlined_call_operand.hbm [shape: bf16[256,256], index: 3, kind: input, shape index: {}]
  %s4 = inlined_call_operand.hbm [shape: bf16[256,256], index: 4, kind: input, shape index: {}]
  %s5 = inlined_call_operand.vmem [shape: bf16[128,128], index: 5, kind: input, shape index: {}]
  %s6 = inlined_call_operand.vmem [shape: bf16[128,64], index: 6, kind: input, shape index: {}]
  %s7 = inlined_call_operand.vmem [shape: bf16[128,64], index: 7, kind: input, shape index: {}]
  %s8 = inlined_call_operand.vmem [shape: bf16[64,64], index: 8, kind: input, shape index: {}]
  %s9 = inlined_call_operand.vmem [shape: bf16[64,32], index: 9, kind: input, shape index: {}]
  %s10 = inlined_call_operand.vmem [shape: bf16[64,32], index: 10, kind: input, shape index: {}]
  %s11 = inlined_call_operand.vmem [shape: bf16[32,32], index: 11, kind: input, shape index: {}]
  %s12 = inlined_call_operand.vmem [shape: bf16[32,128], index: 12, kind: input, shape index: {}]
  %s13 = inlined_call_operand.vmem [shape: f32[25,256], index: 13, kind: input, shape index: {}]
  %s14 = inlined_call_operand.vmem [shape: f32[56,128], index: 14, kind: output, shape index: {}]
  %s15 = sld [smem:[#allocation0]]
  $region78: #{mapper_forward.1} parent=0
    _
  %s17 = ssub.s32 1, %s15
  %s18 = scalar_select 0, %s17, %s15
  $region1: #{mapper_forward.1} parent=0
    #allocation2 [shape = 'u8[131072]{0}', space=vmem, size = 0x20000, scoped, tag = 'input window, operand 2, single buffered']
    #allocation3 [shape = 's32[1]{0}', space=sflag, size = 0x4, scoped, tag = 'scoped memory for mapper_forward.1']
    #allocation4 [shape = 'u8[131072]{0}', space=vmem, size = 0x20000, scoped, tag = 'input window, operand 3, single buffered']
    #allocation5 [shape = 's32[1]{0}', space=sflag, size = 0x4, scoped, tag = 'scoped memory for mapper_forward.1']
    #allocation6 [shape = 'u8[131072]{0}', space=vmem, size = 0x20000, scoped, tag = 'input window, operand 4, single buffered']
    %19 = vsyncpa [#allocation3], 0
    %20 = vsyncpa [#allocation5], 0
    // Predicated region
    $region2: #{mapper_forward.1} parent=1 // pred_check
      _
    $region3: #{mapper_forward.1} parent=1 // pred_check_branch
      %22 = sbr.rel (0) target = $region5
    $region4: #{mapper_forward.1} parent=1 // pred_region
      _
    $region5: #{mapper_forward.1} parent=1 // pred_fallthru
      _
    // Predicated region
    $region6: #{mapper_forward.1} parent=1 // pred_check
      _
    $region7: #{mapper_forward.1} parent=1 // pred_check_branch
      %24 = sbr.rel (0) target = $region9
    $region8: #{mapper_forward.1} parent=1 // pred_region
      _
    $region9: #{mapper_forward.1} parent=1 // pred_fallthru
      _
    // Predicated region
    $region10: #{mapper_forward.1} parent=1 // pred_check
      _
    $region11: #{mapper_forward.1} parent=1 // pred_check_branch
      %26 = sbr.rel (0) target = $region13
    $region12: #{mapper_forward.1} parent=1 // pred_region
      %28 = vsyncadd [#allocation3], 0
      %s29 = sshll.u32 %s2, 4
      %s30 = int_to_ptr.hbm [resolvable:$true] %s29
      %s31 = sshll.u32 [#allocation2], 4
      %s32 = int_to_ptr.vmem [resolvable:$true] %s31
      %37 = dma.hbm_to_vmem [thread:$0]  %s30, 4096, %s32, [#allocation3], 128, 128, 8
    $region13: #{mapper_forward.1} parent=1 // pred_fallthru
      _
    // Predicated region
    $region14: #{mapper_forward.1} parent=1 // pred_check
      _
    $region15: #{mapper_forward.1} parent=1 // pred_check_branch
      %39 = sbr.rel (0) target = $region17
    $region16: #{mapper_forward.1} parent=1 // pred_region
      %41 = vsyncadd [#allocation5], 0
      %s42 = sshll.u32 %s3, 4
      %s43 = int_to_ptr.hbm [resolvable:$true] %s42
      %s44 = sshll.u32 [#allocation4], 4
      %s45 = int_to_ptr.vmem [resolvable:$true] %s44
      %50 = dma.hbm_to_vmem [thread:$0]  %s43, 4096, %s45, [#allocation5], 128, 128, 8
    $region17: #{mapper_forward.1} parent=1 // pred_fallthru
      _
    // Predicated region
    $region18: #{mapper_forward.1} parent=1 // pred_check
      _
    $region19: #{mapper_forward.1} parent=1 // pred_check_branch
      %52 = sbr.rel (0) target = $region21
    $region20: #{mapper_forward.1} parent=1 // pred_region
      %54 = vsyncadd [#allocation5], 0
      %s55 = sshll.u32 %s4, 4
      %s56 = int_to_ptr.hbm [resolvable:$true] %s55
      %s57 = sshll.u32 [#allocation6], 4
      %s58 = int_to_ptr.vmem [resolvable:$true] %s57
      %63 = dma.hbm_to_vmem [thread:$0]  %s56, 4096, %s58, [#allocation5], 128, 128, 8
    $region21: #{mapper_forward.1} parent=1 // pred_fallthru
      _
    // Predicated region
    $region22: #{mapper_forward.1} parent=1 // pred_check
      _
    $region23: #{mapper_forward.1} parent=1 // pred_check_branch
      %65 = sbr.rel (0) target = $region25
    $region24: #{mapper_forward.1} parent=1 // pred_region
      _
    $region25: #{mapper_forward.1} parent=1 // pred_fallthru
      _
    // Predicated region
    $region26: #{mapper_forward.1} parent=1 // pred_check
      _
    $region27: #{mapper_forward.1} parent=1 // pred_check_branch
      %67 = sbr.rel (0) target = $region29
    $region28: #{mapper_forward.1} parent=1 // pred_region
      _
    $region29: #{mapper_forward.1} parent=1 // pred_fallthru
      _
    // Predicated region
    $region30: #{mapper_forward.1} parent=1 // pred_check
      _
    $region31: #{mapper_forward.1} parent=1 // pred_check_branch
      %69 = sbr.rel (0) target = $region33
    $region32: #{mapper_forward.1} parent=1 // pred_region
      _
    $region33: #{mapper_forward.1} parent=1 // pred_fallthru
      _
    // Predicated region
    $region34: #{mapper_forward.1} parent=1 // pred_check
      _
    $region35: #{mapper_forward.1} parent=1 // pred_check_branch
      %71 = sbr.rel (0) target = $region37
    $region36: #{mapper_forward.1} parent=1 // pred_region
      _
    $region37: #{mapper_forward.1} parent=1 // pred_fallthru
      _
    // Predicated region
    $region38: #{mapper_forward.1} parent=1 // pred_check
      _
    $region39: #{mapper_forward.1} parent=1 // pred_check_branch
      %73 = sbr.rel (0) target = $region41
    $region40: #{mapper_forward.1} parent=1 // pred_region
      _
    $region41: #{mapper_forward.1} parent=1 // pred_fallthru
      _
    // Predicated region
    $region42: #{mapper_forward.1} parent=1 // pred_check
      _
    $region43: #{mapper_forward.1} parent=1 // pred_check_branch
      %75 = sbr.rel (0) target = $region45
    $region44: #{mapper_forward.1} parent=1 // pred_region
      _
    $region45: #{mapper_forward.1} parent=1 // pred_fallthru
      _
    // Predicated region
    $region46: #{mapper_forward.1} parent=1 // pred_check
      _
    $region47: #{mapper_forward.1} parent=1 // pred_check_branch
      %77 = sbr.rel (0) target = $region49
    $region48: #{mapper_forward.1} parent=1 // pred_region
      _
    $region49: #{mapper_forward.1} parent=1 // pred_fallthru
      _
    // Predicated region
    $region50: #{mapper_forward.1} parent=1 // pred_check
      _
    $region51: #{mapper_forward.1} parent=1 // pred_check_branch
      %79 = sbr.rel (0) target = $region53
    $region52: #{mapper_forward.1} parent=1 // pred_region
      _
    $region53: #{mapper_forward.1} parent=1 // pred_fallthru
      _
    // Predicated region
    $region54: #{mapper_forward.1} parent=1 // pred_check
      _
    $region55: #{mapper_forward.1} parent=1 // pred_check_branch
      %81 = sbr.rel (0) target = $region57
    $region56: #{mapper_forward.1} parent=1 // pred_region
      _
    $region57: #{mapper_forward.1} parent=1 // pred_fallthru
      _
    // Predicated region
    $region58: #{mapper_forward.1} parent=1 // pred_check
      _
    $region59: #{mapper_forward.1} parent=1 // pred_check_branch
      %83 = sbr.rel (0) target = $region61
    $region60: #{mapper_forward.1} parent=1 // pred_region
      %85 = dma.done [#allocation3], 4096
    $region61: #{mapper_forward.1} parent=1 // pred_fallthru
      _
    // Predicated region
    $region62: #{mapper_forward.1} parent=1 // pred_check
      _
    $region63: #{mapper_forward.1} parent=1 // pred_check_branch
      %87 = sbr.rel (0) target = $region65
    $region64: #{mapper_forward.1} parent=1 // pred_region
      %89 = dma.done [#allocation5], 4096
    $region65: #{mapper_forward.1} parent=1 // pred_fallthru
      _
    // Predicated region
    $region66: #{mapper_forward.1} parent=1 // pred_check
      _
    $region67: #{mapper_forward.1} parent=1 // pred_check_branch
      %91 = sbr.rel (0) target = $region69
    $region68: #{mapper_forward.1} parent=1 // pred_region
      %93 = dma.done [#allocation5], 4096
    $region69: #{mapper_forward.1} parent=1 // pred_fallthru
      _
    %v95 = vld [vmem:[%s0] sm:$0xff]
    %v96 = vld [vmem:[%s0 + $0x8] sm:$0xff]
    %v97 = vld [vmem:[%s0 + $0x10] sm:$0xff]
    %v98 = vld [vmem:[%s0 + $0x18] sm:$0xff]
    %v99 = vld [vmem:[%s0 + $0x20] sm:$0xff]
    %v100 = vld [vmem:[%s0 + $0x28] sm:$0xff]
    %v101 = vld [vmem:[%s0 + $0x30] sm:$0xff]
    %v102 = vld [vmem:[%s13] ss:$8 sm:$0x3]
    %s103 = scalar_lea.vmem %s13, 1
    %v104 = vld [vmem:[%s103] ss:$8 sm:$0x3]
    %v105 = vpack.c.bf16 %v96, %v95
    %v106 = vpack.c.bf16 %v98, %v97
    %v107 = vpack.c.bf16 %v100, %v99
    %v108 = vpack.c.bf16 %v101, %v101
    %v109 = vld [vmem:[%s1] sm:$0xff]
    %v110 = vld [vmem:[%s1 + $0x8] sm:$0xff]
    %v111 = vld [vmem:[%s1 + $0x10] sm:$0xff]
    %v112 = vld [vmem:[%s1 + $0x18] sm:$0xff]
    %v117 = vunpack.c.l.b16 %v109
    %v118 = vunpack.c.h.b16 %v109
    %v119 = vunpack.c.l.b16 %v110
    %v120 = vunpack.c.h.b16 %v110
    %v121 = vunpack.c.l.b16 %v111
    %v122 = vunpack.c.h.b16 %v111
    %v123 = vunpack.c.l.b16 %v112
    %v124 = vunpack.c.h.b16 %v112
    %v125 = vpack.c.b16 %v119, %v117
    %v126 = vpack.c.b16 %v120, %v118
    %v127 = vpack.c.b16 %v123, %v121
    %v128 = vpack.c.b16 %v124, %v122
    %vm133 = vcmask 261120
    %v135 = vsel %vm133, %v105, 0
    %v138 = vsel %vm133, %v106, 0
    %v141 = vsel %vm133, %v107, 0
    %v144 = vsel %vm133, %v108, 0
    %146 = vmatpush.bf16.msra.mxu0 0
    %147 = vmatpush.bf16.msra.mxu0 0
    %148 = vmatpush.bf16.msra.mxu0 0
    %149 = vmatpush.bf16.msra.mxu0 0
    %150 = vmatpush.bf16.msra.mxu0 0
    %151 = vmatpush.bf16.msra.mxu0 0
    %152 = vmatpush.bf16.msra.mxu0 %v127
    %153 = vmatpush.bf16.msra.mxu0 %v125
    %154 = vmatmul.bf16.gmra.mxu0 %v135
    %v155 = vpop.f32.mrf.mxu0
    %v156 = vadd.f32 0.0, %v155
    %v157 = vpop.f32.mrf.mxu0
    %v158 = vadd.f32 0.0, %v157
    %159 = vmatmul.bf16.gmra.mxu0 %v138
    %v160 = vpop.f32.mrf.mxu0
    %v161 = vadd.f32 0.0, %v160
    %v162 = vpop.f32.mrf.mxu0
    %v163 = vadd.f32 0.0, %v162
    %164 = vmatmul.bf16.gmra.mxu0 %v141
    %v165 = vpop.f32.mrf.mxu0
    %v166 = vadd.f32 0.0, %v165
    %v167 = vpop.f32.mrf.mxu0
    %v168 = vadd.f32 0.0, %v167
    %169 = vmatmul.bf16.gmra.mxu0 %v144
    %v170 = vpop.f32.mrf.mxu0
    %v171 = vadd.f32 0.0, %v170
    %v172 = vpop.f32.mrf.mxu0
    %173 = vdwg.mxu0
    %174 = vmatpush.bf16.msra.mxu0 0
    %175 = vmatpush.bf16.msra.mxu0 0
    %176 = vmatpush.bf16.msra.mxu0 0
    %177 = vmatpush.bf16.msra.mxu0 0
    %178 = vmatpush.bf16.msra.mxu0 0
    %179 = vmatpush.bf16.msra.mxu0 0
    %180 = vmatpush.bf16.msra.mxu0 %v128
    %181 = vmatpush.bf16.msra.mxu0 %v126
    %182 = vmatmul.bf16.gmra.mxu0 %v135
    %v183 = vpop.f32.mrf.mxu0
    %v184 = vadd.f32 0.0, %v183
    %v185 = vpop.f32.mrf.mxu0
    %v186 = vadd.f32 0.0, %v185
    %187 = vmatmul.bf16.gmra.mxu0 %v138
    %v188 = vpop.f32.mrf.mxu0
    %v189 = vadd.f32 0.0, %v188
    %v190 = vpop.f32.mrf.mxu0
    %v191 = vadd.f32 0.0, %v190
    %192 = vmatmul.bf16.gmra.mxu0 %v141
    %v193 = vpop.f32.mrf.mxu0
    %v194 = vadd.f32 0.0, %v193
    %v195 = vpop.f32.mrf.mxu0
    %v196 = vadd.f32 0.0, %v195
    %197 = vmatmul.bf16.gmra.mxu0 %v144
    %v198 = vpop.f32.mrf.mxu0
    %v199 = vadd.f32 0.0, %v198
    %v200 = vpop.f32.mrf.mxu0
    %201 = vdwg.mxu0
    %v202 = vmax.f32 %v156, 0.0
    %v203 = vmax.f32 %v184, 0.0
    %v204 = vmax.f32 %v158, 0.0
    %v205 = vmax.f32 %v186, 0.0
    %v206 = vmax.f32 %v161, 0.0
    %v207 = vmax.f32 %v189, 0.0
    %v208 = vmax.f32 %v163, 0.0
    %v209 = vmax.f32 %v191, 0.0
    %v210 = vmax.f32 %v166, 0.0
    %v211 = vmax.f32 %v194, 0.0
    %v212 = vmax.f32 %v168, 0.0
    %v213 = vmax.f32 %v196, 0.0
    %v214 = vmax.f32 %v171, 0.0
    %v215 = vmax.f32 %v199, 0.0
    %v216 = vadd.f32 %v202, %v203
    %217 = vadd.xlane.f32.xlu0 %v216
    %v218 = vpop.xlane.xlu0 %217
    %v219 = vadd.f32 %v204, %v205
    %220 = vadd.xlane.f32.xlu0 %v219
    %v221 = vpop.xlane.xlu0 %220
    %v222 = vadd.f32 %v206, %v207
    %223 = vadd.xlane.f32.xlu0 %v222
    %v224 = vpop.xlane.xlu0 %223
    %v225 = vadd.f32 %v208, %v209
    %226 = vadd.xlane.f32.xlu0 %v225
    %v227 = vpop.xlane.xlu0 %226
    %v228 = vadd.f32 %v210, %v211
    %229 = vadd.xlane.f32.xlu0 %v228
    %v230 = vpop.xlane.xlu0 %229
    %v231 = vadd.f32 %v212, %v213
    %232 = vadd.xlane.f32.xlu0 %v231
    %v233 = vpop.xlane.xlu0 %232
    %v234 = vadd.f32 %v214, %v215
    %235 = vadd.xlane.f32.xlu0 %v234
    %v236 = vpop.xlane.xlu0 %235
    %v237 = vrcp.pop 256.0
    %v238 = vmul.f32 256.0, %v237
    %v239 = vsub.f32 1.0, %v238
    %v240 = vmul.f32 %v237, %v239
    %v241 = vadd.f32 %v237, %v240
    %vm242 = vweird.f32 %v237
    %v243 = vsel %vm242, %v237, %v241
    %v244 = vmul.f32 %v218, %v243
    %v245 = vmul.f32 %v221, %v243
    %v246 = vmul.f32 %v224, %v243
    %v247 = vmul.f32 %v227, %v243
    %v248 = vmul.f32 %v230, %v243
    %v249 = vmul.f32 %v233, %v243
    %v250 = vmul.f32 %v236, %v243
    %v251 = vsub.f32 %v202, %v244
    %v252 = vsub.f32 %v203, %v244
    %v253 = vsub.f32 %v204, %v245
    %v254 = vsub.f32 %v205, %v245
    %v255 = vsub.f32 %v206, %v246
    %v256 = vsub.f32 %v207, %v246
    %v257 = vsub.f32 %v208, %v247
    %v258 = vsub.f32 %v209, %v247
    %v259 = vsub.f32 %v210, %v248
    %v260 = vsub.f32 %v211, %v248
    %v261 = vsub.f32 %v212, %v249
    %v262 = vsub.f32 %v213, %v249
    %v263 = vsub.f32 %v214, %v250
    %v264 = vsub.f32 %v215, %v250
    %v265 = vmul.f32 %v251, %v251
    %v266 = vmul.f32 %v252, %v252
    %v267 = vmul.f32 %v253, %v253
    %v268 = vmul.f32 %v254, %v254
    %v269 = vmul.f32 %v255, %v255
    %v270 = vmul.f32 %v256, %v256
    %v271 = vmul.f32 %v257, %v257
    %v272 = vmul.f32 %v258, %v258
    %v273 = vmul.f32 %v259, %v259
    %v274 = vmul.f32 %v260, %v260
    %v275 = vmul.f32 %v261, %v261
    %v276 = vmul.f32 %v262, %v262
    %v277 = vmul.f32 %v263, %v263
    %v278 = vmul.f32 %v264, %v264
    %v279 = vadd.f32 %v265, %v266
    %280 = vadd.xlane.f32.xlu0 %v279
    %v281 = vpop.xlane.xlu0 %280
    %v282 = vadd.f32 %v267, %v268
    %283 = vadd.xlane.f32.xlu0 %v282
    %v284 = vpop.xlane.xlu0 %283
    %v285 = vadd.f32 %v269, %v270
    %286 = vadd.xlane.f32.xlu0 %v285
    %v287 = vpop.xlane.xlu0 %286
    %v288 = vadd.f32 %v271, %v272
    %289 = vadd.xlane.f32.xlu0 %v288
    %v290 = vpop.xlane.xlu0 %289
    %v291 = vadd.f32 %v273, %v274
    %292 = vadd.xlane.f32.xlu0 %v291
    %v293 = vpop.xlane.xlu0 %292
    %v294 = vadd.f32 %v275, %v276
    %295 = vadd.xlane.f32.xlu0 %v294
    %v296 = vpop.xlane.xlu0 %295
    %v297 = vadd.f32 %v277, %v278
    %298 = vadd.xlane.f32.xlu0 %v297
    %v299 = vpop.xlane.xlu0 %298
    %v300 = vmul.f32 %v281, %v243
    %v301 = vmul.f32 %v284, %v243
    %v302 = vmul.f32 %v287, %v243
    %v303 = vmul.f32 %v290, %v243
    %v304 = vmul.f32 %v293, %v243
    %v305 = vmul.f32 %v296, %v243
    %v306 = vmul.f32 %v299, %v243
    %v307 = vadd.f32 %v300, 1e-05
    %v308 = vadd.f32 %v301, 1e-05
    %v309 = vadd.f32 %v302, 1e-05
    %v310 = vadd.f32 %v303, 1e-05
    %v311 = vadd.f32 %v304, 1e-05
    %v312 = vadd.f32 %v305, 1e-05
    %v313 = vadd.f32 %v306, 1e-05
    %v314 = vrsqrt.pop %v307
    %v315 = vmul.f32 %v314, %v307
    %v316 = vmul.f32 %v315, %v314
    %v317 = vmul.f32 0.5, %v316
    %v318 = vsub.f32 1.5, %v317
    %v319 = vmul.f32 %v314, %v318
    %vm320 = vweird.f32 %v307
    %vm321 = vweird.f32 %v314
    %vm322 = vmor %vm320, %vm321
    %v323 = vsel %vm322, %v314, %v319
    %v324 = vrsqrt.pop %v308
    %v325 = vmul.f32 %v324, %v308
    %v326 = vmul.f32 %v325, %v324
    %v327 = vmul.f32 0.5, %v326
    %v328 = vsub.f32 1.5, %v327
    %v329 = vmul.f32 %v324, %v328
    %vm330 = vweird.f32 %v308
    %vm331 = vweird.f32 %v324
    %vm332 = vmor %vm330, %vm331
    %v333 = vsel %vm332, %v324, %v329
    %v334 = vrsqrt.pop %v309
    %v335 = vmul.f32 %v334, %v309
    %v336 = vmul.f32 %v335, %v334
    %v337 = vmul.f32 0.5, %v336
    %v338 = vsub.f32 1.5, %v337
    %v339 = vmul.f32 %v334, %v338
    %vm340 = vweird.f32 %v309
    %vm341 = vweird.f32 %v334
    %vm342 = vmor %vm340, %vm341
    %v343 = vsel %vm342, %v334, %v339
    %v344 = vrsqrt.pop %v310
    %v345 = vmul.f32 %v344, %v310
    %v346 = vmul.f32 %v345, %v344
    %v347 = vmul.f32 0.5, %v346
    %v348 = vsub.f32 1.5, %v347
    %v349 = vmul.f32 %v344, %v348
    %vm350 = vweird.f32 %v310
    %vm351 = vweird.f32 %v344
    %vm352 = vmor %vm350, %vm351
    %v353 = vsel %vm352, %v344, %v349
    %v354 = vrsqrt.pop %v311
    %v355 = vmul.f32 %v354, %v311
    %v356 = vmul.f32 %v355, %v354
    %v357 = vmul.f32 0.5, %v356
    %v358 = vsub.f32 1.5, %v357
    %v359 = vmul.f32 %v354, %v358
    %vm360 = vweird.f32 %v311
    %vm361 = vweird.f32 %v354
    %vm362 = vmor %vm360, %vm361
    %v363 = vsel %vm362, %v354, %v359
    %v364 = vrsqrt.pop %v312
    %v365 = vmul.f32 %v364, %v312
    %v366 = vmul.f32 %v365, %v364
    %v367 = vmul.f32 0.5, %v366
    %v368 = vsub.f32 1.5, %v367
    %v369 = vmul.f32 %v364, %v368
    %vm370 = vweird.f32 %v312
    %vm371 = vweird.f32 %v364
    %vm372 = vmor %vm370, %vm371
    %v373 = vsel %vm372, %v364, %v369
    %v374 = vrsqrt.pop %v313
    %v375 = vmul.f32 %v374, %v313
    %v376 = vmul.f32 %v375, %v374
    %v377 = vmul.f32 0.5, %v376
    %v378 = vsub.f32 1.5, %v377
    %v379 = vmul.f32 %v374, %v378
    %vm380 = vweird.f32 %v313
    %vm381 = vweird.f32 %v374
    %vm382 = vmor %vm380, %vm381
    %v383 = vsel %vm382, %v374, %v379
    %v385 = vperm.slane %v102, 0
    %v386 = vperm.slane %v102, 1
    %v389 = vmul.f32 %v323, %v385
    %v390 = vmul.f32 %v323, %v386
    %v391 = vmul.f32 %v333, %v385
    %v392 = vmul.f32 %v333, %v386
    %v393 = vmul.f32 %v343, %v385
    %v394 = vmul.f32 %v343, %v386
    %v395 = vmul.f32 %v353, %v385
    %v396 = vmul.f32 %v353, %v386
    %v397 = vmul.f32 %v363, %v385
    %v398 = vmul.f32 %v363, %v386
    %v399 = vmul.f32 %v373, %v385
    %v400 = vmul.f32 %v373, %v386
    %v401 = vmul.f32 %v383, %v385
    %v402 = vmul.f32 %v383, %v386
    %v403 = vmul.f32 %v251, %v389
    %v404 = vmul.f32 %v252, %v390
    %v405 = vmul.f32 %v253, %v391
    %v406 = vmul.f32 %v254, %v392
    %v407 = vmul.f32 %v255, %v393
    %v408 = vmul.f32 %v256, %v394
    %v409 = vmul.f32 %v257, %v395
    %v410 = vmul.f32 %v258, %v396
    %v411 = vmul.f32 %v259, %v397
    %v412 = vmul.f32 %v260, %v398
    %v413 = vmul.f32 %v261, %v399
    %v414 = vmul.f32 %v262, %v400
    %v415 = vmul.f32 %v263, %v401
    %v416 = vmul.f32 %v264, %v402
    %v418 = vperm.slane %v104, 0
    %v419 = vperm.slane %v104, 1
    %v422 = vadd.f32 %v403, %v418
    %v423 = vadd.f32 %v404, %v419
    %v424 = vadd.f32 %v405, %v418
    %v425 = vadd.f32 %v406, %v419
    %v426 = vadd.f32 %v407, %v418
    %v427 = vadd.f32 %v408, %v419
    %v428 = vadd.f32 %v409, %v418
    %v429 = vadd.f32 %v410, %v419
    %v430 = vadd.f32 %v411, %v418
    %v431 = vadd.f32 %v412, %v419
    %v432 = vadd.f32 %v413, %v418
    %v433 = vadd.f32 %v414, %v419
    %v434 = vadd.f32 %v415, %v418
    %v435 = vadd.f32 %v416, %v419
    %s436 = scalar_lea.vmem %s13, 2
    %v437 = vld [vmem:[%s436] ss:$8 sm:$0x3]
    %s438 = scalar_lea.vmem %s13, 3
    %v439 = vld [vmem:[%s438] ss:$8 sm:$0x3]
    %s440 = scalar_lea.vmem %s13, 4
    %v441 = vld [vmem:[%s440] ss:$8 sm:$0x3]
    %s442 = scalar_lea.vmem %s13, 5
    %v443 = vld [vmem:[%s442] ss:$8 sm:$0x3]
    %v444 = vpack.c.bf16 %v424, %v422
    %v445 = vpack.c.bf16 %v425, %v423
    %v446 = vpack.c.bf16 %v428, %v426
    %v447 = vpack.c.bf16 %v429, %v427
    %v448 = vpack.c.bf16 %v432, %v430
    %v449 = vpack.c.bf16 %v433, %v431
    %v450 = vpack.c.bf16 %v434, %v434
    %v451 = vpack.c.bf16 %v435, %v435
    %v452 = vld [vmem:[#allocation2] sm:$0xff]
    %v453 = vld [vmem:[#allocation2 + $0x8] sm:$0xff]
    %v454 = vld [vmem:[#allocation2 + $0x10] sm:$0xff]
    %v455 = vld [vmem:[#allocation2 + $0x18] sm:$0xff]
    %v456 = vld [vmem:[#allocation2 + $0x20] sm:$0xff]
    %v457 = vld [vmem:[#allocation2 + $0x28] sm:$0xff]
    %v458 = vld [vmem:[#allocation2 + $0x30] sm:$0xff]
    %v459 = vld [vmem:[#allocation2 + $0x38] sm:$0xff]
    %v460 = vld [vmem:[#allocation2 + $0x40] sm:$0xff]
    %v461 = vld [vmem:[#allocation2 + $0x48] sm:$0xff]
    %v462 = vld [vmem:[#allocation2 + $0x50] sm:$0xff]
    %v463 = vld [vmem:[#allocation2 + $0x58] sm:$0xff]
    %v464 = vld [vmem:[#allocation2 + $0x60] sm:$0xff]
    %v465 = vld [vmem:[#allocation2 + $0x68] sm:$0xff]
    %v466 = vld [vmem:[#allocation2 + $0x70] sm:$0xff]
    %v467 = vld [vmem:[#allocation2 + $0x78] sm:$0xff]
    %v468 = vld [vmem:[#allocation2 + $0x80] sm:$0xff]
    %v469 = vld [vmem:[#allocation2 + $0x88] sm:$0xff]
    %v470 = vld [vmem:[#allocation2 + $0x90] sm:$0xff]
    %v471 = vld [vmem:[#allocation2 + $0x98] sm:$0xff]
    %v472 = vld [vmem:[#allocation2 + $0xa0] sm:$0xff]
    %v473 = vld [vmem:[#allocation2 + $0xa8] sm:$0xff]
    %v474 = vld [vmem:[#allocation2 + $0xb0] sm:$0xff]
    %v475 = vld [vmem:[#allocation2 + $0xb8] sm:$0xff]
    %v476 = vld [vmem:[#allocation2 + $0xc0] sm:$0xff]
    %v477 = vld [vmem:[#allocation2 + $0xc8] sm:$0xff]
    %v478 = vld [vmem:[#allocation2 + $0xd0] sm:$0xff]
    %v479 = vld [vmem:[#allocation2 + $0xd8] sm:$0xff]
    %v480 = vld [vmem:[#allocation2 + $0xe0] sm:$0xff]
    %v481 = vld [vmem:[#allocation2 + $0xe8] sm:$0xff]
    %v482 = vld [vmem:[#allocation2 + $0xf0] sm:$0xff]
    %v483 = vld [vmem:[#allocation2 + $0xf8] sm:$0xff]
    %v516 = vunpack.c.l.b16 %v452
    %v517 = vunpack.c.h.b16 %v452
    %v518 = vunpack.c.l.b16 %v453
    %v519 = vunpack.c.h.b16 %v453
    %v520 = vunpack.c.l.b16 %v454
    %v521 = vunpack.c.h.b16 %v454
    %v522 = vunpack.c.l.b16 %v455
    %v523 = vunpack.c.h.b16 %v455
    %v524 = vunpack.c.l.b16 %v456
    %v525 = vunpack.c.h.b16 %v456
    %v526 = vunpack.c.l.b16 %v457
    %v527 = vunpack.c.h.b16 %v457
    %v528 = vunpack.c.l.b16 %v458
    %v529 = vunpack.c.h.b16 %v458
    %v530 = vunpack.c.l.b16 %v459
    %v531 = vunpack.c.h.b16 %v459
    %v532 = vunpack.c.l.b16 %v460
    %v533 = vunpack.c.h.b16 %v460
    %v534 = vunpack.c.l.b16 %v461
    %v535 = vunpack.c.h.b16 %v461
    %v536 = vunpack.c.l.b16 %v462
    %v537 = vunpack.c.h.b16 %v462
    %v538 = vunpack.c.l.b16 %v463
    %v539 = vunpack.c.h.b16 %v463
    %v540 = vunpack.c.l.b16 %v464
    %v541 = vunpack.c.h.b16 %v464
    %v542 = vunpack.c.l.b16 %v465
    %v543 = vunpack.c.h.b16 %v465
    %v544 = vunpack.c.l.b16 %v466
    %v545 = vunpack.c.h.b16 %v466
    %v546 = vunpack.c.l.b16 %v467
    %v547 = vunpack.c.h.b16 %v467
    %v548 = vunpack.c.l.b16 %v468
    %v549 = vunpack.c.h.b16 %v468
    %v550 = vunpack.c.l.b16 %v469
    %v551 = vunpack.c.h.b16 %v469
    %v552 = vunpack.c.l.b16 %v470
    %v553 = vunpack.c.h.b16 %v470
    %v554 = vunpack.c.l.b16 %v471
    %v555 = vunpack.c.h.b16 %v471
    %v556 = vunpack.c.l.b16 %v472
    %v557 = vunpack.c.h.b16 %v472
    %v558 = vunpack.c.l.b16 %v473
    %v559 = vunpack.c.h.b16 %v473
    %v560 = vunpack.c.l.b16 %v474
    %v561 = vunpack.c.h.b16 %v474
    %v562 = vunpack.c.l.b16 %v475
    %v563 = vunpack.c.h.b16 %v475
    %v564 = vunpack.c.l.b16 %v476
    %v565 = vunpack.c.h.b16 %v476
    %v566 = vunpack.c.l.b16 %v477
    %v567 = vunpack.c.h.b16 %v477
    %v568 = vunpack.c.l.b16 %v478
    %v569 = vunpack.c.h.b16 %v478
    %v570 = vunpack.c.l.b16 %v479
    %v571 = vunpack.c.h.b16 %v479
    %v572 = vunpack.c.l.b16 %v480
    %v573 = vunpack.c.h.b16 %v480
    %v574 = vunpack.c.l.b16 %v481
    %v575 = vunpack.c.h.b16 %v481
    %v576 = vunpack.c.l.b16 %v482
    %v577 = vunpack.c.h.b16 %v482
    %v578 = vunpack.c.l.b16 %v483
    %v579 = vunpack.c.h.b16 %v483
    %v580 = vpack.c.b16 %v518, %v516
    %v581 = vpack.c.b16 %v519, %v517
    %v582 = vpack.c.b16 %v522, %v520
    %v583 = vpack.c.b16 %v523, %v521
    %v584 = vpack.c.b16 %v526, %v524
    %v585 = vpack.c.b16 %v527, %v525
    %v586 = vpack.c.b16 %v530, %v528
    %v587 = vpack.c.b16 %v531, %v529
    %v588 = vpack.c.b16 %v534, %v532
    %v589 = vpack.c.b16 %v535, %v533
    %v590 = vpack.c.b16 %v538, %v536
    %v591 = vpack.c.b16 %v539, %v537
    %v592 = vpack.c.b16 %v542, %v540
    %v593 = vpack.c.b16 %v543, %v541
    %v594 = vpack.c.b16 %v546, %v544
    %v595 = vpack.c.b16 %v547, %v545
    %v596 = vpack.c.b16 %v550, %v548
    %v597 = vpack.c.b16 %v551, %v549
    %v598 = vpack.c.b16 %v554, %v552
    %v599 = vpack.c.b16 %v555, %v553
    %v600 = vpack.c.b16 %v558, %v556
    %v601 = vpack.c.b16 %v559, %v557
    %v602 = vpack.c.b16 %v562, %v560
    %v603 = vpack.c.b16 %v563, %v561
    %v604 = vpack.c.b16 %v566, %v564
    %v605 = vpack.c.b16 %v567, %v565
    %v606 = vpack.c.b16 %v570, %v568
    %v607 = vpack.c.b16 %v571, %v569
    %v608 = vpack.c.b16 %v574, %v572
    %v609 = vpack.c.b16 %v575, %v573
    %v610 = vpack.c.b16 %v578, %v576
    %v611 = vpack.c.b16 %v579, %v577
    %644 = vmatpush.bf16.msra.mxu0 %v594
    %645 = vmatpush.bf16.msra.mxu0 %v592
    %646 = vmatpush.bf16.msra.mxu0 %v590
    %647 = vmatpush.bf16.msra.mxu0 %v588
    %648 = vmatpush.bf16.msra.mxu0 %v586
    %649 = vmatpush.bf16.msra.mxu0 %v584
    %650 = vmatpush.bf16.msra.mxu0 %v582
    %651 = vmatpush.bf16.msra.mxu0 %v580
    %652 = vmatmul.bf16.gmra.mxu0 %v444
    %v653 = vpop.f32.mrf.mxu0
    %v654 = vadd.f32 0.0, %v653
    %v655 = vpop.f32.mrf.mxu0
    %v656 = vadd.f32 0.0, %v655
    %657 = vmatmul.bf16.gmra.mxu0 %v446
    %v658 = vpop.f32.mrf.mxu0
    %v659 = vadd.f32 0.0, %v658
    %v660 = vpop.f32.mrf.mxu0
    %v661 = vadd.f32 0.0, %v660
    %662 = vmatmul.bf16.gmra.mxu0 %v448
    %v663 = vpop.f32.mrf.mxu0
    %v664 = vadd.f32 0.0, %v663
    %v665 = vpop.f32.mrf.mxu0
    %v666 = vadd.f32 0.0, %v665
    %667 = vmatmul.bf16.gmra.mxu0 %v450
    %v668 = vpop.f32.mrf.mxu0
    %v669 = vadd.f32 0.0, %v668
    %v670 = vpop.f32.mrf.mxu0
    %671 = vdwg.mxu0
    %672 = vmatpush.bf16.msra.mxu0 %v610
    %673 = vmatpush.bf16.msra.mxu0 %v608
    %674 = vmatpush.bf16.msra.mxu0 %v606
    %675 = vmatpush.bf16.msra.mxu0 %v604
    %676 = vmatpush.bf16.msra.mxu0 %v602
    %677 = vmatpush.bf16.msra.mxu0 %v600
    %678 = vmatpush.bf16.msra.mxu0 %v598
    %679 = vmatpush.bf16.msra.mxu0 %v596
    %680 = vmatmul.bf16.gmra.mxu0 %v445
    %v681 = vpop.f32.mrf.mxu0
    %v682 = vadd.f32 %v654, %v681
    %v683 = vpop.f32.mrf.mxu0
    %v684 = vadd.f32 %v656, %v683
    %685 = vmatmul.bf16.gmra.mxu0 %v447
    %v686 = vpop.f32.mrf.mxu0
    %v687 = vadd.f32 %v659, %v686
    %v688 = vpop.f32.mrf.mxu0
    %v689 = vadd.f32 %v661, %v688
    %690 = vmatmul.bf16.gmra.mxu0 %v449
    %v691 = vpop.f32.mrf.mxu0
    %v692 = vadd.f32 %v664, %v691
    %v693 = vpop.f32.mrf.mxu0
    %v694 = vadd.f32 %v666, %v693
    %695 = vmatmul.bf16.gmra.mxu0 %v451
    %v696 = vpop.f32.mrf.mxu0
    %v697 = vadd.f32 %v669, %v696
    %v698 = vpop.f32.mrf.mxu0
    %699 = vdwg.mxu0
    %700 = vmatpush.bf16.msra.mxu0 %v595
    %701 = vmatpush.bf16.msra.mxu0 %v593
    %702 = vmatpush.bf16.msra.mxu0 %v591
    %703 = vmatpush.bf16.msra.mxu0 %v589
    %704 = vmatpush.bf16.msra.mxu0 %v587
    %705 = vmatpush.bf16.msra.mxu0 %v585
    %706 = vmatpush.bf16.msra.mxu0 %v583
    %707 = vmatpush.bf16.msra.mxu0 %v581
    %708 = vmatmul.bf16.gmra.mxu0 %v444
    %v709 = vpop.f32.mrf.mxu0
    %v710 = vadd.f32 0.0, %v709
    %v711 = vpop.f32.mrf.mxu0
    %v712 = vadd.f32 0.0, %v711
    %713 = vmatmul.bf16.gmra.mxu0 %v446
    %v714 = vpop.f32.mrf.mxu0
    %v715 = vadd.f32 0.0, %v714
    %v716 = vpop.f32.mrf.mxu0
    %v717 = vadd.f32 0.0, %v716
    %718 = vmatmul.bf16.gmra.mxu0 %v448
    %v719 = vpop.f32.mrf.mxu0
    %v720 = vadd.f32 0.0, %v719
    %v721 = vpop.f32.mrf.mxu0
    %v722 = vadd.f32 0.0, %v721
    %723 = vmatmul.bf16.gmra.mxu0 %v450
    %v724 = vpop.f32.mrf.mxu0
    %v725 = vadd.f32 0.0, %v724
    %v726 = vpop.f32.mrf.mxu0
    %727 = vdwg.mxu0
    %728 = vmatpush.bf16.msra.mxu0 %v611
    %729 = vmatpush.bf16.msra.mxu0 %v609
    %730 = vmatpush.bf16.msra.mxu0 %v607
    %731 = vmatpush.bf16.msra.mxu0 %v605
    %732 = vmatpush.bf16.msra.mxu0 %v603
    %733 = vmatpush.bf16.msra.mxu0 %v601
    %734 = vmatpush.bf16.msra.mxu0 %v599
    %735 = vmatpush.bf16.msra.mxu0 %v597
    %736 = vmatmul.bf16.gmra.mxu0 %v445
    %v737 = vpop.f32.mrf.mxu0
    %v738 = vadd.f32 %v710, %v737
    %v739 = vpop.f32.mrf.mxu0
    %v740 = vadd.f32 %v712, %v739
    %741 = vmatmul.bf16.gmra.mxu0 %v447
    %v742 = vpop.f32.mrf.mxu0
    %v743 = vadd.f32 %v715, %v742
    %v744 = vpop.f32.mrf.mxu0
    %v745 = vadd.f32 %v717, %v744
    %746 = vmatmul.bf16.gmra.mxu0 %v449
    %v747 = vpop.f32.mrf.mxu0
    %v748 = vadd.f32 %v720, %v747
    %v749 = vpop.f32.mrf.mxu0
    %v750 = vadd.f32 %v722, %v749
    %751 = vmatmul.bf16.gmra.mxu0 %v451
    %v752 = vpop.f32.mrf.mxu0
    %v753 = vadd.f32 %v725, %v752
    %v754 = vpop.f32.mrf.mxu0
    %755 = vdwg.mxu0
    %v756 = vadd.f32 %v682, %v738
    %757 = vadd.xlane.f32.xlu0 %v756
    %v758 = vpop.xlane.xlu0 %757
    %v759 = vadd.f32 %v684, %v740
    %760 = vadd.xlane.f32.xlu0 %v759
    %v761 = vpop.xlane.xlu0 %760
    %v762 = vadd.f32 %v687, %v743
    %763 = vadd.xlane.f32.xlu0 %v762
    %v764 = vpop.xlane.xlu0 %763
    %v765 = vadd.f32 %v689, %v745
    %766 = vadd.xlane.f32.xlu0 %v765
    %v767 = vpop.xlane.xlu0 %766
    %v768 = vadd.f32 %v692, %v748
    %769 = vadd.xlane.f32.xlu0 %v768
    %v770 = vpop.xlane.xlu0 %769
    %v771 = vadd.f32 %v694, %v750
    %772 = vadd.xlane.f32.xlu0 %v771
    %v773 = vpop.xlane.xlu0 %772
    %v774 = vadd.f32 %v697, %v753
    %775 = vadd.xlane.f32.xlu0 %v774
    %v776 = vpop.xlane.xlu0 %775
    %v777 = vmul.f32 %v758, %v243
    %v778 = vmul.f32 %v761, %v243
    %v779 = vmul.f32 %v764, %v243
    %v780 = vmul.f32 %v767, %v243
    %v781 = vmul.f32 %v770, %v243
    %v782 = vmul.f32 %v773, %v243
    %v783 = vmul.f32 %v776, %v243
    %v784 = vsub.f32 %v682, %v777
    %v785 = vsub.f32 %v738, %v777
    %v786 = vsub.f32 %v684, %v778
    %v787 = vsub.f32 %v740, %v778
    %v788 = vsub.f32 %v687, %v779
    %v789 = vsub.f32 %v743, %v779
    %v790 = vsub.f32 %v689, %v780
    %v791 = vsub.f32 %v745, %v780
    %v792 = vsub.f32 %v692, %v781
    %v793 = vsub.f32 %v748, %v781
    %v794 = vsub.f32 %v694, %v782
    %v795 = vsub.f32 %v750, %v782
    %v796 = vsub.f32 %v697, %v783
    %v797 = vsub.f32 %v753, %v783
    %v798 = vmul.f32 %v784, %v784
    %v799 = vmul.f32 %v785, %v785
    %v800 = vmul.f32 %v786, %v786
    %v801 = vmul.f32 %v787, %v787
    %v802 = vmul.f32 %v788, %v788
    %v803 = vmul.f32 %v789, %v789
    %v804 = vmul.f32 %v790, %v790
    %v805 = vmul.f32 %v791, %v791
    %v806 = vmul.f32 %v792, %v792
    %v807 = vmul.f32 %v793, %v793
    %v808 = vmul.f32 %v794, %v794
    %v809 = vmul.f32 %v795, %v795
    %v810 = vmul.f32 %v796, %v796
    %v811 = vmul.f32 %v797, %v797
    %v812 = vadd.f32 %v798, %v799
    %813 = vadd.xlane.f32.xlu0 %v812
    %v814 = vpop.xlane.xlu0 %813
    %v815 = vadd.f32 %v800, %v801
    %816 = vadd.xlane.f32.xlu0 %v815
    %v817 = vpop.xlane.xlu0 %816
    %v818 = vadd.f32 %v802, %v803
    %819 = vadd.xlane.f32.xlu0 %v818
    %v820 = vpop.xlane.xlu0 %819
    %v821 = vadd.f32 %v804, %v805
    %822 = vadd.xlane.f32.xlu0 %v821
    %v823 = vpop.xlane.xlu0 %822
    %v824 = vadd.f32 %v806, %v807
    %825 = vadd.xlane.f32.xlu0 %v824
    %v826 = vpop.xlane.xlu0 %825
    %v827 = vadd.f32 %v808, %v809
    %828 = vadd.xlane.f32.xlu0 %v827
    %v829 = vpop.xlane.xlu0 %828
    %v830 = vadd.f32 %v810, %v811
    %831 = vadd.xlane.f32.xlu0 %v830
    %v832 = vpop.xlane.xlu0 %831
    %v833 = vmul.f32 %v814, %v243
    %v834 = vmul.f32 %v817, %v243
    %v835 = vmul.f32 %v820, %v243
    %v836 = vmul.f32 %v823, %v243
    %v837 = vmul.f32 %v826, %v243
    %v838 = vmul.f32 %v829, %v243
    %v839 = vmul.f32 %v832, %v243
    %v840 = vadd.f32 %v833, 1e-05
    %v841 = vadd.f32 %v834, 1e-05
    %v842 = vadd.f32 %v835, 1e-05
    %v843 = vadd.f32 %v836, 1e-05
    %v844 = vadd.f32 %v837, 1e-05
    %v845 = vadd.f32 %v838, 1e-05
    %v846 = vadd.f32 %v839, 1e-05
    %v847 = vrsqrt.pop %v840
    %v848 = vmul.f32 %v847, %v840
    %v849 = vmul.f32 %v848, %v847
    %v850 = vmul.f32 0.5, %v849
    %v851 = vsub.f32 1.5, %v850
    %v852 = vmul.f32 %v847, %v851
    %vm853 = vweird.f32 %v840
    %vm854 = vweird.f32 %v847
    %vm855 = vmor %vm853, %vm854
    %v856 = vsel %vm855, %v847, %v852
    %v857 = vrsqrt.pop %v841
    %v858 = vmul.f32 %v857, %v841
    %v859 = vmul.f32 %v858, %v857
    %v860 = vmul.f32 0.5, %v859
    %v861 = vsub.f32 1.5, %v860
    %v862 = vmul.f32 %v857, %v861
    %vm863 = vweird.f32 %v841
    %vm864 = vweird.f32 %v857
    %vm865 = vmor %vm863, %vm864
    %v866 = vsel %vm865, %v857, %v862
    %v867 = vrsqrt.pop %v842
    %v868 = vmul.f32 %v867, %v842
    %v869 = vmul.f32 %v868, %v867
    %v870 = vmul.f32 0.5, %v869
    %v871 = vsub.f32 1.5, %v870
    %v872 = vmul.f32 %v867, %v871
    %vm873 = vweird.f32 %v842
    %vm874 = vweird.f32 %v867
    %vm875 = vmor %vm873, %vm874
    %v876 = vsel %vm875, %v867, %v872
    %v877 = vrsqrt.pop %v843
    %v878 = vmul.f32 %v877, %v843
    %v879 = vmul.f32 %v878, %v877
    %v880 = vmul.f32 0.5, %v879
    %v881 = vsub.f32 1.5, %v880
    %v882 = vmul.f32 %v877, %v881
    %vm883 = vweird.f32 %v843
    %vm884 = vweird.f32 %v877
    %vm885 = vmor %vm883, %vm884
    %v886 = vsel %vm885, %v877, %v882
    %v887 = vrsqrt.pop %v844
    %v888 = vmul.f32 %v887, %v844
    %v889 = vmul.f32 %v888, %v887
    %v890 = vmul.f32 0.5, %v889
    %v891 = vsub.f32 1.5, %v890
    %v892 = vmul.f32 %v887, %v891
    %vm893 = vweird.f32 %v844
    %vm894 = vweird.f32 %v887
    %vm895 = vmor %vm893, %vm894
    %v896 = vsel %vm895, %v887, %v892
    %v897 = vrsqrt.pop %v845
    %v898 = vmul.f32 %v897, %v845
    %v899 = vmul.f32 %v898, %v897
    %v900 = vmul.f32 0.5, %v899
    %v901 = vsub.f32 1.5, %v900
    %v902 = vmul.f32 %v897, %v901
    %vm903 = vweird.f32 %v845
    %vm904 = vweird.f32 %v897
    %vm905 = vmor %vm903, %vm904
    %v906 = vsel %vm905, %v897, %v902
    %v907 = vrsqrt.pop %v846
    %v908 = vmul.f32 %v907, %v846
    %v909 = vmul.f32 %v908, %v907
    %v910 = vmul.f32 0.5, %v909
    %v911 = vsub.f32 1.5, %v910
    %v912 = vmul.f32 %v907, %v911
    %vm913 = vweird.f32 %v846
    %vm914 = vweird.f32 %v907
    %vm915 = vmor %vm913, %vm914
    %v916 = vsel %vm915, %v907, %v912
    %v918 = vperm.slane %v437, 0
    %v919 = vperm.slane %v437, 1
    %v922 = vmul.f32 %v856, %v918
    %v923 = vmul.f32 %v856, %v919
    %v924 = vmul.f32 %v866, %v918
    %v925 = vmul.f32 %v866, %v919
    %v926 = vmul.f32 %v876, %v918
    %v927 = vmul.f32 %v876, %v919
    %v928 = vmul.f32 %v886, %v918
    %v929 = vmul.f32 %v886, %v919
    %v930 = vmul.f32 %v896, %v918
    %v931 = vmul.f32 %v896, %v919
    %v932 = vmul.f32 %v906, %v918
    %v933 = vmul.f32 %v906, %v919
    %v934 = vmul.f32 %v916, %v918
    %v935 = vmul.f32 %v916, %v919
    %v936 = vmul.f32 %v784, %v922
    %v937 = vmul.f32 %v785, %v923
    %v938 = vmul.f32 %v786, %v924
    %v939 = vmul.f32 %v787, %v925
    %v940 = vmul.f32 %v788, %v926
    %v941 = vmul.f32 %v789, %v927
    %v942 = vmul.f32 %v790, %v928
    %v943 = vmul.f32 %v791, %v929
    %v944 = vmul.f32 %v792, %v930
    %v945 = vmul.f32 %v793, %v931
    %v946 = vmul.f32 %v794, %v932
    %v947 = vmul.f32 %v795, %v933
    %v948 = vmul.f32 %v796, %v934
    %v949 = vmul.f32 %v797, %v935
    %v951 = vperm.slane %v439, 0
    %v952 = vperm.slane %v439, 1
    %v955 = vadd.f32 %v936, %v951
    %v956 = vadd.f32 %v937, %v952
    %v957 = vadd.f32 %v938, %v951
    %v958 = vadd.f32 %v939, %v952
    %v959 = vadd.f32 %v940, %v951
    %v960 = vadd.f32 %v941, %v952
    %v961 = vadd.f32 %v942, %v951
    %v962 = vadd.f32 %v943, %v952
    %v963 = vadd.f32 %v944, %v951
    %v964 = vadd.f32 %v945, %v952
    %v965 = vadd.f32 %v946, %v951
    %v966 = vadd.f32 %v947, %v952
    %v967 = vadd.f32 %v948, %v951
    %v968 = vadd.f32 %v949, %v952
    %v969 = vmax.f32 %v955, 0.0
    %v970 = vmax.f32 %v956, 0.0
    %v971 = vmax.f32 %v957, 0.0
    %v972 = vmax.f32 %v958, 0.0
    %v973 = vmax.f32 %v959, 0.0
    %v974 = vmax.f32 %v960, 0.0
    %v975 = vmax.f32 %v961, 0.0
    %v976 = vmax.f32 %v962, 0.0
    %v977 = vmax.f32 %v963, 0.0
    %v978 = vmax.f32 %v964, 0.0
    %v979 = vmax.f32 %v965, 0.0
    %v980 = vmax.f32 %v966, 0.0
    %v981 = vmax.f32 %v967, 0.0
    %v982 = vmax.f32 %v968, 0.0
    %v983 = vpack.c.bf16 %v971, %v969
    %v984 = vpack.c.bf16 %v972, %v970
    %v985 = vpack.c.bf16 %v975, %v973
    %v986 = vpack.c.bf16 %v976, %v974
    %v987 = vpack.c.bf16 %v979, %v977
    %v988 = vpack.c.bf16 %v980, %v978
    %v989 = vpack.c.bf16 %v981, %v981
    %v990 = vpack.c.bf16 %v982, %v982
    %v991 = vld [vmem:[#allocation4] sm:$0xff]
    %v992 = vld [vmem:[#allocation4 + $0x8] sm:$0xff]
    %v993 = vld [vmem:[#allocation4 + $0x10] sm:$0xff]
    %v994 = vld [vmem:[#allocation4 + $0x18] sm:$0xff]
    %v995 = vld [vmem:[#allocation4 + $0x20] sm:$0xff]
    %v996 = vld [vmem:[#allocation4 + $0x28] sm:$0xff]
    %v997 = vld [vmem:[#allocation4 + $0x30] sm:$0xff]
    %v998 = vld [vmem:[#allocation4 + $0x38] sm:$0xff]
    %v999 = vld [vmem:[#allocation4 + $0x40] sm:$0xff]
    %v1000 = vld [vmem:[#allocation4 + $0x48] sm:$0xff]
    %v1001 = vld [vmem:[#allocation4 + $0x50] sm:$0xff]
    %v1002 = vld [vmem:[#allocation4 + $0x58] sm:$0xff]
    %v1003 = vld [vmem:[#allocation4 + $0x60] sm:$0xff]
    %v1004 = vld [vmem:[#allocation4 + $0x68] sm:$0xff]
    %v1005 = vld [vmem:[#allocation4 + $0x70] sm:$0xff]
    %v1006 = vld [vmem:[#allocation4 + $0x78] sm:$0xff]
    %v1007 = vld [vmem:[#allocation4 + $0x80] sm:$0xff]
    %v1008 = vld [vmem:[#allocation4 + $0x88] sm:$0xff]
    %v1009 = vld [vmem:[#allocation4 + $0x90] sm:$0xff]
    %v1010 = vld [vmem:[#allocation4 + $0x98] sm:$0xff]
    %v1011 = vld [vmem:[#allocation4 + $0xa0] sm:$0xff]
    %v1012 = vld [vmem:[#allocation4 + $0xa8] sm:$0xff]
    %v1013 = vld [vmem:[#allocation4 + $0xb0] sm:$0xff]
    %v1014 = vld [vmem:[#allocation4 + $0xb8] sm:$0xff]
    %v1015 = vld [vmem:[#allocation4 + $0xc0] sm:$0xff]
    %v1016 = vld [vmem:[#allocation4 + $0xc8] sm:$0xff]
    %v1017 = vld [vmem:[#allocation4 + $0xd0] sm:$0xff]
    %v1018 = vld [vmem:[#allocation4 + $0xd8] sm:$0xff]
    %v1019 = vld [vmem:[#allocation4 + $0xe0] sm:$0xff]
    %v1020 = vld [vmem:[#allocation4 + $0xe8] sm:$0xff]
    %v1021 = vld [vmem:[#allocation4 + $0xf0] sm:$0xff]
    %v1022 = vld [vmem:[#allocation4 + $0xf8] sm:$0xff]
    %v1055 = vunpack.c.l.b16 %v991
    %v1056 = vunpack.c.h.b16 %v991
    %v1057 = vunpack.c.l.b16 %v992
    %v1058 = vunpack.c.h.b16 %v992
    %v1059 = vunpack.c.l.b16 %v993
    %v1060 = vunpack.c.h.b16 %v993
    %v1061 = vunpack.c.l.b16 %v994
    %v1062 = vunpack.c.h.b16 %v994
    %v1063 = vunpack.c.l.b16 %v995
    %v1064 = vunpack.c.h.b16 %v995
    %v1065 = vunpack.c.l.b16 %v996
    %v1066 = vunpack.c.h.b16 %v996
    %v1067 = vunpack.c.l.b16 %v997
    %v1068 = vunpack.c.h.b16 %v997
    %v1069 = vunpack.c.l.b16 %v998
    %v1070 = vunpack.c.h.b16 %v998
    %v1071 = vunpack.c.l.b16 %v999
    %v1072 = vunpack.c.h.b16 %v999
    %v1073 = vunpack.c.l.b16 %v1000
    %v1074 = vunpack.c.h.b16 %v1000
    %v1075 = vunpack.c.l.b16 %v1001
    %v1076 = vunpack.c.h.b16 %v1001
    %v1077 = vunpack.c.l.b16 %v1002
    %v1078 = vunpack.c.h.b16 %v1002
    %v1079 = vunpack.c.l.b16 %v1003
    %v1080 = vunpack.c.h.b16 %v1003
    %v1081 = vunpack.c.l.b16 %v1004
    %v1082 = vunpack.c.h.b16 %v1004
    %v1083 = vunpack.c.l.b16 %v1005
    %v1084 = vunpack.c.h.b16 %v1005
    %v1085 = vunpack.c.l.b16 %v1006
    %v1086 = vunpack.c.h.b16 %v1006
    %v1087 = vunpack.c.l.b16 %v1007
    %v1088 = vunpack.c.h.b16 %v1007
    %v1089 = vunpack.c.l.b16 %v1008
    %v1090 = vunpack.c.h.b16 %v1008
    %v1091 = vunpack.c.l.b16 %v1009
    %v1092 = vunpack.c.h.b16 %v1009
    %v1093 = vunpack.c.l.b16 %v1010
    %v1094 = vunpack.c.h.b16 %v1010
    %v1095 = vunpack.c.l.b16 %v1011
    %v1096 = vunpack.c.h.b16 %v1011
    %v1097 = vunpack.c.l.b16 %v1012
    %v1098 = vunpack.c.h.b16 %v1012
    %v1099 = vunpack.c.l.b16 %v1013
    %v1100 = vunpack.c.h.b16 %v1013
    %v1101 = vunpack.c.l.b16 %v1014
    %v1102 = vunpack.c.h.b16 %v1014
    %v1103 = vunpack.c.l.b16 %v1015
    %v1104 = vunpack.c.h.b16 %v1015
    %v1105 = vunpack.c.l.b16 %v1016
    %v1106 = vunpack.c.h.b16 %v1016
    %v1107 = vunpack.c.l.b16 %v1017
    %v1108 = vunpack.c.h.b16 %v1017
    %v1109 = vunpack.c.l.b16 %v1018
    %v1110 = vunpack.c.h.b16 %v1018
    %v1111 = vunpack.c.l.b16 %v1019
    %v1112 = vunpack.c.h.b16 %v1019
    %v1113 = vunpack.c.l.b16 %v1020
    %v1114 = vunpack.c.h.b16 %v1020
    %v1115 = vunpack.c.l.b16 %v1021
    %v1116 = vunpack.c.h.b16 %v1021
    %v1117 = vunpack.c.l.b16 %v1022
    %v1118 = vunpack.c.h.b16 %v1022
    %v1119 = vpack.c.b16 %v1057, %v1055
    %v1120 = vpack.c.b16 %v1058, %v1056
    %v1121 = vpack.c.b16 %v1061, %v1059
    %v1122 = vpack.c.b16 %v1062, %v1060
    %v1123 = vpack.c.b16 %v1065, %v1063
    %v1124 = vpack.c.b16 %v1066, %v1064
    %v1125 = vpack.c.b16 %v1069, %v1067
    %v1126 = vpack.c.b16 %v1070, %v1068
    %v1127 = vpack.c.b16 %v1073, %v1071
    %v1128 = vpack.c.b16 %v1074, %v1072
    %v1129 = vpack.c.b16 %v1077, %v1075
    %v1130 = vpack.c.b16 %v1078, %v1076
    %v1131 = vpack.c.b16 %v1081, %v1079
    %v1132 = vpack.c.b16 %v1082, %v1080
    %v1133 = vpack.c.b16 %v1085, %v1083
    %v1134 = vpack.c.b16 %v1086, %v1084
    %v1135 = vpack.c.b16 %v1089, %v1087
    %v1136 = vpack.c.b16 %v1090, %v1088
    %v1137 = vpack.c.b16 %v1093, %v1091
    %v1138 = vpack.c.b16 %v1094, %v1092
    %v1139 = vpack.c.b16 %v1097, %v1095
    %v1140 = vpack.c.b16 %v1098, %v1096
    %v1141 = vpack.c.b16 %v1101, %v1099
    %v1142 = vpack.c.b16 %v1102, %v1100
    %v1143 = vpack.c.b16 %v1105, %v1103
    %v1144 = vpack.c.b16 %v1106, %v1104
    %v1145 = vpack.c.b16 %v1109, %v1107
    %v1146 = vpack.c.b16 %v1110, %v1108
    %v1147 = vpack.c.b16 %v1113, %v1111
    %v1148 = vpack.c.b16 %v1114, %v1112
    %v1149 = vpack.c.b16 %v1117, %v1115
    %v1150 = vpack.c.b16 %v1118, %v1116
    %1183 = vmatpush.bf16.msra.mxu0 %v1133
    %1184 = vmatpush.bf16.msra.mxu0 %v1131
    %1185 = vmatpush.bf16.msra.mxu0 %v1129
    %1186 = vmatpush.bf16.msra.mxu0 %v1127
    %1187 = vmatpush.bf16.msra.mxu0 %v1125
    %1188 = vmatpush.bf16.msra.mxu0 %v1123
    %1189 = vmatpush.bf16.msra.mxu0 %v1121
    %1190 = vmatpush.bf16.msra.mxu0 %v1119
    %1191 = vmatmul.bf16.gmra.mxu0 %v983
    %v1192 = vpop.f32.mrf.mxu0
    %v1193 = vadd.f32 0.0, %v1192
    %v1194 = vpop.f32.mrf.mxu0
    %v1195 = vadd.f32 0.0, %v1194
    %1196 = vmatmul.bf16.gmra.mxu0 %v985
    %v1197 = vpop.f32.mrf.mxu0
    %v1198 = vadd.f32 0.0, %v1197
    %v1199 = vpop.f32.mrf.mxu0
    %v1200 = vadd.f32 0.0, %v1199
    %1201 = vmatmul.bf16.gmra.mxu0 %v987
    %v1202 = vpop.f32.mrf.mxu0
    %v1203 = vadd.f32 0.0, %v1202
    %v1204 = vpop.f32.mrf.mxu0
    %v1205 = vadd.f32 0.0, %v1204
    %1206 = vmatmul.bf16.gmra.mxu0 %v989
    %v1207 = vpop.f32.mrf.mxu0
    %v1208 = vadd.f32 0.0, %v1207
    %v1209 = vpop.f32.mrf.mxu0
    %1210 = vdwg.mxu0
    %1211 = vmatpush.bf16.msra.mxu0 %v1149
    %1212 = vmatpush.bf16.msra.mxu0 %v1147
    %1213 = vmatpush.bf16.msra.mxu0 %v1145
    %1214 = vmatpush.bf16.msra.mxu0 %v1143
    %1215 = vmatpush.bf16.msra.mxu0 %v1141
    %1216 = vmatpush.bf16.msra.mxu0 %v1139
    %1217 = vmatpush.bf16.msra.mxu0 %v1137
    %1218 = vmatpush.bf16.msra.mxu0 %v1135
    %1219 = vmatmul.bf16.gmra.mxu0 %v984
    %v1220 = vpop.f32.mrf.mxu0
    %v1221 = vadd.f32 %v1193, %v1220
    %v1222 = vpop.f32.mrf.mxu0
    %v1223 = vadd.f32 %v1195, %v1222
    %1224 = vmatmul.bf16.gmra.mxu0 %v986
    %v1225 = vpop.f32.mrf.mxu0
    %v1226 = vadd.f32 %v1198, %v1225
    %v1227 = vpop.f32.mrf.mxu0
    %v1228 = vadd.f32 %v1200, %v1227
    %1229 = vmatmul.bf16.gmra.mxu0 %v988
    %v1230 = vpop.f32.mrf.mxu0
    %v1231 = vadd.f32 %v1203, %v1230
    %v1232 = vpop.f32.mrf.mxu0
    %v1233 = vadd.f32 %v1205, %v1232
    %1234 = vmatmul.bf16.gmra.mxu0 %v990
    %v1235 = vpop.f32.mrf.mxu0
    %v1236 = vadd.f32 %v1208, %v1235
    %v1237 = vpop.f32.mrf.mxu0
    %1238 = vdwg.mxu0
    %1239 = vmatpush.bf16.msra.mxu0 %v1134
    %1240 = vmatpush.bf16.msra.mxu0 %v1132
    %1241 = vmatpush.bf16.msra.mxu0 %v1130
    %1242 = vmatpush.bf16.msra.mxu0 %v1128
    %1243 = vmatpush.bf16.msra.mxu0 %v1126
    %1244 = vmatpush.bf16.msra.mxu0 %v1124
    %1245 = vmatpush.bf16.msra.mxu0 %v1122
    %1246 = vmatpush.bf16.msra.mxu0 %v1120
    %1247 = vmatmul.bf16.gmra.mxu0 %v983
    %v1248 = vpop.f32.mrf.mxu0
    %v1249 = vadd.f32 0.0, %v1248
    %v1250 = vpop.f32.mrf.mxu0
    %v1251 = vadd.f32 0.0, %v1250
    %1252 = vmatmul.bf16.gmra.mxu0 %v985
    %v1253 = vpop.f32.mrf.mxu0
    %v1254 = vadd.f32 0.0, %v1253
    %v1255 = vpop.f32.mrf.mxu0
    %v1256 = vadd.f32 0.0, %v1255
    %1257 = vmatmul.bf16.gmra.mxu0 %v987
    %v1258 = vpop.f32.mrf.mxu0
    %v1259 = vadd.f32 0.0, %v1258
    %v1260 = vpop.f32.mrf.mxu0
    %v1261 = vadd.f32 0.0, %v1260
    %1262 = vmatmul.bf16.gmra.mxu0 %v989
    %v1263 = vpop.f32.mrf.mxu0
    %v1264 = vadd.f32 0.0, %v1263
    %v1265 = vpop.f32.mrf.mxu0
    %1266 = vdwg.mxu0
    %1267 = vmatpush.bf16.msra.mxu0 %v1150
    %1268 = vmatpush.bf16.msra.mxu0 %v1148
    %1269 = vmatpush.bf16.msra.mxu0 %v1146
    %1270 = vmatpush.bf16.msra.mxu0 %v1144
    %1271 = vmatpush.bf16.msra.mxu0 %v1142
    %1272 = vmatpush.bf16.msra.mxu0 %v1140
    %1273 = vmatpush.bf16.msra.mxu0 %v1138
    %1274 = vmatpush.bf16.msra.mxu0 %v1136
    %1275 = vmatmul.bf16.gmra.mxu0 %v984
    %v1276 = vpop.f32.mrf.mxu0
    %v1277 = vadd.f32 %v1249, %v1276
    %v1278 = vpop.f32.mrf.mxu0
    %v1279 = vadd.f32 %v1251, %v1278
    %1280 = vmatmul.bf16.gmra.mxu0 %v986
    %v1281 = vpop.f32.mrf.mxu0
    %v1282 = vadd.f32 %v1254, %v1281
    %v1283 = vpop.f32.mrf.mxu0
    %v1284 = vadd.f32 %v1256, %v1283
    %1285 = vmatmul.bf16.gmra.mxu0 %v988
    %v1286 = vpop.f32.mrf.mxu0
    %v1287 = vadd.f32 %v1259, %v1286
    %v1288 = vpop.f32.mrf.mxu0
    %v1289 = vadd.f32 %v1261, %v1288
    %1290 = vmatmul.bf16.gmra.mxu0 %v990
    %v1291 = vpop.f32.mrf.mxu0
    %v1292 = vadd.f32 %v1264, %v1291
    %v1293 = vpop.f32.mrf.mxu0
    %1294 = vdwg.mxu0
    %v1295 = vadd.f32 %v1221, %v1277
    %1296 = vadd.xlane.f32.xlu0 %v1295
    %v1297 = vpop.xlane.xlu0 %1296
    %v1298 = vadd.f32 %v1223, %v1279
    %1299 = vadd.xlane.f32.xlu0 %v1298
    %v1300 = vpop.xlane.xlu0 %1299
    %v1301 = vadd.f32 %v1226, %v1282
    %1302 = vadd.xlane.f32.xlu0 %v1301
    %v1303 = vpop.xlane.xlu0 %1302
    %v1304 = vadd.f32 %v1228, %v1284
    %1305 = vadd.xlane.f32.xlu0 %v1304
    %v1306 = vpop.xlane.xlu0 %1305
    %v1307 = vadd.f32 %v1231, %v1287
    %1308 = vadd.xlane.f32.xlu0 %v1307
    %v1309 = vpop.xlane.xlu0 %1308
    %v1310 = vadd.f32 %v1233, %v1289
    %1311 = vadd.xlane.f32.xlu0 %v1310
    %v1312 = vpop.xlane.xlu0 %1311
    %v1313 = vadd.f32 %v1236, %v1292
    %1314 = vadd.xlane.f32.xlu0 %v1313
    %v1315 = vpop.xlane.xlu0 %1314
    %v1316 = vmul.f32 %v1297, %v243
    %v1317 = vmul.f32 %v1300, %v243
    %v1318 = vmul.f32 %v1303, %v243
    %v1319 = vmul.f32 %v1306, %v243
    %v1320 = vmul.f32 %v1309, %v243
    %v1321 = vmul.f32 %v1312, %v243
    %v1322 = vmul.f32 %v1315, %v243
    %v1323 = vsub.f32 %v1221, %v1316
    %v1324 = vsub.f32 %v1277, %v1316
    %v1325 = vsub.f32 %v1223, %v1317
    %v1326 = vsub.f32 %v1279, %v1317
    %v1327 = vsub.f32 %v1226, %v1318
    %v1328 = vsub.f32 %v1282, %v1318
    %v1329 = vsub.f32 %v1228, %v1319
    %v1330 = vsub.f32 %v1284, %v1319
    %v1331 = vsub.f32 %v1231, %v1320
    %v1332 = vsub.f32 %v1287, %v1320
    %v1333 = vsub.f32 %v1233, %v1321
    %v1334 = vsub.f32 %v1289, %v1321
    %v1335 = vsub.f32 %v1236, %v1322
    %v1336 = vsub.f32 %v1292, %v1322
    %v1337 = vmul.f32 %v1323, %v1323
    %v1338 = vmul.f32 %v1324, %v1324
    %v1339 = vmul.f32 %v1325, %v1325
    %v1340 = vmul.f32 %v1326, %v1326
    %v1341 = vmul.f32 %v1327, %v1327
    %v1342 = vmul.f32 %v1328, %v1328
    %v1343 = vmul.f32 %v1329, %v1329
    %v1344 = vmul.f32 %v1330, %v1330
    %v1345 = vmul.f32 %v1331, %v1331
    %v1346 = vmul.f32 %v1332, %v1332
    %v1347 = vmul.f32 %v1333, %v1333
    %v1348 = vmul.f32 %v1334, %v1334
    %v1349 = vmul.f32 %v1335, %v1335
    %v1350 = vmul.f32 %v1336, %v1336
    %v1351 = vadd.f32 %v1337, %v1338
    %1352 = vadd.xlane.f32.xlu0 %v1351
    %v1353 = vpop.xlane.xlu0 %1352
    %v1354 = vadd.f32 %v1339, %v1340
    %1355 = vadd.xlane.f32.xlu0 %v1354
    %v1356 = vpop.xlane.xlu0 %1355
    %v1357 = vadd.f32 %v1341, %v1342
    %1358 = vadd.xlane.f32.xlu0 %v1357
    %v1359 = vpop.xlane.xlu0 %1358
    %v1360 = vadd.f32 %v1343, %v1344
    %1361 = vadd.xlane.f32.xlu0 %v1360
    %v1362 = vpop.xlane.xlu0 %1361
    %v1363 = vadd.f32 %v1345, %v1346
    %1364 = vadd.xlane.f32.xlu0 %v1363
    %v1365 = vpop.xlane.xlu0 %1364
    %v1366 = vadd.f32 %v1347, %v1348
    %1367 = vadd.xlane.f32.xlu0 %v1366
    %v1368 = vpop.xlane.xlu0 %1367
    %v1369 = vadd.f32 %v1349, %v1350
    %1370 = vadd.xlane.f32.xlu0 %v1369
    %v1371 = vpop.xlane.xlu0 %1370
    %v1372 = vmul.f32 %v1353, %v243
    %v1373 = vmul.f32 %v1356, %v243
    %v1374 = vmul.f32 %v1359, %v243
    %v1375 = vmul.f32 %v1362, %v243
    %v1376 = vmul.f32 %v1365, %v243
    %v1377 = vmul.f32 %v1368, %v243
    %v1378 = vmul.f32 %v1371, %v243
    %v1379 = vadd.f32 %v1372, 1e-05
    %v1380 = vadd.f32 %v1373, 1e-05
    %v1381 = vadd.f32 %v1374, 1e-05
    %v1382 = vadd.f32 %v1375, 1e-05
    %v1383 = vadd.f32 %v1376, 1e-05
    %v1384 = vadd.f32 %v1377, 1e-05
    %v1385 = vadd.f32 %v1378, 1e-05
    %v1386 = vrsqrt.pop %v1379
    %v1387 = vmul.f32 %v1386, %v1379
    %v1388 = vmul.f32 %v1387, %v1386
    %v1389 = vmul.f32 0.5, %v1388
    %v1390 = vsub.f32 1.5, %v1389
    %v1391 = vmul.f32 %v1386, %v1390
    %vm1392 = vweird.f32 %v1379
    %vm1393 = vweird.f32 %v1386
    %vm1394 = vmor %vm1392, %vm1393
    %v1395 = vsel %vm1394, %v1386, %v1391
    %v1396 = vrsqrt.pop %v1380
    %v1397 = vmul.f32 %v1396, %v1380
    %v1398 = vmul.f32 %v1397, %v1396
    %v1399 = vmul.f32 0.5, %v1398
    %v1400 = vsub.f32 1.5, %v1399
    %v1401 = vmul.f32 %v1396, %v1400
    %vm1402 = vweird.f32 %v1380
    %vm1403 = vweird.f32 %v1396
    %vm1404 = vmor %vm1402, %vm1403
    %v1405 = vsel %vm1404, %v1396, %v1401
    %v1406 = vrsqrt.pop %v1381
    %v1407 = vmul.f32 %v1406, %v1381
    %v1408 = vmul.f32 %v1407, %v1406
    %v1409 = vmul.f32 0.5, %v1408
    %v1410 = vsub.f32 1.5, %v1409
    %v1411 = vmul.f32 %v1406, %v1410
    %vm1412 = vweird.f32 %v1381
    %vm1413 = vweird.f32 %v1406
    %vm1414 = vmor %vm1412, %vm1413
    %v1415 = vsel %vm1414, %v1406, %v1411
    %v1416 = vrsqrt.pop %v1382
    %v1417 = vmul.f32 %v1416, %v1382
    %v1418 = vmul.f32 %v1417, %v1416
    %v1419 = vmul.f32 0.5, %v1418
    %v1420 = vsub.f32 1.5, %v1419
    %v1421 = vmul.f32 %v1416, %v1420
    %vm1422 = vweird.f32 %v1382
    %vm1423 = vweird.f32 %v1416
    %vm1424 = vmor %vm1422, %vm1423
    %v1425 = vsel %vm1424, %v1416, %v1421
    %v1426 = vrsqrt.pop %v1383
    %v1427 = vmul.f32 %v1426, %v1383
    %v1428 = vmul.f32 %v1427, %v1426
    %v1429 = vmul.f32 0.5, %v1428
    %v1430 = vsub.f32 1.5, %v1429
    %v1431 = vmul.f32 %v1426, %v1430
    %vm1432 = vweird.f32 %v1383
    %vm1433 = vweird.f32 %v1426
    %vm1434 = vmor %vm1432, %vm1433
    %v1435 = vsel %vm1434, %v1426, %v1431
    %v1436 = vrsqrt.pop %v1384
    %v1437 = vmul.f32 %v1436, %v1384
    %v1438 = vmul.f32 %v1437, %v1436
    %v1439 = vmul.f32 0.5, %v1438
    %v1440 = vsub.f32 1.5, %v1439
    %v1441 = vmul.f32 %v1436, %v1440
    %vm1442 = vweird.f32 %v1384
    %vm1443 = vweird.f32 %v1436
    %vm1444 = vmor %vm1442, %vm1443
    %v1445 = vsel %vm1444, %v1436, %v1441
    %v1446 = vrsqrt.pop %v1385
    %v1447 = vmul.f32 %v1446, %v1385
    %v1448 = vmul.f32 %v1447, %v1446
    %v1449 = vmul.f32 0.5, %v1448
    %v1450 = vsub.f32 1.5, %v1449
    %v1451 = vmul.f32 %v1446, %v1450
    %vm1452 = vweird.f32 %v1385
    %vm1453 = vweird.f32 %v1446
    %vm1454 = vmor %vm1452, %vm1453
    %v1455 = vsel %vm1454, %v1446, %v1451
    %v1457 = vperm.slane %v441, 0
    %v1458 = vperm.slane %v441, 1
    %v1461 = vmul.f32 %v1395, %v1457
    %v1462 = vmul.f32 %v1395, %v1458
    %v1463 = vmul.f32 %v1405, %v1457
    %v1464 = vmul.f32 %v1405, %v1458
    %v1465 = vmul.f32 %v1415, %v1457
    %v1466 = vmul.f32 %v1415, %v1458
    %v1467 = vmul.f32 %v1425, %v1457
    %v1468 = vmul.f32 %v1425, %v1458
    %v1469 = vmul.f32 %v1435, %v1457
    %v1470 = vmul.f32 %v1435, %v1458
    %v1471 = vmul.f32 %v1445, %v1457
    %v1472 = vmul.f32 %v1445, %v1458
    %v1473 = vmul.f32 %v1455, %v1457
    %v1474 = vmul.f32 %v1455, %v1458
    %v1475 = vmul.f32 %v1323, %v1461
    %v1476 = vmul.f32 %v1324, %v1462
    %v1477 = vmul.f32 %v1325, %v1463
    %v1478 = vmul.f32 %v1326, %v1464
    %v1479 = vmul.f32 %v1327, %v1465
    %v1480 = vmul.f32 %v1328, %v1466
    %v1481 = vmul.f32 %v1329, %v1467
    %v1482 = vmul.f32 %v1330, %v1468
    %v1483 = vmul.f32 %v1331, %v1469
    %v1484 = vmul.f32 %v1332, %v1470
    %v1485 = vmul.f32 %v1333, %v1471
    %v1486 = vmul.f32 %v1334, %v1472
    %v1487 = vmul.f32 %v1335, %v1473
    %v1488 = vmul.f32 %v1336, %v1474
    %v1490 = vperm.slane %v443, 0
    %v1491 = vperm.slane %v443, 1
    %v1494 = vadd.f32 %v1475, %v1490
    %v1495 = vadd.f32 %v1476, %v1491
    %v1496 = vadd.f32 %v1477, %v1490
    %v1497 = vadd.f32 %v1478, %v1491
    %v1498 = vadd.f32 %v1479, %v1490
    %v1499 = vadd.f32 %v1480, %v1491
    %v1500 = vadd.f32 %v1481, %v1490
    %v1501 = vadd.f32 %v1482, %v1491
    %v1502 = vadd.f32 %v1483, %v1490
    %v1503 = vadd.f32 %v1484, %v1491
    %v1504 = vadd.f32 %v1485, %v1490
    %v1505 = vadd.f32 %v1486, %v1491
    %v1506 = vadd.f32 %v1487, %v1490
    %v1507 = vadd.f32 %v1488, %v1491
    %v1508 = vadd.f32 %v1494, %v422
    %v1509 = vadd.f32 %v1495, %v423
    %v1510 = vadd.f32 %v1496, %v424
    %v1511 = vadd.f32 %v1497, %v425
    %v1512 = vadd.f32 %v1498, %v426
    %v1513 = vadd.f32 %v1499, %v427
    %v1514 = vadd.f32 %v1500, %v428
    %v1515 = vadd.f32 %v1501, %v429
    %v1516 = vadd.f32 %v1502, %v430
    %v1517 = vadd.f32 %v1503, %v431
    %v1518 = vadd.f32 %v1504, %v432
    %v1519 = vadd.f32 %v1505, %v433
    %v1520 = vadd.f32 %v1506, %v434
    %v1521 = vadd.f32 %v1507, %v435
    %v1522 = vmax.f32 %v1508, 0.0
    %v1523 = vmax.f32 %v1509, 0.0
    %v1524 = vmax.f32 %v1510, 0.0
    %v1525 = vmax.f32 %v1511, 0.0
    %v1526 = vmax.f32 %v1512, 0.0
    %v1527 = vmax.f32 %v1513, 0.0
    %v1528 = vmax.f32 %v1514, 0.0
    %v1529 = vmax.f32 %v1515, 0.0
    %v1530 = vmax.f32 %v1516, 0.0
    %v1531 = vmax.f32 %v1517, 0.0
    %v1532 = vmax.f32 %v1518, 0.0
    %v1533 = vmax.f32 %v1519, 0.0
    %v1534 = vmax.f32 %v1520, 0.0
    %v1535 = vmax.f32 %v1521, 0.0
    %v1536 = vld [vmem:[%s13 + $0x6] ss:$0 sm:$0xff]
    %v1537 = vld [vmem:[%s13 + $0x7] ss:$0 sm:$0xff]
    %v1538 = vld [vmem:[%s13 + $0x10] ss:$0 sm:$0xff]
    %v1539 = vld [vmem:[%s13 + $0x11] ss:$0 sm:$0xff]
    %v1540 = vld [vmem:[%s13 + $0x12] ss:$0 sm:$0xff]
    %v1541 = vld [vmem:[%s13 + $0x13] ss:$0 sm:$0xff]
    %v1542 = vpack.c.bf16 %v1524, %v1522
    %v1543 = vpack.c.bf16 %v1525, %v1523
    %v1544 = vpack.c.bf16 %v1528, %v1526
    %v1545 = vpack.c.bf16 %v1529, %v1527
    %v1546 = vpack.c.bf16 %v1532, %v1530
    %v1547 = vpack.c.bf16 %v1533, %v1531
    %v1548 = vpack.c.bf16 %v1534, %v1534
    %v1549 = vpack.c.bf16 %v1535, %v1535
    %v1550 = vld [vmem:[#allocation6] sm:$0xff]
    %v1551 = vld [vmem:[#allocation6 + $0x8] sm:$0xff]
    %v1552 = vld [vmem:[#allocation6 + $0x10] sm:$0xff]
    %v1553 = vld [vmem:[#allocation6 + $0x18] sm:$0xff]
    %v1554 = vld [vmem:[#allocation6 + $0x20] sm:$0xff]
    %v1555 = vld [vmem:[#allocation6 + $0x28] sm:$0xff]
    %v1556 = vld [vmem:[#allocation6 + $0x30] sm:$0xff]
    %v1557 = vld [vmem:[#allocation6 + $0x38] sm:$0xff]
    %v1558 = vld [vmem:[#allocation6 + $0x40] sm:$0xff]
    %v1559 = vld [vmem:[#allocation6 + $0x48] sm:$0xff]
    %v1560 = vld [vmem:[#allocation6 + $0x50] sm:$0xff]
    %v1561 = vld [vmem:[#allocation6 + $0x58] sm:$0xff]
    %v1562 = vld [vmem:[#allocation6 + $0x60] sm:$0xff]
    %v1563 = vld [vmem:[#allocation6 + $0x68] sm:$0xff]
    %v1564 = vld [vmem:[#allocation6 + $0x70] sm:$0xff]
    %v1565 = vld [vmem:[#allocation6 + $0x78] sm:$0xff]
    %v1566 = vld [vmem:[#allocation6 + $0x80] sm:$0xff]
    %v1567 = vld [vmem:[#allocation6 + $0x88] sm:$0xff]
    %v1568 = vld [vmem:[#allocation6 + $0x90] sm:$0xff]
    %v1569 = vld [vmem:[#allocation6 + $0x98] sm:$0xff]
    %v1570 = vld [vmem:[#allocation6 + $0xa0] sm:$0xff]
    %v1571 = vld [vmem:[#allocation6 + $0xa8] sm:$0xff]
    %v1572 = vld [vmem:[#allocation6 + $0xb0] sm:$0xff]
    %v1573 = vld [vmem:[#allocation6 + $0xb8] sm:$0xff]
    %v1574 = vld [vmem:[#allocation6 + $0xc0] sm:$0xff]
    %v1575 = vld [vmem:[#allocation6 + $0xc8] sm:$0xff]
    %v1576 = vld [vmem:[#allocation6 + $0xd0] sm:$0xff]
    %v1577 = vld [vmem:[#allocation6 + $0xd8] sm:$0xff]
    %v1578 = vld [vmem:[#allocation6 + $0xe0] sm:$0xff]
    %v1579 = vld [vmem:[#allocation6 + $0xe8] sm:$0xff]
    %v1580 = vld [vmem:[#allocation6 + $0xf0] sm:$0xff]
    %v1581 = vld [vmem:[#allocation6 + $0xf8] sm:$0xff]
    %v1614 = vunpack.c.l.b16 %v1550
    %v1615 = vunpack.c.h.b16 %v1550
    %v1616 = vunpack.c.l.b16 %v1551
    %v1617 = vunpack.c.h.b16 %v1551
    %v1618 = vunpack.c.l.b16 %v1552
    %v1619 = vunpack.c.h.b16 %v1552
    %v1620 = vunpack.c.l.b16 %v1553
    %v1621 = vunpack.c.h.b16 %v1553
    %v1622 = vunpack.c.l.b16 %v1554
    %v1623 = vunpack.c.h.b16 %v1554
    %v1624 = vunpack.c.l.b16 %v1555
    %v1625 = vunpack.c.h.b16 %v1555
    %v1626 = vunpack.c.l.b16 %v1556
    %v1627 = vunpack.c.h.b16 %v1556
    %v1628 = vunpack.c.l.b16 %v1557
    %v1629 = vunpack.c.h.b16 %v1557
    %v1630 = vunpack.c.l.b16 %v1558
    %v1631 = vunpack.c.h.b16 %v1558
    %v1632 = vunpack.c.l.b16 %v1559
    %v1633 = vunpack.c.h.b16 %v1559
    %v1634 = vunpack.c.l.b16 %v1560
    %v1635 = vunpack.c.h.b16 %v1560
    %v1636 = vunpack.c.l.b16 %v1561
    %v1637 = vunpack.c.h.b16 %v1561
    %v1638 = vunpack.c.l.b16 %v1562
    %v1639 = vunpack.c.h.b16 %v1562
    %v1640 = vunpack.c.l.b16 %v1563
    %v1641 = vunpack.c.h.b16 %v1563
    %v1642 = vunpack.c.l.b16 %v1564
    %v1643 = vunpack.c.h.b16 %v1564
    %v1644 = vunpack.c.l.b16 %v1565
    %v1645 = vunpack.c.h.b16 %v1565
    %v1646 = vunpack.c.l.b16 %v1566
    %v1647 = vunpack.c.h.b16 %v1566
    %v1648 = vunpack.c.l.b16 %v1567
    %v1649 = vunpack.c.h.b16 %v1567
    %v1650 = vunpack.c.l.b16 %v1568
    %v1651 = vunpack.c.h.b16 %v1568
    %v1652 = vunpack.c.l.b16 %v1569
    %v1653 = vunpack.c.h.b16 %v1569
    %v1654 = vunpack.c.l.b16 %v1570
    %v1655 = vunpack.c.h.b16 %v1570
    %v1656 = vunpack.c.l.b16 %v1571
    %v1657 = vunpack.c.h.b16 %v1571
    %v1658 = vunpack.c.l.b16 %v1572
    %v1659 = vunpack.c.h.b16 %v1572
    %v1660 = vunpack.c.l.b16 %v1573
    %v1661 = vunpack.c.h.b16 %v1573
    %v1662 = vunpack.c.l.b16 %v1574
    %v1663 = vunpack.c.h.b16 %v1574
    %v1664 = vunpack.c.l.b16 %v1575
    %v1665 = vunpack.c.h.b16 %v1575
    %v1666 = vunpack.c.l.b16 %v1576
    %v1667 = vunpack.c.h.b16 %v1576
    %v1668 = vunpack.c.l.b16 %v1577
    %v1669 = vunpack.c.h.b16 %v1577
    %v1670 = vunpack.c.l.b16 %v1578
    %v1671 = vunpack.c.h.b16 %v1578
    %v1672 = vunpack.c.l.b16 %v1579
    %v1673 = vunpack.c.h.b16 %v1579
    %v1674 = vunpack.c.l.b16 %v1580
    %v1675 = vunpack.c.h.b16 %v1580
    %v1676 = vunpack.c.l.b16 %v1581
    %v1677 = vunpack.c.h.b16 %v1581
    %v1678 = vpack.c.b16 %v1616, %v1614
    %v1679 = vpack.c.b16 %v1617, %v1615
    %v1680 = vpack.c.b16 %v1620, %v1618
    %v1681 = vpack.c.b16 %v1621, %v1619
    %v1682 = vpack.c.b16 %v1624, %v1622
    %v1683 = vpack.c.b16 %v1625, %v1623
    %v1684 = vpack.c.b16 %v1628, %v1626
    %v1685 = vpack.c.b16 %v1629, %v1627
    %v1686 = vpack.c.b16 %v1632, %v1630
    %v1687 = vpack.c.b16 %v1633, %v1631
    %v1688 = vpack.c.b16 %v1636, %v1634
    %v1689 = vpack.c.b16 %v1637, %v1635
    %v1690 = vpack.c.b16 %v1640, %v1638
    %v1691 = vpack.c.b16 %v1641, %v1639
    %v1692 = vpack.c.b16 %v1644, %v1642
    %v1693 = vpack.c.b16 %v1645, %v1643
    %v1694 = vpack.c.b16 %v1648, %v1646
    %v1695 = vpack.c.b16 %v1649, %v1647
    %v1696 = vpack.c.b16 %v1652, %v1650
    %v1697 = vpack.c.b16 %v1653, %v1651
    %v1698 = vpack.c.b16 %v1656, %v1654
    %v1699 = vpack.c.b16 %v1657, %v1655
    %v1700 = vpack.c.b16 %v1660, %v1658
    %v1701 = vpack.c.b16 %v1661, %v1659
    %v1702 = vpack.c.b16 %v1664, %v1662
    %v1703 = vpack.c.b16 %v1665, %v1663
    %v1704 = vpack.c.b16 %v1668, %v1666
    %v1705 = vpack.c.b16 %v1669, %v1667
    %v1706 = vpack.c.b16 %v1672, %v1670
    %v1707 = vpack.c.b16 %v1673, %v1671
    %v1708 = vpack.c.b16 %v1676, %v1674
    %v1709 = vpack.c.b16 %v1677, %v1675
    %1742 = vmatpush.bf16.msra.mxu0 %v1692
    %1743 = vmatpush.bf16.msra.mxu0 %v1690
    %1744 = vmatpush.bf16.msra.mxu0 %v1688
    %1745 = vmatpush.bf16.msra.mxu0 %v1686
    %1746 = vmatpush.bf16.msra.mxu0 %v1684
    %1747 = vmatpush.bf16.msra.mxu0 %v1682
    %1748 = vmatpush.bf16.msra.mxu0 %v1680
    %1749 = vmatpush.bf16.msra.mxu0 %v1678
    %1750 = vmatmul.bf16.gmra.mxu0 %v1542
    %v1751 = vpop.f32.mrf.mxu0
    %v1752 = vadd.f32 0.0, %v1751
    %v1753 = vpop.f32.mrf.mxu0
    %v1754 = vadd.f32 0.0, %v1753
    %1755 = vmatmul.bf16.gmra.mxu0 %v1544
    %v1756 = vpop.f32.mrf.mxu0
    %v1757 = vadd.f32 0.0, %v1756
    %v1758 = vpop.f32.mrf.mxu0
    %v1759 = vadd.f32 0.0, %v1758
    %1760 = vmatmul.bf16.gmra.mxu0 %v1546
    %v1761 = vpop.f32.mrf.mxu0
    %v1762 = vadd.f32 0.0, %v1761
    %v1763 = vpop.f32.mrf.mxu0
    %v1764 = vadd.f32 0.0, %v1763
    %1765 = vmatmul.bf16.gmra.mxu0 %v1548
    %v1766 = vpop.f32.mrf.mxu0
    %v1767 = vadd.f32 0.0, %v1766
    %v1768 = vpop.f32.mrf.mxu0
    %1769 = vdwg.mxu0
    %1770 = vmatpush.bf16.msra.mxu0 %v1708
    %1771 = vmatpush.bf16.msra.mxu0 %v1706
    %1772 = vmatpush.bf16.msra.mxu0 %v1704
    %1773 = vmatpush.bf16.msra.mxu0 %v1702
    %1774 = vmatpush.bf16.msra.mxu0 %v1700
    %1775 = vmatpush.bf16.msra.mxu0 %v1698
    %1776 = vmatpush.bf16.msra.mxu0 %v1696
    %1777 = vmatpush.bf16.msra.mxu0 %v1694
    %1778 = vmatmul.bf16.gmra.mxu0 %v1543
    %v1779 = vpop.f32.mrf.mxu0
    %v1780 = vadd.f32 %v1752, %v1779
    %v1781 = vpop.f32.mrf.mxu0
    %v1782 = vadd.f32 %v1754, %v1781
    %1783 = vmatmul.bf16.gmra.mxu0 %v1545
    %v1784 = vpop.f32.mrf.mxu0
    %v1785 = vadd.f32 %v1757, %v1784
    %v1786 = vpop.f32.mrf.mxu0
    %v1787 = vadd.f32 %v1759, %v1786
    %1788 = vmatmul.bf16.gmra.mxu0 %v1547
    %v1789 = vpop.f32.mrf.mxu0
    %v1790 = vadd.f32 %v1762, %v1789
    %v1791 = vpop.f32.mrf.mxu0
    %v1792 = vadd.f32 %v1764, %v1791
    %1793 = vmatmul.bf16.gmra.mxu0 %v1549
    %v1794 = vpop.f32.mrf.mxu0
    %v1795 = vadd.f32 %v1767, %v1794
    %v1796 = vpop.f32.mrf.mxu0
    %1797 = vdwg.mxu0
    %1798 = vmatpush.bf16.msra.mxu0 %v1693
    %1799 = vmatpush.bf16.msra.mxu0 %v1691
    %1800 = vmatpush.bf16.msra.mxu0 %v1689
    %1801 = vmatpush.bf16.msra.mxu0 %v1687
    %1802 = vmatpush.bf16.msra.mxu0 %v1685
    %1803 = vmatpush.bf16.msra.mxu0 %v1683
    %1804 = vmatpush.bf16.msra.mxu0 %v1681
    %1805 = vmatpush.bf16.msra.mxu0 %v1679
    %1806 = vmatmul.bf16.gmra.mxu0 %v1542
    %v1807 = vpop.f32.mrf.mxu0
    %v1808 = vadd.f32 0.0, %v1807
    %v1809 = vpop.f32.mrf.mxu0
    %v1810 = vadd.f32 0.0, %v1809
    %1811 = vmatmul.bf16.gmra.mxu0 %v1544
    %v1812 = vpop.f32.mrf.mxu0
    %v1813 = vadd.f32 0.0, %v1812
    %v1814 = vpop.f32.mrf.mxu0
    %v1815 = vadd.f32 0.0, %v1814
    %1816 = vmatmul.bf16.gmra.mxu0 %v1546
    %v1817 = vpop.f32.mrf.mxu0
    %v1818 = vadd.f32 0.0, %v1817
    %v1819 = vpop.f32.mrf.mxu0
    %v1820 = vadd.f32 0.0, %v1819
    %1821 = vmatmul.bf16.gmra.mxu0 %v1548
    %v1822 = vpop.f32.mrf.mxu0
    %v1823 = vadd.f32 0.0, %v1822
    %v1824 = vpop.f32.mrf.mxu0
    %1825 = vdwg.mxu0
    %1826 = vmatpush.bf16.msra.mxu0 %v1709
    %1827 = vmatpush.bf16.msra.mxu0 %v1707
    %1828 = vmatpush.bf16.msra.mxu0 %v1705
    %1829 = vmatpush.bf16.msra.mxu0 %v1703
    %1830 = vmatpush.bf16.msra.mxu0 %v1701
    %1831 = vmatpush.bf16.msra.mxu0 %v1699
    %1832 = vmatpush.bf16.msra.mxu0 %v1697
    %1833 = vmatpush.bf16.msra.mxu0 %v1695
    %1834 = vmatmul.bf16.gmra.mxu0 %v1543
    %v1835 = vpop.f32.mrf.mxu0
    %v1836 = vadd.f32 %v1808, %v1835
    %v1837 = vpop.f32.mrf.mxu0
    %v1838 = vadd.f32 %v1810, %v1837
    %1839 = vmatmul.bf16.gmra.mxu0 %v1545
    %v1840 = vpop.f32.mrf.mxu0
    %v1841 = vadd.f32 %v1813, %v1840
    %v1842 = vpop.f32.mrf.mxu0
    %v1843 = vadd.f32 %v1815, %v1842
    %1844 = vmatmul.bf16.gmra.mxu0 %v1547
    %v1845 = vpop.f32.mrf.mxu0
    %v1846 = vadd.f32 %v1818, %v1845
    %v1847 = vpop.f32.mrf.mxu0
    %v1848 = vadd.f32 %v1820, %v1847
    %1849 = vmatmul.bf16.gmra.mxu0 %v1549
    %v1850 = vpop.f32.mrf.mxu0
    %v1851 = vadd.f32 %v1823, %v1850
    %v1852 = vpop.f32.mrf.mxu0
    %1853 = vdwg.mxu0
    %1854 = vadd.xlane.f32.xlu0 %v1780
    %v1855 = vpop.xlane.xlu0 %1854
    %1856 = vadd.xlane.f32.xlu0 %v1782
    %v1857 = vpop.xlane.xlu0 %1856
    %1858 = vadd.xlane.f32.xlu0 %v1785
    %v1859 = vpop.xlane.xlu0 %1858
    %1860 = vadd.xlane.f32.xlu0 %v1787
    %v1861 = vpop.xlane.xlu0 %1860
    %1862 = vadd.xlane.f32.xlu0 %v1790
    %v1863 = vpop.xlane.xlu0 %1862
    %1864 = vadd.xlane.f32.xlu0 %v1792
    %v1865 = vpop.xlane.xlu0 %1864
    %1866 = vadd.xlane.f32.xlu0 %v1795
    %v1867 = vpop.xlane.xlu0 %1866
    %v1868 = vrcp.pop 128.0
    %v1869 = vmul.f32 128.0, %v1868
    %v1870 = vsub.f32 1.0, %v1869
    %v1871 = vmul.f32 %v1868, %v1870
    %v1872 = vadd.f32 %v1868, %v1871
    %vm1873 = vweird.f32 %v1868
    %v1874 = vsel %vm1873, %v1868, %v1872
    %v1875 = vmul.f32 %v1855, %v1874
    %v1876 = vmul.f32 %v1857, %v1874
    %v1877 = vmul.f32 %v1859, %v1874
    %v1878 = vmul.f32 %v1861, %v1874
    %v1879 = vmul.f32 %v1863, %v1874
    %v1880 = vmul.f32 %v1865, %v1874
    %v1881 = vmul.f32 %v1867, %v1874
    %v1882 = vsub.f32 %v1780, %v1875
    %v1883 = vsub.f32 %v1782, %v1876
    %v1884 = vsub.f32 %v1785, %v1877
    %v1885 = vsub.f32 %v1787, %v1878
    %v1886 = vsub.f32 %v1790, %v1879
    %v1887 = vsub.f32 %v1792, %v1880
    %v1888 = vsub.f32 %v1795, %v1881
    %v1889 = vmul.f32 %v1882, %v1882
    %v1890 = vmul.f32 %v1883, %v1883
    %v1891 = vmul.f32 %v1884, %v1884
    %v1892 = vmul.f32 %v1885, %v1885
    %v1893 = vmul.f32 %v1886, %v1886
    %v1894 = vmul.f32 %v1887, %v1887
    %v1895 = vmul.f32 %v1888, %v1888
    %1896 = vadd.xlane.f32.xlu0 %v1889
    %v1897 = vpop.xlane.xlu0 %1896
    %1898 = vadd.xlane.f32.xlu0 %v1890
    %v1899 = vpop.xlane.xlu0 %1898
    %1900 = vadd.xlane.f32.xlu0 %v1891
    %v1901 = vpop.xlane.xlu0 %1900
    %1902 = vadd.xlane.f32.xlu0 %v1892
    %v1903 = vpop.xlane.xlu0 %1902
    %1904 = vadd.xlane.f32.xlu0 %v1893
    %v1905 = vpop.xlane.xlu0 %1904
    %1906 = vadd.xlane.f32.xlu0 %v1894
    %v1907 = vpop.xlane.xlu0 %1906
    %1908 = vadd.xlane.f32.xlu0 %v1895
    %v1909 = vpop.xlane.xlu0 %1908
    %v1910 = vmul.f32 %v1897, %v1874
    %v1911 = vmul.f32 %v1899, %v1874
    %v1912 = vmul.f32 %v1901, %v1874
    %v1913 = vmul.f32 %v1903, %v1874
    %v1914 = vmul.f32 %v1905, %v1874
    %v1915 = vmul.f32 %v1907, %v1874
    %v1916 = vmul.f32 %v1909, %v1874
    %v1917 = vadd.f32 %v1910, 1e-05
    %v1918 = vadd.f32 %v1911, 1e-05
    %v1919 = vadd.f32 %v1912, 1e-05
    %v1920 = vadd.f32 %v1913, 1e-05
    %v1921 = vadd.f32 %v1914, 1e-05
    %v1922 = vadd.f32 %v1915, 1e-05
    %v1923 = vadd.f32 %v1916, 1e-05
    %v1924 = vrsqrt.pop %v1917
    %v1925 = vmul.f32 %v1924, %v1917
    %v1926 = vmul.f32 %v1925, %v1924
    %v1927 = vmul.f32 0.5, %v1926
    %v1928 = vsub.f32 1.5, %v1927
    %v1929 = vmul.f32 %v1924, %v1928
    %vm1930 = vweird.f32 %v1917
    %vm1931 = vweird.f32 %v1924
    %vm1932 = vmor %vm1930, %vm1931
    %v1933 = vsel %vm1932, %v1924, %v1929
    %v1934 = vrsqrt.pop %v1918
    %v1935 = vmul.f32 %v1934, %v1918
    %v1936 = vmul.f32 %v1935, %v1934
    %v1937 = vmul.f32 0.5, %v1936
    %v1938 = vsub.f32 1.5, %v1937
    %v1939 = vmul.f32 %v1934, %v1938
    %vm1940 = vweird.f32 %v1918
    %vm1941 = vweird.f32 %v1934
    %vm1942 = vmor %vm1940, %vm1941
    %v1943 = vsel %vm1942, %v1934, %v1939
    %v1944 = vrsqrt.pop %v1919
    %v1945 = vmul.f32 %v1944, %v1919
    %v1946 = vmul.f32 %v1945, %v1944
    %v1947 = vmul.f32 0.5, %v1946
    %v1948 = vsub.f32 1.5, %v1947
    %v1949 = vmul.f32 %v1944, %v1948
    %vm1950 = vweird.f32 %v1919
    %vm1951 = vweird.f32 %v1944
    %vm1952 = vmor %vm1950, %vm1951
    %v1953 = vsel %vm1952, %v1944, %v1949
    %v1954 = vrsqrt.pop %v1920
    %v1955 = vmul.f32 %v1954, %v1920
    %v1956 = vmul.f32 %v1955, %v1954
    %v1957 = vmul.f32 0.5, %v1956
    %v1958 = vsub.f32 1.5, %v1957
    %v1959 = vmul.f32 %v1954, %v1958
    %vm1960 = vweird.f32 %v1920
    %vm1961 = vweird.f32 %v1954
    %vm1962 = vmor %vm1960, %vm1961
    %v1963 = vsel %vm1962, %v1954, %v1959
    %v1964 = vrsqrt.pop %v1921
    %v1965 = vmul.f32 %v1964, %v1921
    %v1966 = vmul.f32 %v1965, %v1964
    %v1967 = vmul.f32 0.5, %v1966
    %v1968 = vsub.f32 1.5, %v1967
    %v1969 = vmul.f32 %v1964, %v1968
    %vm1970 = vweird.f32 %v1921
    %vm1971 = vweird.f32 %v1964
    %vm1972 = vmor %vm1970, %vm1971
    %v1973 = vsel %vm1972, %v1964, %v1969
    %v1974 = vrsqrt.pop %v1922
    %v1975 = vmul.f32 %v1974, %v1922
    %v1976 = vmul.f32 %v1975, %v1974
    %v1977 = vmul.f32 0.5, %v1976
    %v1978 = vsub.f32 1.5, %v1977
    %v1979 = vmul.f32 %v1974, %v1978
    %vm1980 = vweird.f32 %v1922
    %vm1981 = vweird.f32 %v1974
    %vm1982 = vmor %vm1980, %vm1981
    %v1983 = vsel %vm1982, %v1974, %v1979
    %v1984 = vrsqrt.pop %v1923
    %v1985 = vmul.f32 %v1984, %v1923
    %v1986 = vmul.f32 %v1985, %v1984
    %v1987 = vmul.f32 0.5, %v1986
    %v1988 = vsub.f32 1.5, %v1987
    %v1989 = vmul.f32 %v1984, %v1988
    %vm1990 = vweird.f32 %v1923
    %vm1991 = vweird.f32 %v1984
    %vm1992 = vmor %vm1990, %vm1991
    %v1993 = vsel %vm1992, %v1984, %v1989
    %v1994 = vmul.f32 %v1933, %v1536
    %v1995 = vmul.f32 %v1943, %v1536
    %v1996 = vmul.f32 %v1953, %v1536
    %v1997 = vmul.f32 %v1963, %v1536
    %v1998 = vmul.f32 %v1973, %v1536
    %v1999 = vmul.f32 %v1983, %v1536
    %v2000 = vmul.f32 %v1993, %v1536
    %v2001 = vmul.f32 %v1882, %v1994
    %v2002 = vmul.f32 %v1883, %v1995
    %v2003 = vmul.f32 %v1884, %v1996
    %v2004 = vmul.f32 %v1885, %v1997
    %v2005 = vmul.f32 %v1886, %v1998
    %v2006 = vmul.f32 %v1887, %v1999
    %v2007 = vmul.f32 %v1888, %v2000
    %v2008 = vadd.f32 %v2001, %v1537
    %v2009 = vadd.f32 %v2002, %v1537
    %v2010 = vadd.f32 %v2003, %v1537
    %v2011 = vadd.f32 %v2004, %v1537
    %v2012 = vadd.f32 %v2005, %v1537
    %v2013 = vadd.f32 %v2006, %v1537
    %v2014 = vadd.f32 %v2007, %v1537
    %v2015 = vmax.f32 %v2008, 0.0
    %v2016 = vmax.f32 %v2009, 0.0
    %v2017 = vmax.f32 %v2010, 0.0
    %v2018 = vmax.f32 %v2011, 0.0
    %v2019 = vmax.f32 %v2012, 0.0
    %v2020 = vmax.f32 %v2013, 0.0
    %v2021 = vmax.f32 %v2014, 0.0
    %v2022 = vpack.c.bf16 %v2016, %v2015
    %v2023 = vpack.c.bf16 %v2018, %v2017
    %v2024 = vpack.c.bf16 %v2020, %v2019
    %v2025 = vpack.c.bf16 %v2021, %v2021
    %v2026 = vld [vmem:[%s5] sm:$0xf]
    %v2027 = vld [vmem:[%s5 + $0x4] sm:$0xf]
    %v2028 = vld [vmem:[%s5 + $0x8] sm:$0xf]
    %v2029 = vld [vmem:[%s5 + $0xc] sm:$0xf]
    %v2030 = vld [vmem:[%s5 + $0x10] sm:$0xf]
    %v2031 = vld [vmem:[%s5 + $0x14] sm:$0xf]
    %v2032 = vld [vmem:[%s5 + $0x18] sm:$0xf]
    %v2033 = vld [vmem:[%s5 + $0x1c] sm:$0xf]
    %v2034 = vld [vmem:[%s5 + $0x20] sm:$0xf]
    %v2035 = vld [vmem:[%s5 + $0x24] sm:$0xf]
    %v2036 = vld [vmem:[%s5 + $0x28] sm:$0xf]
    %v2037 = vld [vmem:[%s5 + $0x2c] sm:$0xf]
    %v2038 = vld [vmem:[%s5 + $0x30] sm:$0xf]
    %v2039 = vld [vmem:[%s5 + $0x34] sm:$0xf]
    %v2040 = vld [vmem:[%s5 + $0x38] sm:$0xf]
    %v2041 = vld [vmem:[%s5 + $0x3c] sm:$0xf]
    %v2058 = vunpack.c.l.b16 %v2026
    %v2059 = vunpack.c.l.b16 %v2027
    %v2060 = vunpack.c.l.b16 %v2028
    %v2061 = vunpack.c.l.b16 %v2029
    %v2062 = vunpack.c.l.b16 %v2030
    %v2063 = vunpack.c.l.b16 %v2031
    %v2064 = vunpack.c.l.b16 %v2032
    %v2065 = vunpack.c.l.b16 %v2033
    %v2066 = vunpack.c.l.b16 %v2034
    %v2067 = vunpack.c.l.b16 %v2035
    %v2068 = vunpack.c.l.b16 %v2036
    %v2069 = vunpack.c.l.b16 %v2037
    %v2070 = vunpack.c.l.b16 %v2038
    %v2071 = vunpack.c.l.b16 %v2039
    %v2072 = vunpack.c.l.b16 %v2040
    %v2073 = vunpack.c.l.b16 %v2041
    %v2074 = vpack.c.b16 %v2059, %v2058
    %v2075 = vpack.c.b16 %v2061, %v2060
    %v2076 = vpack.c.b16 %v2063, %v2062
    %v2077 = vpack.c.b16 %v2065, %v2064
    %v2078 = vpack.c.b16 %v2067, %v2066
    %v2079 = vpack.c.b16 %v2069, %v2068
    %v2080 = vpack.c.b16 %v2071, %v2070
    %v2081 = vpack.c.b16 %v2073, %v2072
    %2090 = vmatpush.bf16.msra.mxu0 %v2081
    %2091 = vmatpush.bf16.msra.mxu0 %v2080
    %2092 = vmatpush.bf16.msra.mxu0 %v2079
    %2093 = vmatpush.bf16.msra.mxu0 %v2078
    %2094 = vmatpush.bf16.msra.mxu0 %v2077
    %2095 = vmatpush.bf16.msra.mxu0 %v2076
    %2096 = vmatpush.bf16.msra.mxu0 %v2075
    %2097 = vmatpush.bf16.msra.mxu0 %v2074
    %2098 = vmatmul.bf16.gmra.mxu0 %v2022
    %v2099 = vpop.f32.mrf.mxu0
    %v2100 = vadd.f32 0.0, %v2099
    %v2101 = vpop.f32.mrf.mxu0
    %v2102 = vadd.f32 0.0, %v2101
    %2103 = vmatmul.bf16.gmra.mxu0 %v2023
    %v2104 = vpop.f32.mrf.mxu0
    %v2105 = vadd.f32 0.0, %v2104
    %v2106 = vpop.f32.mrf.mxu0
    %v2107 = vadd.f32 0.0, %v2106
    %2108 = vmatmul.bf16.gmra.mxu0 %v2024
    %v2109 = vpop.f32.mrf.mxu0
    %v2110 = vadd.f32 0.0, %v2109
    %v2111 = vpop.f32.mrf.mxu0
    %v2112 = vadd.f32 0.0, %v2111
    %2113 = vmatmul.bf16.gmra.mxu0 %v2025
    %v2114 = vpop.f32.mrf.mxu0
    %v2115 = vadd.f32 0.0, %v2114
    %v2116 = vpop.f32.mrf.mxu0
    %2117 = vdwg.mxu0
    %2118 = vadd.xlane.f32.xlu0 %v2100
    %v2119 = vpop.xlane.xlu0 %2118
    %2120 = vadd.xlane.f32.xlu0 %v2102
    %v2121 = vpop.xlane.xlu0 %2120
    %2122 = vadd.xlane.f32.xlu0 %v2105
    %v2123 = vpop.xlane.xlu0 %2122
    %2124 = vadd.xlane.f32.xlu0 %v2107
    %v2125 = vpop.xlane.xlu0 %2124
    %2126 = vadd.xlane.f32.xlu0 %v2110
    %v2127 = vpop.xlane.xlu0 %2126
    %2128 = vadd.xlane.f32.xlu0 %v2112
    %v2129 = vpop.xlane.xlu0 %2128
    %2130 = vadd.xlane.f32.xlu0 %v2115
    %v2131 = vpop.xlane.xlu0 %2130
    %v2132 = vmul.f32 %v2119, %v1874
    %v2133 = vmul.f32 %v2121, %v1874
    %v2134 = vmul.f32 %v2123, %v1874
    %v2135 = vmul.f32 %v2125, %v1874
    %v2136 = vmul.f32 %v2127, %v1874
    %v2137 = vmul.f32 %v2129, %v1874
    %v2138 = vmul.f32 %v2131, %v1874
    %v2139 = vsub.f32 %v2100, %v2132
    %v2140 = vsub.f32 %v2102, %v2133
    %v2141 = vsub.f32 %v2105, %v2134
    %v2142 = vsub.f32 %v2107, %v2135
    %v2143 = vsub.f32 %v2110, %v2136
    %v2144 = vsub.f32 %v2112, %v2137
    %v2145 = vsub.f32 %v2115, %v2138
    %v2146 = vmul.f32 %v2139, %v2139
    %v2147 = vmul.f32 %v2140, %v2140
    %v2148 = vmul.f32 %v2141, %v2141
    %v2149 = vmul.f32 %v2142, %v2142
    %v2150 = vmul.f32 %v2143, %v2143
    %v2151 = vmul.f32 %v2144, %v2144
    %v2152 = vmul.f32 %v2145, %v2145
    %2153 = vadd.xlane.f32.xlu0 %v2146
    %v2154 = vpop.xlane.xlu0 %2153
    %2155 = vadd.xlane.f32.xlu0 %v2147
    %v2156 = vpop.xlane.xlu0 %2155
    %2157 = vadd.xlane.f32.xlu0 %v2148
    %v2158 = vpop.xlane.xlu0 %2157
    %2159 = vadd.xlane.f32.xlu0 %v2149
    %v2160 = vpop.xlane.xlu0 %2159
    %2161 = vadd.xlane.f32.xlu0 %v2150
    %v2162 = vpop.xlane.xlu0 %2161
    %2163 = vadd.xlane.f32.xlu0 %v2151
    %v2164 = vpop.xlane.xlu0 %2163
    %2165 = vadd.xlane.f32.xlu0 %v2152
    %v2166 = vpop.xlane.xlu0 %2165
    %v2167 = vmul.f32 %v2154, %v1874
    %v2168 = vmul.f32 %v2156, %v1874
    %v2169 = vmul.f32 %v2158, %v1874
    %v2170 = vmul.f32 %v2160, %v1874
    %v2171 = vmul.f32 %v2162, %v1874
    %v2172 = vmul.f32 %v2164, %v1874
    %v2173 = vmul.f32 %v2166, %v1874
    %v2174 = vadd.f32 %v2167, 1e-05
    %v2175 = vadd.f32 %v2168, 1e-05
    %v2176 = vadd.f32 %v2169, 1e-05
    %v2177 = vadd.f32 %v2170, 1e-05
    %v2178 = vadd.f32 %v2171, 1e-05
    %v2179 = vadd.f32 %v2172, 1e-05
    %v2180 = vadd.f32 %v2173, 1e-05
    %v2181 = vrsqrt.pop %v2174
    %v2182 = vmul.f32 %v2181, %v2174
    %v2183 = vmul.f32 %v2182, %v2181
    %v2184 = vmul.f32 0.5, %v2183
    %v2185 = vsub.f32 1.5, %v2184
    %v2186 = vmul.f32 %v2181, %v2185
    %vm2187 = vweird.f32 %v2174
    %vm2188 = vweird.f32 %v2181
    %vm2189 = vmor %vm2187, %vm2188
    %v2190 = vsel %vm2189, %v2181, %v2186
    %v2191 = vrsqrt.pop %v2175
    %v2192 = vmul.f32 %v2191, %v2175
    %v2193 = vmul.f32 %v2192, %v2191
    %v2194 = vmul.f32 0.5, %v2193
    %v2195 = vsub.f32 1.5, %v2194
    %v2196 = vmul.f32 %v2191, %v2195
    %vm2197 = vweird.f32 %v2175
    %vm2198 = vweird.f32 %v2191
    %vm2199 = vmor %vm2197, %vm2198
    %v2200 = vsel %vm2199, %v2191, %v2196
    %v2201 = vrsqrt.pop %v2176
    %v2202 = vmul.f32 %v2201, %v2176
    %v2203 = vmul.f32 %v2202, %v2201
    %v2204 = vmul.f32 0.5, %v2203
    %v2205 = vsub.f32 1.5, %v2204
    %v2206 = vmul.f32 %v2201, %v2205
    %vm2207 = vweird.f32 %v2176
    %vm2208 = vweird.f32 %v2201
    %vm2209 = vmor %vm2207, %vm2208
    %v2210 = vsel %vm2209, %v2201, %v2206
    %v2211 = vrsqrt.pop %v2177
    %v2212 = vmul.f32 %v2211, %v2177
    %v2213 = vmul.f32 %v2212, %v2211
    %v2214 = vmul.f32 0.5, %v2213
    %v2215 = vsub.f32 1.5, %v2214
    %v2216 = vmul.f32 %v2211, %v2215
    %vm2217 = vweird.f32 %v2177
    %vm2218 = vweird.f32 %v2211
    %vm2219 = vmor %vm2217, %vm2218
    %v2220 = vsel %vm2219, %v2211, %v2216
    %v2221 = vrsqrt.pop %v2178
    %v2222 = vmul.f32 %v2221, %v2178
    %v2223 = vmul.f32 %v2222, %v2221
    %v2224 = vmul.f32 0.5, %v2223
    %v2225 = vsub.f32 1.5, %v2224
    %v2226 = vmul.f32 %v2221, %v2225
    %vm2227 = vweird.f32 %v2178
    %vm2228 = vweird.f32 %v2221
    %vm2229 = vmor %vm2227, %vm2228
    %v2230 = vsel %vm2229, %v2221, %v2226
    %v2231 = vrsqrt.pop %v2179
    %v2232 = vmul.f32 %v2231, %v2179
    %v2233 = vmul.f32 %v2232, %v2231
    %v2234 = vmul.f32 0.5, %v2233
    %v2235 = vsub.f32 1.5, %v2234
    %v2236 = vmul.f32 %v2231, %v2235
    %vm2237 = vweird.f32 %v2179
    %vm2238 = vweird.f32 %v2231
    %vm2239 = vmor %vm2237, %vm2238
    %v2240 = vsel %vm2239, %v2231, %v2236
    %v2241 = vrsqrt.pop %v2180
    %v2242 = vmul.f32 %v2241, %v2180
    %v2243 = vmul.f32 %v2242, %v2241
    %v2244 = vmul.f32 0.5, %v2243
    %v2245 = vsub.f32 1.5, %v2244
    %v2246 = vmul.f32 %v2241, %v2245
    %vm2247 = vweird.f32 %v2180
    %vm2248 = vweird.f32 %v2241
    %vm2249 = vmor %vm2247, %vm2248
    %v2250 = vsel %vm2249, %v2241, %v2246
    %v2251 = vmul.f32 %v2190, %v1538
    %v2252 = vmul.f32 %v2200, %v1538
    %v2253 = vmul.f32 %v2210, %v1538
    %v2254 = vmul.f32 %v2220, %v1538
    %v2255 = vmul.f32 %v2230, %v1538
    %v2256 = vmul.f32 %v2240, %v1538
    %v2257 = vmul.f32 %v2250, %v1538
    %v2258 = vmul.f32 %v2139, %v2251
    %v2259 = vmul.f32 %v2140, %v2252
    %v2260 = vmul.f32 %v2141, %v2253
    %v2261 = vmul.f32 %v2142, %v2254
    %v2262 = vmul.f32 %v2143, %v2255
    %v2263 = vmul.f32 %v2144, %v2256
    %v2264 = vmul.f32 %v2145, %v2257
    %v2265 = vadd.f32 %v2258, %v1539
    %v2266 = vadd.f32 %v2259, %v1539
    %v2267 = vadd.f32 %v2260, %v1539
    %v2268 = vadd.f32 %v2261, %v1539
    %v2269 = vadd.f32 %v2262, %v1539
    %v2270 = vadd.f32 %v2263, %v1539
    %v2271 = vadd.f32 %v2264, %v1539
    %2272 = vadd.xlane.f32.xlu0 %v1836
    %v2273 = vpop.xlane.xlu0 %2272
    %2274 = vadd.xlane.f32.xlu0 %v1838
    %v2275 = vpop.xlane.xlu0 %2274
    %2276 = vadd.xlane.f32.xlu0 %v1841
    %v2277 = vpop.xlane.xlu0 %2276
    %2278 = vadd.xlane.f32.xlu0 %v1843
    %v2279 = vpop.xlane.xlu0 %2278
    %2280 = vadd.xlane.f32.xlu0 %v1846
    %v2281 = vpop.xlane.xlu0 %2280
    %2282 = vadd.xlane.f32.xlu0 %v1848
    %v2283 = vpop.xlane.xlu0 %2282
    %2284 = vadd.xlane.f32.xlu0 %v1851
    %v2285 = vpop.xlane.xlu0 %2284
    %v2286 = vmul.f32 %v2273, %v1874
    %v2287 = vmul.f32 %v2275, %v1874
    %v2288 = vmul.f32 %v2277, %v1874
    %v2289 = vmul.f32 %v2279, %v1874
    %v2290 = vmul.f32 %v2281, %v1874
    %v2291 = vmul.f32 %v2283, %v1874
    %v2292 = vmul.f32 %v2285, %v1874
    %v2293 = vsub.f32 %v1836, %v2286
    %v2294 = vsub.f32 %v1838, %v2287
    %v2295 = vsub.f32 %v1841, %v2288
    %v2296 = vsub.f32 %v1843, %v2289
    %v2297 = vsub.f32 %v1846, %v2290
    %v2298 = vsub.f32 %v1848, %v2291
    %v2299 = vsub.f32 %v1851, %v2292
    %v2300 = vmul.f32 %v2293, %v2293
    %v2301 = vmul.f32 %v2294, %v2294
    %v2302 = vmul.f32 %v2295, %v2295
    %v2303 = vmul.f32 %v2296, %v2296
    %v2304 = vmul.f32 %v2297, %v2297
    %v2305 = vmul.f32 %v2298, %v2298
    %v2306 = vmul.f32 %v2299, %v2299
    %2307 = vadd.xlane.f32.xlu0 %v2300
    %v2308 = vpop.xlane.xlu0 %2307
    %2309 = vadd.xlane.f32.xlu0 %v2301
    %v2310 = vpop.xlane.xlu0 %2309
    %2311 = vadd.xlane.f32.xlu0 %v2302
    %v2312 = vpop.xlane.xlu0 %2311
    %2313 = vadd.xlane.f32.xlu0 %v2303
    %v2314 = vpop.xlane.xlu0 %2313
    %2315 = vadd.xlane.f32.xlu0 %v2304
    %v2316 = vpop.xlane.xlu0 %2315
    %2317 = vadd.xlane.f32.xlu0 %v2305
    %v2318 = vpop.xlane.xlu0 %2317
    %2319 = vadd.xlane.f32.xlu0 %v2306
    %v2320 = vpop.xlane.xlu0 %2319
    %v2321 = vmul.f32 %v2308, %v1874
    %v2322 = vmul.f32 %v2310, %v1874
    %v2323 = vmul.f32 %v2312, %v1874
    %v2324 = vmul.f32 %v2314, %v1874
    %v2325 = vmul.f32 %v2316, %v1874
    %v2326 = vmul.f32 %v2318, %v1874
    %v2327 = vmul.f32 %v2320, %v1874
    %v2328 = vadd.f32 %v2321, 1e-05
    %v2329 = vadd.f32 %v2322, 1e-05
    %v2330 = vadd.f32 %v2323, 1e-05
    %v2331 = vadd.f32 %v2324, 1e-05
    %v2332 = vadd.f32 %v2325, 1e-05
    %v2333 = vadd.f32 %v2326, 1e-05
    %v2334 = vadd.f32 %v2327, 1e-05
    %v2335 = vrsqrt.pop %v2328
    %v2336 = vmul.f32 %v2335, %v2328
    %v2337 = vmul.f32 %v2336, %v2335
    %v2338 = vmul.f32 0.5, %v2337
    %v2339 = vsub.f32 1.5, %v2338
    %v2340 = vmul.f32 %v2335, %v2339
    %vm2341 = vweird.f32 %v2328
    %vm2342 = vweird.f32 %v2335
    %vm2343 = vmor %vm2341, %vm2342
    %v2344 = vsel %vm2343, %v2335, %v2340
    %v2345 = vrsqrt.pop %v2329
    %v2346 = vmul.f32 %v2345, %v2329
    %v2347 = vmul.f32 %v2346, %v2345
    %v2348 = vmul.f32 0.5, %v2347
    %v2349 = vsub.f32 1.5, %v2348
    %v2350 = vmul.f32 %v2345, %v2349
    %vm2351 = vweird.f32 %v2329
    %vm2352 = vweird.f32 %v2345
    %vm2353 = vmor %vm2351, %vm2352
    %v2354 = vsel %vm2353, %v2345, %v2350
    %v2355 = vrsqrt.pop %v2330
    %v2356 = vmul.f32 %v2355, %v2330
    %v2357 = vmul.f32 %v2356, %v2355
    %v2358 = vmul.f32 0.5, %v2357
    %v2359 = vsub.f32 1.5, %v2358
    %v2360 = vmul.f32 %v2355, %v2359
    %vm2361 = vweird.f32 %v2330
    %vm2362 = vweird.f32 %v2355
    %vm2363 = vmor %vm2361, %vm2362
    %v2364 = vsel %vm2363, %v2355, %v2360
    %v2365 = vrsqrt.pop %v2331
    %v2366 = vmul.f32 %v2365, %v2331
    %v2367 = vmul.f32 %v2366, %v2365
    %v2368 = vmul.f32 0.5, %v2367
    %v2369 = vsub.f32 1.5, %v2368
    %v2370 = vmul.f32 %v2365, %v2369
    %vm2371 = vweird.f32 %v2331
    %vm2372 = vweird.f32 %v2365
    %vm2373 = vmor %vm2371, %vm2372
    %v2374 = vsel %vm2373, %v2365, %v2370
    %v2375 = vrsqrt.pop %v2332
    %v2376 = vmul.f32 %v2375, %v2332
    %v2377 = vmul.f32 %v2376, %v2375
    %v2378 = vmul.f32 0.5, %v2377
    %v2379 = vsub.f32 1.5, %v2378
    %v2380 = vmul.f32 %v2375, %v2379
    %vm2381 = vweird.f32 %v2332
    %vm2382 = vweird.f32 %v2375
    %vm2383 = vmor %vm2381, %vm2382
    %v2384 = vsel %vm2383, %v2375, %v2380
    %v2385 = vrsqrt.pop %v2333
    %v2386 = vmul.f32 %v2385, %v2333
    %v2387 = vmul.f32 %v2386, %v2385
    %v2388 = vmul.f32 0.5, %v2387
    %v2389 = vsub.f32 1.5, %v2388
    %v2390 = vmul.f32 %v2385, %v2389
    %vm2391 = vweird.f32 %v2333
    %vm2392 = vweird.f32 %v2385
    %vm2393 = vmor %vm2391, %vm2392
    %v2394 = vsel %vm2393, %v2385, %v2390
    %v2395 = vrsqrt.pop %v2334
    %v2396 = vmul.f32 %v2395, %v2334
    %v2397 = vmul.f32 %v2396, %v2395
    %v2398 = vmul.f32 0.5, %v2397
    %v2399 = vsub.f32 1.5, %v2398
    %v2400 = vmul.f32 %v2395, %v2399
    %vm2401 = vweird.f32 %v2334
    %vm2402 = vweird.f32 %v2395
    %vm2403 = vmor %vm2401, %vm2402
    %v2404 = vsel %vm2403, %v2395, %v2400
    %v2405 = vmul.f32 %v2344, %v1540
    %v2406 = vmul.f32 %v2354, %v1540
    %v2407 = vmul.f32 %v2364, %v1540
    %v2408 = vmul.f32 %v2374, %v1540
    %v2409 = vmul.f32 %v2384, %v1540
    %v2410 = vmul.f32 %v2394, %v1540
    %v2411 = vmul.f32 %v2404, %v1540
    %v2412 = vmul.f32 %v2293, %v2405
    %v2413 = vmul.f32 %v2294, %v2406
    %v2414 = vmul.f32 %v2295, %v2407
    %v2415 = vmul.f32 %v2296, %v2408
    %v2416 = vmul.f32 %v2297, %v2409
    %v2417 = vmul.f32 %v2298, %v2410
    %v2418 = vmul.f32 %v2299, %v2411
    %v2419 = vadd.f32 %v2412, %v1541
    %v2420 = vadd.f32 %v2413, %v1541
    %v2421 = vadd.f32 %v2414, %v1541
    %v2422 = vadd.f32 %v2415, %v1541
    %v2423 = vadd.f32 %v2416, %v1541
    %v2424 = vadd.f32 %v2417, %v1541
    %v2425 = vadd.f32 %v2418, %v1541
    %v2426 = vadd.f32 %v2265, %v2419
    %v2427 = vadd.f32 %v2266, %v2420
    %v2428 = vadd.f32 %v2267, %v2421
    %v2429 = vadd.f32 %v2268, %v2422
    %v2430 = vadd.f32 %v2269, %v2423
    %v2431 = vadd.f32 %v2270, %v2424
    %v2432 = vadd.f32 %v2271, %v2425
    %v2433 = vmax.f32 %v2426, 0.0
    %v2434 = vmax.f32 %v2427, 0.0
    %v2435 = vmax.f32 %v2428, 0.0
    %v2436 = vmax.f32 %v2429, 0.0
    %v2437 = vmax.f32 %v2430, 0.0
    %v2438 = vmax.f32 %v2431, 0.0
    %v2439 = vmax.f32 %v2432, 0.0
    %v2440 = vld [vmem:[%s13 + $0x14] ss:$0 sm:$0xff]
    %v2441 = vld [vmem:[%s13 + $0x15] ss:$0 sm:$0xff]
    %v2442 = vld [vmem:[%s13 + $0x16] ss:$0 sm:$0xff]
    %v2443 = vld [vmem:[%s13 + $0x17] ss:$0 sm:$0xff]
    %v2444 = vld [vmem:[%s13 + $0x20] ss:$0 sm:$0xff]
    %v2445 = vld [vmem:[%s13 + $0x21] ss:$0 sm:$0xff]
    %v2446 = vpack.c.bf16 %v2434, %v2433
    %v2447 = vpack.c.bf16 %v2436, %v2435
    %v2448 = vpack.c.bf16 %v2438, %v2437
    %v2449 = vpack.c.bf16 %v2439, %v2439
    %v2450 = vld [vmem:[%s6] sm:$0xf]
    %v2451 = vld [vmem:[%s6 + $0x4] sm:$0xf]
    %v2452 = vld [vmem:[%s6 + $0x8] sm:$0xf]
    %v2453 = vld [vmem:[%s6 + $0xc] sm:$0xf]
    %v2454 = vld [vmem:[%s6 + $0x10] sm:$0xf]
    %v2455 = vld [vmem:[%s6 + $0x14] sm:$0xf]
    %v2456 = vld [vmem:[%s6 + $0x18] sm:$0xf]
    %v2457 = vld [vmem:[%s6 + $0x1c] sm:$0xf]
    %v2458 = vld [vmem:[%s6 + $0x20] sm:$0xf]
    %v2459 = vld [vmem:[%s6 + $0x24] sm:$0xf]
    %v2460 = vld [vmem:[%s6 + $0x28] sm:$0xf]
    %v2461 = vld [vmem:[%s6 + $0x2c] sm:$0xf]
    %v2462 = vld [vmem:[%s6 + $0x30] sm:$0xf]
    %v2463 = vld [vmem:[%s6 + $0x34] sm:$0xf]
    %v2464 = vld [vmem:[%s6 + $0x38] sm:$0xf]
    %v2465 = vld [vmem:[%s6 + $0x3c] sm:$0xf]
    %v2482 = vunpack.c.l.b16 %v2450
    %v2483 = vunpack.c.l.b16 %v2451
    %v2484 = vunpack.c.l.b16 %v2452
    %v2485 = vunpack.c.l.b16 %v2453
    %v2486 = vunpack.c.l.b16 %v2454
    %v2487 = vunpack.c.l.b16 %v2455
    %v2488 = vunpack.c.l.b16 %v2456
    %v2489 = vunpack.c.l.b16 %v2457
    %v2490 = vunpack.c.l.b16 %v2458
    %v2491 = vunpack.c.l.b16 %v2459
    %v2492 = vunpack.c.l.b16 %v2460
    %v2493 = vunpack.c.l.b16 %v2461
    %v2494 = vunpack.c.l.b16 %v2462
    %v2495 = vunpack.c.l.b16 %v2463
    %v2496 = vunpack.c.l.b16 %v2464
    %v2497 = vunpack.c.l.b16 %v2465
    %v2498 = vpack.c.b16 %v2483, %v2482
    %v2499 = vpack.c.b16 %v2485, %v2484
    %v2500 = vpack.c.b16 %v2487, %v2486
    %v2501 = vpack.c.b16 %v2489, %v2488
    %v2502 = vpack.c.b16 %v2491, %v2490
    %v2503 = vpack.c.b16 %v2493, %v2492
    %v2504 = vpack.c.b16 %v2495, %v2494
    %v2505 = vpack.c.b16 %v2497, %v2496
    %2514 = vmatpush.bf16.msra.mxu0 %v2505
    %2515 = vmatpush.bf16.msra.mxu0 %v2504
    %2516 = vmatpush.bf16.msra.mxu0 %v2503
    %2517 = vmatpush.bf16.msra.mxu0 %v2502
    %2518 = vmatpush.bf16.msra.mxu0 %v2501
    %2519 = vmatpush.bf16.msra.mxu0 %v2500
    %2520 = vmatpush.bf16.msra.mxu0 %v2499
    %2521 = vmatpush.bf16.msra.mxu0 %v2498
    %2522 = vmatmul.bf16.gmra.mxu0 %v2446
    %v2523 = vpop.f32.mrf.mxu0
    %v2524 = vadd.f32 0.0, %v2523
    %v2525 = vpop.f32.mrf.mxu0
    %v2526 = vadd.f32 0.0, %v2525
    %2527 = vmatmul.bf16.gmra.mxu0 %v2447
    %v2528 = vpop.f32.mrf.mxu0
    %v2529 = vadd.f32 0.0, %v2528
    %v2530 = vpop.f32.mrf.mxu0
    %v2531 = vadd.f32 0.0, %v2530
    %2532 = vmatmul.bf16.gmra.mxu0 %v2448
    %v2533 = vpop.f32.mrf.mxu0
    %v2534 = vadd.f32 0.0, %v2533
    %v2535 = vpop.f32.mrf.mxu0
    %v2536 = vadd.f32 0.0, %v2535
    %2537 = vmatmul.bf16.gmra.mxu0 %v2449
    %v2538 = vpop.f32.mrf.mxu0
    %v2539 = vadd.f32 0.0, %v2538
    %v2540 = vpop.f32.mrf.mxu0
    %2541 = vdwg.mxu0
    %vm2542 = vcmask 523264
    %v2543 = vsel %vm2542, %v2524, 0.0
    %2544 = vadd.xlane.f32.xlu0 %v2543
    %v2545 = vpop.xlane.xlu0 %2544
    %v2546 = vsel %vm2542, %v2526, 0.0
    %2547 = vadd.xlane.f32.xlu0 %v2546
    %v2548 = vpop.xlane.xlu0 %2547
    %v2549 = vsel %vm2542, %v2529, 0.0
    %2550 = vadd.xlane.f32.xlu0 %v2549
    %v2551 = vpop.xlane.xlu0 %2550
    %v2552 = vsel %vm2542, %v2531, 0.0
    %2553 = vadd.xlane.f32.xlu0 %v2552
    %v2554 = vpop.xlane.xlu0 %2553
    %v2555 = vsel %vm2542, %v2534, 0.0
    %2556 = vadd.xlane.f32.xlu0 %v2555
    %v2557 = vpop.xlane.xlu0 %2556
    %v2558 = vsel %vm2542, %v2536, 0.0
    %2559 = vadd.xlane.f32.xlu0 %v2558
    %v2560 = vpop.xlane.xlu0 %2559
    %v2561 = vsel %vm2542, %v2539, 0.0
    %2562 = vadd.xlane.f32.xlu0 %v2561
    %v2563 = vpop.xlane.xlu0 %2562
    %v2564 = vrcp.pop 64.0
    %v2565 = vmul.f32 64.0, %v2564
    %v2566 = vsub.f32 1.0, %v2565
    %v2567 = vmul.f32 %v2564, %v2566
    %v2568 = vadd.f32 %v2564, %v2567
    %vm2569 = vweird.f32 %v2564
    %v2570 = vsel %vm2569, %v2564, %v2568
    %v2571 = vmul.f32 %v2545, %v2570
    %v2572 = vmul.f32 %v2548, %v2570
    %v2573 = vmul.f32 %v2551, %v2570
    %v2574 = vmul.f32 %v2554, %v2570
    %v2575 = vmul.f32 %v2557, %v2570
    %v2576 = vmul.f32 %v2560, %v2570
    %v2577 = vmul.f32 %v2563, %v2570
    %v2578 = vsub.f32 %v2524, %v2571
    %v2579 = vsub.f32 %v2526, %v2572
    %v2580 = vsub.f32 %v2529, %v2573
    %v2581 = vsub.f32 %v2531, %v2574
    %v2582 = vsub.f32 %v2534, %v2575
    %v2583 = vsub.f32 %v2536, %v2576
    %v2584 = vsub.f32 %v2539, %v2577
    %v2585 = vmul.f32 %v2578, %v2578
    %v2586 = vmul.f32 %v2579, %v2579
    %v2587 = vmul.f32 %v2580, %v2580
    %v2588 = vmul.f32 %v2581, %v2581
    %v2589 = vmul.f32 %v2582, %v2582
    %v2590 = vmul.f32 %v2583, %v2583
    %v2591 = vmul.f32 %v2584, %v2584
    %v2592 = vsel %vm2542, %v2585, 0.0
    %2593 = vadd.xlane.f32.xlu0 %v2592
    %v2594 = vpop.xlane.xlu0 %2593
    %v2595 = vsel %vm2542, %v2586, 0.0
    %2596 = vadd.xlane.f32.xlu0 %v2595
    %v2597 = vpop.xlane.xlu0 %2596
    %v2598 = vsel %vm2542, %v2587, 0.0
    %2599 = vadd.xlane.f32.xlu0 %v2598
    %v2600 = vpop.xlane.xlu0 %2599
    %v2601 = vsel %vm2542, %v2588, 0.0
    %2602 = vadd.xlane.f32.xlu0 %v2601
    %v2603 = vpop.xlane.xlu0 %2602
    %v2604 = vsel %vm2542, %v2589, 0.0
    %2605 = vadd.xlane.f32.xlu0 %v2604
    %v2606 = vpop.xlane.xlu0 %2605
    %v2607 = vsel %vm2542, %v2590, 0.0
    %2608 = vadd.xlane.f32.xlu0 %v2607
    %v2609 = vpop.xlane.xlu0 %2608
    %v2610 = vsel %vm2542, %v2591, 0.0
    %2611 = vadd.xlane.f32.xlu0 %v2610
    %v2612 = vpop.xlane.xlu0 %2611
    %v2613 = vmul.f32 %v2594, %v2570
    %v2614 = vmul.f32 %v2597, %v2570
    %v2615 = vmul.f32 %v2600, %v2570
    %v2616 = vmul.f32 %v2603, %v2570
    %v2617 = vmul.f32 %v2606, %v2570
    %v2618 = vmul.f32 %v2609, %v2570
    %v2619 = vmul.f32 %v2612, %v2570
    %v2620 = vadd.f32 %v2613, 1e-05
    %v2621 = vadd.f32 %v2614, 1e-05
    %v2622 = vadd.f32 %v2615, 1e-05
    %v2623 = vadd.f32 %v2616, 1e-05
    %v2624 = vadd.f32 %v2617, 1e-05
    %v2625 = vadd.f32 %v2618, 1e-05
    %v2626 = vadd.f32 %v2619, 1e-05
    %v2627 = vrsqrt.pop %v2620
    %v2628 = vmul.f32 %v2627, %v2620
    %v2629 = vmul.f32 %v2628, %v2627
    %v2630 = vmul.f32 0.5, %v2629
    %v2631 = vsub.f32 1.5, %v2630
    %v2632 = vmul.f32 %v2627, %v2631
    %vm2633 = vweird.f32 %v2620
    %vm2634 = vweird.f32 %v2627
    %vm2635 = vmor %vm2633, %vm2634
    %v2636 = vsel %vm2635, %v2627, %v2632
    %v2637 = vrsqrt.pop %v2621
    %v2638 = vmul.f32 %v2637, %v2621
    %v2639 = vmul.f32 %v2638, %v2637
    %v2640 = vmul.f32 0.5, %v2639
    %v2641 = vsub.f32 1.5, %v2640
    %v2642 = vmul.f32 %v2637, %v2641
    %vm2643 = vweird.f32 %v2621
    %vm2644 = vweird.f32 %v2637
    %vm2645 = vmor %vm2643, %vm2644
    %v2646 = vsel %vm2645, %v2637, %v2642
    %v2647 = vrsqrt.pop %v2622
    %v2648 = vmul.f32 %v2647, %v2622
    %v2649 = vmul.f32 %v2648, %v2647
    %v2650 = vmul.f32 0.5, %v2649
    %v2651 = vsub.f32 1.5, %v2650
    %v2652 = vmul.f32 %v2647, %v2651
    %vm2653 = vweird.f32 %v2622
    %vm2654 = vweird.f32 %v2647
    %vm2655 = vmor %vm2653, %vm2654
    %v2656 = vsel %vm2655, %v2647, %v2652
    %v2657 = vrsqrt.pop %v2623
    %v2658 = vmul.f32 %v2657, %v2623
    %v2659 = vmul.f32 %v2658, %v2657
    %v2660 = vmul.f32 0.5, %v2659
    %v2661 = vsub.f32 1.5, %v2660
    %v2662 = vmul.f32 %v2657, %v2661
    %vm2663 = vweird.f32 %v2623
    %vm2664 = vweird.f32 %v2657
    %vm2665 = vmor %vm2663, %vm2664
    %v2666 = vsel %vm2665, %v2657, %v2662
    %v2667 = vrsqrt.pop %v2624
    %v2668 = vmul.f32 %v2667, %v2624
    %v2669 = vmul.f32 %v2668, %v2667
    %v2670 = vmul.f32 0.5, %v2669
    %v2671 = vsub.f32 1.5, %v2670
    %v2672 = vmul.f32 %v2667, %v2671
    %vm2673 = vweird.f32 %v2624
    %vm2674 = vweird.f32 %v2667
    %vm2675 = vmor %vm2673, %vm2674
    %v2676 = vsel %vm2675, %v2667, %v2672
    %v2677 = vrsqrt.pop %v2625
    %v2678 = vmul.f32 %v2677, %v2625
    %v2679 = vmul.f32 %v2678, %v2677
    %v2680 = vmul.f32 0.5, %v2679
    %v2681 = vsub.f32 1.5, %v2680
    %v2682 = vmul.f32 %v2677, %v2681
    %vm2683 = vweird.f32 %v2625
    %vm2684 = vweird.f32 %v2677
    %vm2685 = vmor %vm2683, %vm2684
    %v2686 = vsel %vm2685, %v2677, %v2682
    %v2687 = vrsqrt.pop %v2626
    %v2688 = vmul.f32 %v2687, %v2626
    %v2689 = vmul.f32 %v2688, %v2687
    %v2690 = vmul.f32 0.5, %v2689
    %v2691 = vsub.f32 1.5, %v2690
    %v2692 = vmul.f32 %v2687, %v2691
    %vm2693 = vweird.f32 %v2626
    %vm2694 = vweird.f32 %v2687
    %vm2695 = vmor %vm2693, %vm2694
    %v2696 = vsel %vm2695, %v2687, %v2692
    %v2697 = vmul.f32 %v2636, %v2440
    %v2698 = vmul.f32 %v2646, %v2440
    %v2699 = vmul.f32 %v2656, %v2440
    %v2700 = vmul.f32 %v2666, %v2440
    %v2701 = vmul.f32 %v2676, %v2440
    %v2702 = vmul.f32 %v2686, %v2440
    %v2703 = vmul.f32 %v2696, %v2440
    %v2704 = vmul.f32 %v2578, %v2697
    %v2705 = vmul.f32 %v2579, %v2698
    %v2706 = vmul.f32 %v2580, %v2699
    %v2707 = vmul.f32 %v2581, %v2700
    %v2708 = vmul.f32 %v2582, %v2701
    %v2709 = vmul.f32 %v2583, %v2702
    %v2710 = vmul.f32 %v2584, %v2703
    %v2711 = vadd.f32 %v2704, %v2441
    %v2712 = vadd.f32 %v2705, %v2441
    %v2713 = vadd.f32 %v2706, %v2441
    %v2714 = vadd.f32 %v2707, %v2441
    %v2715 = vadd.f32 %v2708, %v2441
    %v2716 = vadd.f32 %v2709, %v2441
    %v2717 = vadd.f32 %v2710, %v2441
    %v2718 = vmax.f32 %v2711, 0.0
    %v2719 = vmax.f32 %v2712, 0.0
    %v2720 = vmax.f32 %v2713, 0.0
    %v2721 = vmax.f32 %v2714, 0.0
    %v2722 = vmax.f32 %v2715, 0.0
    %v2723 = vmax.f32 %v2716, 0.0
    %v2724 = vmax.f32 %v2717, 0.0
    %v2725 = vpack.c.bf16 %v2719, %v2718
    %v2726 = vpack.c.bf16 %v2721, %v2720
    %v2727 = vpack.c.bf16 %v2723, %v2722
    %v2728 = vpack.c.bf16 %v2724, %v2724
    %v2729 = vld [vmem:[%s8] sm:$0xf]
    %v2730 = vld [vmem:[%s8 + $0x4] sm:$0xf]
    %v2731 = vld [vmem:[%s8 + $0x8] sm:$0xf]
    %v2732 = vld [vmem:[%s8 + $0xc] sm:$0xf]
    %v2733 = vld [vmem:[%s8 + $0x10] sm:$0xf]
    %v2734 = vld [vmem:[%s8 + $0x14] sm:$0xf]
    %v2735 = vld [vmem:[%s8 + $0x18] sm:$0xf]
    %v2736 = vld [vmem:[%s8 + $0x1c] sm:$0xf]
    %v2745 = vunpack.c.l.b16 %v2729
    %v2746 = vunpack.c.l.b16 %v2730
    %v2747 = vunpack.c.l.b16 %v2731
    %v2748 = vunpack.c.l.b16 %v2732
    %v2749 = vunpack.c.l.b16 %v2733
    %v2750 = vunpack.c.l.b16 %v2734
    %v2751 = vunpack.c.l.b16 %v2735
    %v2752 = vunpack.c.l.b16 %v2736
    %v2753 = vpack.c.b16 %v2746, %v2745
    %v2754 = vpack.c.b16 %v2748, %v2747
    %v2755 = vpack.c.b16 %v2750, %v2749
    %v2756 = vpack.c.b16 %v2752, %v2751
    %v2762 = vsel %vm2542, %v2725, 0
    %v2765 = vsel %vm2542, %v2726, 0
    %v2768 = vsel %vm2542, %v2727, 0
    %v2771 = vsel %vm2542, %v2728, 0
    %2773 = vmatpush.bf16.msra.mxu0 0
    %2774 = vmatpush.bf16.msra.mxu0 0
    %2775 = vmatpush.bf16.msra.mxu0 0
    %2776 = vmatpush.bf16.msra.mxu0 0
    %2777 = vmatpush.bf16.msra.mxu0 %v2756
    %2778 = vmatpush.bf16.msra.mxu0 %v2755
    %2779 = vmatpush.bf16.msra.mxu0 %v2754
    %2780 = vmatpush.bf16.msra.mxu0 %v2753
    %2781 = vmatmul.bf16.gmra.mxu0 %v2762
    %v2782 = vpop.f32.mrf.mxu0
    %v2783 = vadd.f32 0.0, %v2782
    %v2784 = vpop.f32.mrf.mxu0
    %v2785 = vadd.f32 0.0, %v2784
    %2786 = vmatmul.bf16.gmra.mxu0 %v2765
    %v2787 = vpop.f32.mrf.mxu0
    %v2788 = vadd.f32 0.0, %v2787
    %v2789 = vpop.f32.mrf.mxu0
    %v2790 = vadd.f32 0.0, %v2789
    %2791 = vmatmul.bf16.gmra.mxu0 %v2768
    %v2792 = vpop.f32.mrf.mxu0
    %v2793 = vadd.f32 0.0, %v2792
    %v2794 = vpop.f32.mrf.mxu0
    %v2795 = vadd.f32 0.0, %v2794
    %2796 = vmatmul.bf16.gmra.mxu0 %v2771
    %v2797 = vpop.f32.mrf.mxu0
    %v2798 = vadd.f32 0.0, %v2797
    %v2799 = vpop.f32.mrf.mxu0
    %2800 = vdwg.mxu0
    %v2801 = vsel %vm2542, %v2783, 0.0
    %2802 = vadd.xlane.f32.xlu0 %v2801
    %v2803 = vpop.xlane.xlu0 %2802
    %v2804 = vsel %vm2542, %v2785, 0.0
    %2805 = vadd.xlane.f32.xlu0 %v2804
    %v2806 = vpop.xlane.xlu0 %2805
    %v2807 = vsel %vm2542, %v2788, 0.0
    %2808 = vadd.xlane.f32.xlu0 %v2807
    %v2809 = vpop.xlane.xlu0 %2808
    %v2810 = vsel %vm2542, %v2790, 0.0
    %2811 = vadd.xlane.f32.xlu0 %v2810
    %v2812 = vpop.xlane.xlu0 %2811
    %v2813 = vsel %vm2542, %v2793, 0.0
    %2814 = vadd.xlane.f32.xlu0 %v2813
    %v2815 = vpop.xlane.xlu0 %2814
    %v2816 = vsel %vm2542, %v2795, 0.0
    %2817 = vadd.xlane.f32.xlu0 %v2816
    %v2818 = vpop.xlane.xlu0 %2817
    %v2819 = vsel %vm2542, %v2798, 0.0
    %2820 = vadd.xlane.f32.xlu0 %v2819
    %v2821 = vpop.xlane.xlu0 %2820
    %v2822 = vmul.f32 %v2803, %v2570
    %v2823 = vmul.f32 %v2806, %v2570
    %v2824 = vmul.f32 %v2809, %v2570
    %v2825 = vmul.f32 %v2812, %v2570
    %v2826 = vmul.f32 %v2815, %v2570
    %v2827 = vmul.f32 %v2818, %v2570
    %v2828 = vmul.f32 %v2821, %v2570
    %v2829 = vsub.f32 %v2783, %v2822
    %v2830 = vsub.f32 %v2785, %v2823
    %v2831 = vsub.f32 %v2788, %v2824
    %v2832 = vsub.f32 %v2790, %v2825
    %v2833 = vsub.f32 %v2793, %v2826
    %v2834 = vsub.f32 %v2795, %v2827
    %v2835 = vsub.f32 %v2798, %v2828
    %v2836 = vmul.f32 %v2829, %v2829
    %v2837 = vmul.f32 %v2830, %v2830
    %v2838 = vmul.f32 %v2831, %v2831
    %v2839 = vmul.f32 %v2832, %v2832
    %v2840 = vmul.f32 %v2833, %v2833
    %v2841 = vmul.f32 %v2834, %v2834
    %v2842 = vmul.f32 %v2835, %v2835
    %v2843 = vsel %vm2542, %v2836, 0.0
    %2844 = vadd.xlane.f32.xlu0 %v2843
    %v2845 = vpop.xlane.xlu0 %2844
    %v2846 = vsel %vm2542, %v2837, 0.0
    %2847 = vadd.xlane.f32.xlu0 %v2846
    %v2848 = vpop.xlane.xlu0 %2847
    %v2849 = vsel %vm2542, %v2838, 0.0
    %2850 = vadd.xlane.f32.xlu0 %v2849
    %v2851 = vpop.xlane.xlu0 %2850
    %v2852 = vsel %vm2542, %v2839, 0.0
    %2853 = vadd.xlane.f32.xlu0 %v2852
    %v2854 = vpop.xlane.xlu0 %2853
    %v2855 = vsel %vm2542, %v2840, 0.0
    %2856 = vadd.xlane.f32.xlu0 %v2855
    %v2857 = vpop.xlane.xlu0 %2856
    %v2858 = vsel %vm2542, %v2841, 0.0
    %2859 = vadd.xlane.f32.xlu0 %v2858
    %v2860 = vpop.xlane.xlu0 %2859
    %v2861 = vsel %vm2542, %v2842, 0.0
    %2862 = vadd.xlane.f32.xlu0 %v2861
    %v2863 = vpop.xlane.xlu0 %2862
    %v2864 = vmul.f32 %v2845, %v2570
    %v2865 = vmul.f32 %v2848, %v2570
    %v2866 = vmul.f32 %v2851, %v2570
    %v2867 = vmul.f32 %v2854, %v2570
    %v2868 = vmul.f32 %v2857, %v2570
    %v2869 = vmul.f32 %v2860, %v2570
    %v2870 = vmul.f32 %v2863, %v2570
    %v2871 = vadd.f32 %v2864, 1e-05
    %v2872 = vadd.f32 %v2865, 1e-05
    %v2873 = vadd.f32 %v2866, 1e-05
    %v2874 = vadd.f32 %v2867, 1e-05
    %v2875 = vadd.f32 %v2868, 1e-05
    %v2876 = vadd.f32 %v2869, 1e-05
    %v2877 = vadd.f32 %v2870, 1e-05
    %v2878 = vrsqrt.pop %v2871
    %v2879 = vmul.f32 %v2878, %v2871
    %v2880 = vmul.f32 %v2879, %v2878
    %v2881 = vmul.f32 0.5, %v2880
    %v2882 = vsub.f32 1.5, %v2881
    %v2883 = vmul.f32 %v2878, %v2882
    %vm2884 = vweird.f32 %v2871
    %vm2885 = vweird.f32 %v2878
    %vm2886 = vmor %vm2884, %vm2885
    %v2887 = vsel %vm2886, %v2878, %v2883
    %v2888 = vrsqrt.pop %v2872
    %v2889 = vmul.f32 %v2888, %v2872
    %v2890 = vmul.f32 %v2889, %v2888
    %v2891 = vmul.f32 0.5, %v2890
    %v2892 = vsub.f32 1.5, %v2891
    %v2893 = vmul.f32 %v2888, %v2892
    %vm2894 = vweird.f32 %v2872
    %vm2895 = vweird.f32 %v2888
    %vm2896 = vmor %vm2894, %vm2895
    %v2897 = vsel %vm2896, %v2888, %v2893
    %v2898 = vrsqrt.pop %v2873
    %v2899 = vmul.f32 %v2898, %v2873
    %v2900 = vmul.f32 %v2899, %v2898
    %v2901 = vmul.f32 0.5, %v2900
    %v2902 = vsub.f32 1.5, %v2901
    %v2903 = vmul.f32 %v2898, %v2902
    %vm2904 = vweird.f32 %v2873
    %vm2905 = vweird.f32 %v2898
    %vm2906 = vmor %vm2904, %vm2905
    %v2907 = vsel %vm2906, %v2898, %v2903
    %v2908 = vrsqrt.pop %v2874
    %v2909 = vmul.f32 %v2908, %v2874
    %v2910 = vmul.f32 %v2909, %v2908
    %v2911 = vmul.f32 0.5, %v2910
    %v2912 = vsub.f32 1.5, %v2911
    %v2913 = vmul.f32 %v2908, %v2912
    %vm2914 = vweird.f32 %v2874
    %vm2915 = vweird.f32 %v2908
    %vm2916 = vmor %vm2914, %vm2915
    %v2917 = vsel %vm2916, %v2908, %v2913
    %v2918 = vrsqrt.pop %v2875
    %v2919 = vmul.f32 %v2918, %v2875
    %v2920 = vmul.f32 %v2919, %v2918
    %v2921 = vmul.f32 0.5, %v2920
    %v2922 = vsub.f32 1.5, %v2921
    %v2923 = vmul.f32 %v2918, %v2922
    %vm2924 = vweird.f32 %v2875
    %vm2925 = vweird.f32 %v2918
    %vm2926 = vmor %vm2924, %vm2925
    %v2927 = vsel %vm2926, %v2918, %v2923
    %v2928 = vrsqrt.pop %v2876
    %v2929 = vmul.f32 %v2928, %v2876
    %v2930 = vmul.f32 %v2929, %v2928
    %v2931 = vmul.f32 0.5, %v2930
    %v2932 = vsub.f32 1.5, %v2931
    %v2933 = vmul.f32 %v2928, %v2932
    %vm2934 = vweird.f32 %v2876
    %vm2935 = vweird.f32 %v2928
    %vm2936 = vmor %vm2934, %vm2935
    %v2937 = vsel %vm2936, %v2928, %v2933
    %v2938 = vrsqrt.pop %v2877
    %v2939 = vmul.f32 %v2938, %v2877
    %v2940 = vmul.f32 %v2939, %v2938
    %v2941 = vmul.f32 0.5, %v2940
    %v2942 = vsub.f32 1.5, %v2941
    %v2943 = vmul.f32 %v2938, %v2942
    %vm2944 = vweird.f32 %v2877
    %vm2945 = vweird.f32 %v2938
    %vm2946 = vmor %vm2944, %vm2945
    %v2947 = vsel %vm2946, %v2938, %v2943
    %v2948 = vmul.f32 %v2887, %v2442
    %v2949 = vmul.f32 %v2897, %v2442
    %v2950 = vmul.f32 %v2907, %v2442
    %v2951 = vmul.f32 %v2917, %v2442
    %v2952 = vmul.f32 %v2927, %v2442
    %v2953 = vmul.f32 %v2937, %v2442
    %v2954 = vmul.f32 %v2947, %v2442
    %v2955 = vmul.f32 %v2829, %v2948
    %v2956 = vmul.f32 %v2830, %v2949
    %v2957 = vmul.f32 %v2831, %v2950
    %v2958 = vmul.f32 %v2832, %v2951
    %v2959 = vmul.f32 %v2833, %v2952
    %v2960 = vmul.f32 %v2834, %v2953
    %v2961 = vmul.f32 %v2835, %v2954
    %v2962 = vadd.f32 %v2955, %v2443
    %v2963 = vadd.f32 %v2956, %v2443
    %v2964 = vadd.f32 %v2957, %v2443
    %v2965 = vadd.f32 %v2958, %v2443
    %v2966 = vadd.f32 %v2959, %v2443
    %v2967 = vadd.f32 %v2960, %v2443
    %v2968 = vadd.f32 %v2961, %v2443
    %v2969 = vld [vmem:[%s7] sm:$0xf]
    %v2970 = vld [vmem:[%s7 + $0x4] sm:$0xf]
    %v2971 = vld [vmem:[%s7 + $0x8] sm:$0xf]
    %v2972 = vld [vmem:[%s7 + $0xc] sm:$0xf]
    %v2973 = vld [vmem:[%s7 + $0x10] sm:$0xf]
    %v2974 = vld [vmem:[%s7 + $0x14] sm:$0xf]
    %v2975 = vld [vmem:[%s7 + $0x18] sm:$0xf]
    %v2976 = vld [vmem:[%s7 + $0x1c] sm:$0xf]
    %v2977 = vld [vmem:[%s7 + $0x20] sm:$0xf]
    %v2978 = vld [vmem:[%s7 + $0x24] sm:$0xf]
    %v2979 = vld [vmem:[%s7 + $0x28] sm:$0xf]
    %v2980 = vld [vmem:[%s7 + $0x2c] sm:$0xf]
    %v2981 = vld [vmem:[%s7 + $0x30] sm:$0xf]
    %v2982 = vld [vmem:[%s7 + $0x34] sm:$0xf]
    %v2983 = vld [vmem:[%s7 + $0x38] sm:$0xf]
    %v2984 = vld [vmem:[%s7 + $0x3c] sm:$0xf]
    %v3001 = vunpack.c.l.b16 %v2969
    %v3002 = vunpack.c.l.b16 %v2970
    %v3003 = vunpack.c.l.b16 %v2971
    %v3004 = vunpack.c.l.b16 %v2972
    %v3005 = vunpack.c.l.b16 %v2973
    %v3006 = vunpack.c.l.b16 %v2974
    %v3007 = vunpack.c.l.b16 %v2975
    %v3008 = vunpack.c.l.b16 %v2976
    %v3009 = vunpack.c.l.b16 %v2977
    %v3010 = vunpack.c.l.b16 %v2978
    %v3011 = vunpack.c.l.b16 %v2979
    %v3012 = vunpack.c.l.b16 %v2980
    %v3013 = vunpack.c.l.b16 %v2981
    %v3014 = vunpack.c.l.b16 %v2982
    %v3015 = vunpack.c.l.b16 %v2983
    %v3016 = vunpack.c.l.b16 %v2984
    %v3017 = vpack.c.b16 %v3002, %v3001
    %v3018 = vpack.c.b16 %v3004, %v3003
    %v3019 = vpack.c.b16 %v3006, %v3005
    %v3020 = vpack.c.b16 %v3008, %v3007
    %v3021 = vpack.c.b16 %v3010, %v3009
    %v3022 = vpack.c.b16 %v3012, %v3011
    %v3023 = vpack.c.b16 %v3014, %v3013
    %v3024 = vpack.c.b16 %v3016, %v3015
    %3033 = vmatpush.bf16.msra.mxu0 %v3024
    %3034 = vmatpush.bf16.msra.mxu0 %v3023
    %3035 = vmatpush.bf16.msra.mxu0 %v3022
    %3036 = vmatpush.bf16.msra.mxu0 %v3021
    %3037 = vmatpush.bf16.msra.mxu0 %v3020
    %3038 = vmatpush.bf16.msra.mxu0 %v3019
    %3039 = vmatpush.bf16.msra.mxu0 %v3018
    %3040 = vmatpush.bf16.msra.mxu0 %v3017
    %3041 = vmatmul.bf16.gmra.mxu0 %v2446
    %v3042 = vpop.f32.mrf.mxu0
    %v3043 = vadd.f32 0.0, %v3042
    %v3044 = vpop.f32.mrf.mxu0
    %v3045 = vadd.f32 0.0, %v3044
    %3046 = vmatmul.bf16.gmra.mxu0 %v2447
    %v3047 = vpop.f32.mrf.mxu0
    %v3048 = vadd.f32 0.0, %v3047
    %v3049 = vpop.f32.mrf.mxu0
    %v3050 = vadd.f32 0.0, %v3049
    %3051 = vmatmul.bf16.gmra.mxu0 %v2448
    %v3052 = vpop.f32.mrf.mxu0
    %v3053 = vadd.f32 0.0, %v3052
    %v3054 = vpop.f32.mrf.mxu0
    %v3055 = vadd.f32 0.0, %v3054
    %3056 = vmatmul.bf16.gmra.mxu0 %v2449
    %v3057 = vpop.f32.mrf.mxu0
    %v3058 = vadd.f32 0.0, %v3057
    %v3059 = vpop.f32.mrf.mxu0
    %3060 = vdwg.mxu0
    %v3061 = vsel %vm2542, %v3043, 0.0
    %3062 = vadd.xlane.f32.xlu0 %v3061
    %v3063 = vpop.xlane.xlu0 %3062
    %v3064 = vsel %vm2542, %v3045, 0.0
    %3065 = vadd.xlane.f32.xlu0 %v3064
    %v3066 = vpop.xlane.xlu0 %3065
    %v3067 = vsel %vm2542, %v3048, 0.0
    %3068 = vadd.xlane.f32.xlu0 %v3067
    %v3069 = vpop.xlane.xlu0 %3068
    %v3070 = vsel %vm2542, %v3050, 0.0
    %3071 = vadd.xlane.f32.xlu0 %v3070
    %v3072 = vpop.xlane.xlu0 %3071
    %v3073 = vsel %vm2542, %v3053, 0.0
    %3074 = vadd.xlane.f32.xlu0 %v3073
    %v3075 = vpop.xlane.xlu0 %3074
    %v3076 = vsel %vm2542, %v3055, 0.0
    %3077 = vadd.xlane.f32.xlu0 %v3076
    %v3078 = vpop.xlane.xlu0 %3077
    %v3079 = vsel %vm2542, %v3058, 0.0
    %3080 = vadd.xlane.f32.xlu0 %v3079
    %v3081 = vpop.xlane.xlu0 %3080
    %v3082 = vmul.f32 %v3063, %v2570
    %v3083 = vmul.f32 %v3066, %v2570
    %v3084 = vmul.f32 %v3069, %v2570
    %v3085 = vmul.f32 %v3072, %v2570
    %v3086 = vmul.f32 %v3075, %v2570
    %v3087 = vmul.f32 %v3078, %v2570
    %v3088 = vmul.f32 %v3081, %v2570
    %v3089 = vsub.f32 %v3043, %v3082
    %v3090 = vsub.f32 %v3045, %v3083
    %v3091 = vsub.f32 %v3048, %v3084
    %v3092 = vsub.f32 %v3050, %v3085
    %v3093 = vsub.f32 %v3053, %v3086
    %v3094 = vsub.f32 %v3055, %v3087
    %v3095 = vsub.f32 %v3058, %v3088
    %v3096 = vmul.f32 %v3089, %v3089
    %v3097 = vmul.f32 %v3090, %v3090
    %v3098 = vmul.f32 %v3091, %v3091
    %v3099 = vmul.f32 %v3092, %v3092
    %v3100 = vmul.f32 %v3093, %v3093
    %v3101 = vmul.f32 %v3094, %v3094
    %v3102 = vmul.f32 %v3095, %v3095
    %v3103 = vsel %vm2542, %v3096, 0.0
    %3104 = vadd.xlane.f32.xlu0 %v3103
    %v3105 = vpop.xlane.xlu0 %3104
    %v3106 = vsel %vm2542, %v3097, 0.0
    %3107 = vadd.xlane.f32.xlu0 %v3106
    %v3108 = vpop.xlane.xlu0 %3107
    %v3109 = vsel %vm2542, %v3098, 0.0
    %3110 = vadd.xlane.f32.xlu0 %v3109
    %v3111 = vpop.xlane.xlu0 %3110
    %v3112 = vsel %vm2542, %v3099, 0.0
    %3113 = vadd.xlane.f32.xlu0 %v3112
    %v3114 = vpop.xlane.xlu0 %3113
    %v3115 = vsel %vm2542, %v3100, 0.0
    %3116 = vadd.xlane.f32.xlu0 %v3115
    %v3117 = vpop.xlane.xlu0 %3116
    %v3118 = vsel %vm2542, %v3101, 0.0
    %3119 = vadd.xlane.f32.xlu0 %v3118
    %v3120 = vpop.xlane.xlu0 %3119
    %v3121 = vsel %vm2542, %v3102, 0.0
    %3122 = vadd.xlane.f32.xlu0 %v3121
    %v3123 = vpop.xlane.xlu0 %3122
    %v3124 = vmul.f32 %v3105, %v2570
    %v3125 = vmul.f32 %v3108, %v2570
    %v3126 = vmul.f32 %v3111, %v2570
    %v3127 = vmul.f32 %v3114, %v2570
    %v3128 = vmul.f32 %v3117, %v2570
    %v3129 = vmul.f32 %v3120, %v2570
    %v3130 = vmul.f32 %v3123, %v2570
    %v3131 = vadd.f32 %v3124, 1e-05
    %v3132 = vadd.f32 %v3125, 1e-05
    %v3133 = vadd.f32 %v3126, 1e-05
    %v3134 = vadd.f32 %v3127, 1e-05
    %v3135 = vadd.f32 %v3128, 1e-05
    %v3136 = vadd.f32 %v3129, 1e-05
    %v3137 = vadd.f32 %v3130, 1e-05
    %v3138 = vrsqrt.pop %v3131
    %v3139 = vmul.f32 %v3138, %v3131
    %v3140 = vmul.f32 %v3139, %v3138
    %v3141 = vmul.f32 0.5, %v3140
    %v3142 = vsub.f32 1.5, %v3141
    %v3143 = vmul.f32 %v3138, %v3142
    %vm3144 = vweird.f32 %v3131
    %vm3145 = vweird.f32 %v3138
    %vm3146 = vmor %vm3144, %vm3145
    %v3147 = vsel %vm3146, %v3138, %v3143
    %v3148 = vrsqrt.pop %v3132
    %v3149 = vmul.f32 %v3148, %v3132
    %v3150 = vmul.f32 %v3149, %v3148
    %v3151 = vmul.f32 0.5, %v3150
    %v3152 = vsub.f32 1.5, %v3151
    %v3153 = vmul.f32 %v3148, %v3152
    %vm3154 = vweird.f32 %v3132
    %vm3155 = vweird.f32 %v3148
    %vm3156 = vmor %vm3154, %vm3155
    %v3157 = vsel %vm3156, %v3148, %v3153
    %v3158 = vrsqrt.pop %v3133
    %v3159 = vmul.f32 %v3158, %v3133
    %v3160 = vmul.f32 %v3159, %v3158
    %v3161 = vmul.f32 0.5, %v3160
    %v3162 = vsub.f32 1.5, %v3161
    %v3163 = vmul.f32 %v3158, %v3162
    %vm3164 = vweird.f32 %v3133
    %vm3165 = vweird.f32 %v3158
    %vm3166 = vmor %vm3164, %vm3165
    %v3167 = vsel %vm3166, %v3158, %v3163
    %v3168 = vrsqrt.pop %v3134
    %v3169 = vmul.f32 %v3168, %v3134
    %v3170 = vmul.f32 %v3169, %v3168
    %v3171 = vmul.f32 0.5, %v3170
    %v3172 = vsub.f32 1.5, %v3171
    %v3173 = vmul.f32 %v3168, %v3172
    %vm3174 = vweird.f32 %v3134
    %vm3175 = vweird.f32 %v3168
    %vm3176 = vmor %vm3174, %vm3175
    %v3177 = vsel %vm3176, %v3168, %v3173
    %v3178 = vrsqrt.pop %v3135
    %v3179 = vmul.f32 %v3178, %v3135
    %v3180 = vmul.f32 %v3179, %v3178
    %v3181 = vmul.f32 0.5, %v3180
    %v3182 = vsub.f32 1.5, %v3181
    %v3183 = vmul.f32 %v3178, %v3182
    %vm3184 = vweird.f32 %v3135
    %vm3185 = vweird.f32 %v3178
    %vm3186 = vmor %vm3184, %vm3185
    %v3187 = vsel %vm3186, %v3178, %v3183
    %v3188 = vrsqrt.pop %v3136
    %v3189 = vmul.f32 %v3188, %v3136
    %v3190 = vmul.f32 %v3189, %v3188
    %v3191 = vmul.f32 0.5, %v3190
    %v3192 = vsub.f32 1.5, %v3191
    %v3193 = vmul.f32 %v3188, %v3192
    %vm3194 = vweird.f32 %v3136
    %vm3195 = vweird.f32 %v3188
    %vm3196 = vmor %vm3194, %vm3195
    %v3197 = vsel %vm3196, %v3188, %v3193
    %v3198 = vrsqrt.pop %v3137
    %v3199 = vmul.f32 %v3198, %v3137
    %v3200 = vmul.f32 %v3199, %v3198
    %v3201 = vmul.f32 0.5, %v3200
    %v3202 = vsub.f32 1.5, %v3201
    %v3203 = vmul.f32 %v3198, %v3202
    %vm3204 = vweird.f32 %v3137
    %vm3205 = vweird.f32 %v3198
    %vm3206 = vmor %vm3204, %vm3205
    %v3207 = vsel %vm3206, %v3198, %v3203
    %v3208 = vmul.f32 %v3147, %v2444
    %v3209 = vmul.f32 %v3157, %v2444
    %v3210 = vmul.f32 %v3167, %v2444
    %v3211 = vmul.f32 %v3177, %v2444
    %v3212 = vmul.f32 %v3187, %v2444
    %v3213 = vmul.f32 %v3197, %v2444
    %v3214 = vmul.f32 %v3207, %v2444
    %v3215 = vmul.f32 %v3089, %v3208
    %v3216 = vmul.f32 %v3090, %v3209
    %v3217 = vmul.f32 %v3091, %v3210
    %v3218 = vmul.f32 %v3092, %v3211
    %v3219 = vmul.f32 %v3093, %v3212
    %v3220 = vmul.f32 %v3094, %v3213
    %v3221 = vmul.f32 %v3095, %v3214
    %v3222 = vadd.f32 %v3215, %v2445
    %v3223 = vadd.f32 %v3216, %v2445
    %v3224 = vadd.f32 %v3217, %v2445
    %v3225 = vadd.f32 %v3218, %v2445
    %v3226 = vadd.f32 %v3219, %v2445
    %v3227 = vadd.f32 %v3220, %v2445
    %v3228 = vadd.f32 %v3221, %v2445
    %v3229 = vadd.f32 %v2962, %v3222
    %v3230 = vadd.f32 %v2963, %v3223
    %v3231 = vadd.f32 %v2964, %v3224
    %v3232 = vadd.f32 %v2965, %v3225
    %v3233 = vadd.f32 %v2966, %v3226
    %v3234 = vadd.f32 %v2967, %v3227
    %v3235 = vadd.f32 %v2968, %v3228
    %v3236 = vmax.f32 %v3229, 0.0
    %v3237 = vmax.f32 %v3230, 0.0
    %v3238 = vmax.f32 %v3231, 0.0
    %v3239 = vmax.f32 %v3232, 0.0
    %v3240 = vmax.f32 %v3233, 0.0
    %v3241 = vmax.f32 %v3234, 0.0
    %v3242 = vmax.f32 %v3235, 0.0
    %v3243 = vld [vmem:[%s13 + $0x22] ss:$0 sm:$0xff]
    %v3244 = vld [vmem:[%s13 + $0x23] ss:$0 sm:$0xff]
    %v3245 = vld [vmem:[%s13 + $0x24] ss:$0 sm:$0xff]
    %v3246 = vld [vmem:[%s13 + $0x25] ss:$0 sm:$0xff]
    %v3247 = vld [vmem:[%s13 + $0x26] ss:$0 sm:$0xff]
    %v3248 = vld [vmem:[%s13 + $0x27] ss:$0 sm:$0xff]
    %v3249 = vpack.c.bf16 %v3237, %v3236
    %v3250 = vpack.c.bf16 %v3239, %v3238
    %v3251 = vpack.c.bf16 %v3241, %v3240
    %v3252 = vpack.c.bf16 %v3242, %v3242
    %v3253 = vld [vmem:[%s9] sm:$0xf]
    %v3254 = vld [vmem:[%s9 + $0x4] sm:$0xf]
    %v3255 = vld [vmem:[%s9 + $0x8] sm:$0xf]
    %v3256 = vld [vmem:[%s9 + $0xc] sm:$0xf]
    %v3257 = vld [vmem:[%s9 + $0x10] sm:$0xf]
    %v3258 = vld [vmem:[%s9 + $0x14] sm:$0xf]
    %v3259 = vld [vmem:[%s9 + $0x18] sm:$0xf]
    %v3260 = vld [vmem:[%s9 + $0x1c] sm:$0xf]
    %v3269 = vunpack.c.l.b16 %v3253
    %v3270 = vunpack.c.l.b16 %v3254
    %v3271 = vunpack.c.l.b16 %v3255
    %v3272 = vunpack.c.l.b16 %v3256
    %v3273 = vunpack.c.l.b16 %v3257
    %v3274 = vunpack.c.l.b16 %v3258
    %v3275 = vunpack.c.l.b16 %v3259
    %v3276 = vunpack.c.l.b16 %v3260
    %v3277 = vpack.c.b16 %v3270, %v3269
    %v3278 = vpack.c.b16 %v3272, %v3271
    %v3279 = vpack.c.b16 %v3274, %v3273
    %v3280 = vpack.c.b16 %v3276, %v3275
    %v3286 = vsel %vm2542, %v3249, 0
    %v3289 = vsel %vm2542, %v3250, 0
    %v3292 = vsel %vm2542, %v3251, 0
    %v3295 = vsel %vm2542, %v3252, 0
    %3297 = vmatpush.bf16.msra.mxu0 0
    %3298 = vmatpush.bf16.msra.mxu0 0
    %3299 = vmatpush.bf16.msra.mxu0 0
    %3300 = vmatpush.bf16.msra.mxu0 0
    %3301 = vmatpush.bf16.msra.mxu0 %v3280
    %3302 = vmatpush.bf16.msra.mxu0 %v3279
    %3303 = vmatpush.bf16.msra.mxu0 %v3278
    %3304 = vmatpush.bf16.msra.mxu0 %v3277
    %3305 = vmatmul.bf16.gmra.mxu0 %v3286
    %v3306 = vpop.f32.mrf.mxu0
    %v3307 = vadd.f32 0.0, %v3306
    %v3308 = vpop.f32.mrf.mxu0
    %v3309 = vadd.f32 0.0, %v3308
    %3310 = vmatmul.bf16.gmra.mxu0 %v3289
    %v3311 = vpop.f32.mrf.mxu0
    %v3312 = vadd.f32 0.0, %v3311
    %v3313 = vpop.f32.mrf.mxu0
    %v3314 = vadd.f32 0.0, %v3313
    %3315 = vmatmul.bf16.gmra.mxu0 %v3292
    %v3316 = vpop.f32.mrf.mxu0
    %v3317 = vadd.f32 0.0, %v3316
    %v3318 = vpop.f32.mrf.mxu0
    %v3319 = vadd.f32 0.0, %v3318
    %3320 = vmatmul.bf16.gmra.mxu0 %v3295
    %v3321 = vpop.f32.mrf.mxu0
    %v3322 = vadd.f32 0.0, %v3321
    %v3323 = vpop.f32.mrf.mxu0
    %3324 = vdwg.mxu0
    %v3325 = vsel %vm133, %v3307, 0.0
    %3326 = vadd.xlane.f32.xlu0 %v3325
    %v3327 = vpop.xlane.xlu0 %3326
    %v3328 = vsel %vm133, %v3309, 0.0
    %3329 = vadd.xlane.f32.xlu0 %v3328
    %v3330 = vpop.xlane.xlu0 %3329
    %v3331 = vsel %vm133, %v3312, 0.0
    %3332 = vadd.xlane.f32.xlu0 %v3331
    %v3333 = vpop.xlane.xlu0 %3332
    %v3334 = vsel %vm133, %v3314, 0.0
    %3335 = vadd.xlane.f32.xlu0 %v3334
    %v3336 = vpop.xlane.xlu0 %3335
    %v3337 = vsel %vm133, %v3317, 0.0
    %3338 = vadd.xlane.f32.xlu0 %v3337
    %v3339 = vpop.xlane.xlu0 %3338
    %v3340 = vsel %vm133, %v3319, 0.0
    %3341 = vadd.xlane.f32.xlu0 %v3340
    %v3342 = vpop.xlane.xlu0 %3341
    %v3343 = vsel %vm133, %v3322, 0.0
    %3344 = vadd.xlane.f32.xlu0 %v3343
    %v3345 = vpop.xlane.xlu0 %3344
    %v3346 = vrcp.pop 32.0
    %v3347 = vmul.f32 32.0, %v3346
    %v3348 = vsub.f32 1.0, %v3347
    %v3349 = vmul.f32 %v3346, %v3348
    %v3350 = vadd.f32 %v3346, %v3349
    %vm3351 = vweird.f32 %v3346
    %v3352 = vsel %vm3351, %v3346, %v3350
    %v3353 = vmul.f32 %v3327, %v3352
    %v3354 = vmul.f32 %v3330, %v3352
    %v3355 = vmul.f32 %v3333, %v3352
    %v3356 = vmul.f32 %v3336, %v3352
    %v3357 = vmul.f32 %v3339, %v3352
    %v3358 = vmul.f32 %v3342, %v3352
    %v3359 = vmul.f32 %v3345, %v3352
    %v3360 = vsub.f32 %v3307, %v3353
    %v3361 = vsub.f32 %v3309, %v3354
    %v3362 = vsub.f32 %v3312, %v3355
    %v3363 = vsub.f32 %v3314, %v3356
    %v3364 = vsub.f32 %v3317, %v3357
    %v3365 = vsub.f32 %v3319, %v3358
    %v3366 = vsub.f32 %v3322, %v3359
    %v3367 = vmul.f32 %v3360, %v3360
    %v3368 = vmul.f32 %v3361, %v3361
    %v3369 = vmul.f32 %v3362, %v3362
    %v3370 = vmul.f32 %v3363, %v3363
    %v3371 = vmul.f32 %v3364, %v3364
    %v3372 = vmul.f32 %v3365, %v3365
    %v3373 = vmul.f32 %v3366, %v3366
    %v3374 = vsel %vm133, %v3367, 0.0
    %3375 = vadd.xlane.f32.xlu0 %v3374
    %v3376 = vpop.xlane.xlu0 %3375
    %v3377 = vsel %vm133, %v3368, 0.0
    %3378 = vadd.xlane.f32.xlu0 %v3377
    %v3379 = vpop.xlane.xlu0 %3378
    %v3380 = vsel %vm133, %v3369, 0.0
    %3381 = vadd.xlane.f32.xlu0 %v3380
    %v3382 = vpop.xlane.xlu0 %3381
    %v3383 = vsel %vm133, %v3370, 0.0
    %3384 = vadd.xlane.f32.xlu0 %v3383
    %v3385 = vpop.xlane.xlu0 %3384
    %v3386 = vsel %vm133, %v3371, 0.0
    %3387 = vadd.xlane.f32.xlu0 %v3386
    %v3388 = vpop.xlane.xlu0 %3387
    %v3389 = vsel %vm133, %v3372, 0.0
    %3390 = vadd.xlane.f32.xlu0 %v3389
    %v3391 = vpop.xlane.xlu0 %3390
    %v3392 = vsel %vm133, %v3373, 0.0
    %3393 = vadd.xlane.f32.xlu0 %v3392
    %v3394 = vpop.xlane.xlu0 %3393
    %v3395 = vmul.f32 %v3376, %v3352
    %v3396 = vmul.f32 %v3379, %v3352
    %v3397 = vmul.f32 %v3382, %v3352
    %v3398 = vmul.f32 %v3385, %v3352
    %v3399 = vmul.f32 %v3388, %v3352
    %v3400 = vmul.f32 %v3391, %v3352
    %v3401 = vmul.f32 %v3394, %v3352
    %v3402 = vadd.f32 %v3395, 1e-05
    %v3403 = vadd.f32 %v3396, 1e-05
    %v3404 = vadd.f32 %v3397, 1e-05
    %v3405 = vadd.f32 %v3398, 1e-05
    %v3406 = vadd.f32 %v3399, 1e-05
    %v3407 = vadd.f32 %v3400, 1e-05
    %v3408 = vadd.f32 %v3401, 1e-05
    %v3409 = vrsqrt.pop %v3402
    %v3410 = vmul.f32 %v3409, %v3402
    %v3411 = vmul.f32 %v3410, %v3409
    %v3412 = vmul.f32 0.5, %v3411
    %v3413 = vsub.f32 1.5, %v3412
    %v3414 = vmul.f32 %v3409, %v3413
    %vm3415 = vweird.f32 %v3402
    %vm3416 = vweird.f32 %v3409
    %vm3417 = vmor %vm3415, %vm3416
    %v3418 = vsel %vm3417, %v3409, %v3414
    %v3419 = vrsqrt.pop %v3403
    %v3420 = vmul.f32 %v3419, %v3403
    %v3421 = vmul.f32 %v3420, %v3419
    %v3422 = vmul.f32 0.5, %v3421
    %v3423 = vsub.f32 1.5, %v3422
    %v3424 = vmul.f32 %v3419, %v3423
    %vm3425 = vweird.f32 %v3403
    %vm3426 = vweird.f32 %v3419
    %vm3427 = vmor %vm3425, %vm3426
    %v3428 = vsel %vm3427, %v3419, %v3424
    %v3429 = vrsqrt.pop %v3404
    %v3430 = vmul.f32 %v3429, %v3404
    %v3431 = vmul.f32 %v3430, %v3429
    %v3432 = vmul.f32 0.5, %v3431
    %v3433 = vsub.f32 1.5, %v3432
    %v3434 = vmul.f32 %v3429, %v3433
    %vm3435 = vweird.f32 %v3404
    %vm3436 = vweird.f32 %v3429
    %vm3437 = vmor %vm3435, %vm3436
    %v3438 = vsel %vm3437, %v3429, %v3434
    %v3439 = vrsqrt.pop %v3405
    %v3440 = vmul.f32 %v3439, %v3405
    %v3441 = vmul.f32 %v3440, %v3439
    %v3442 = vmul.f32 0.5, %v3441
    %v3443 = vsub.f32 1.5, %v3442
    %v3444 = vmul.f32 %v3439, %v3443
    %vm3445 = vweird.f32 %v3405
    %vm3446 = vweird.f32 %v3439
    %vm3447 = vmor %vm3445, %vm3446
    %v3448 = vsel %vm3447, %v3439, %v3444
    %v3449 = vrsqrt.pop %v3406
    %v3450 = vmul.f32 %v3449, %v3406
    %v3451 = vmul.f32 %v3450, %v3449
    %v3452 = vmul.f32 0.5, %v3451
    %v3453 = vsub.f32 1.5, %v3452
    %v3454 = vmul.f32 %v3449, %v3453
    %vm3455 = vweird.f32 %v3406
    %vm3456 = vweird.f32 %v3449
    %vm3457 = vmor %vm3455, %vm3456
    %v3458 = vsel %vm3457, %v3449, %v3454
    %v3459 = vrsqrt.pop %v3407
    %v3460 = vmul.f32 %v3459, %v3407
    %v3461 = vmul.f32 %v3460, %v3459
    %v3462 = vmul.f32 0.5, %v3461
    %v3463 = vsub.f32 1.5, %v3462
    %v3464 = vmul.f32 %v3459, %v3463
    %vm3465 = vweird.f32 %v3407
    %vm3466 = vweird.f32 %v3459
    %vm3467 = vmor %vm3465, %vm3466
    %v3468 = vsel %vm3467, %v3459, %v3464
    %v3469 = vrsqrt.pop %v3408
    %v3470 = vmul.f32 %v3469, %v3408
    %v3471 = vmul.f32 %v3470, %v3469
    %v3472 = vmul.f32 0.5, %v3471
    %v3473 = vsub.f32 1.5, %v3472
    %v3474 = vmul.f32 %v3469, %v3473
    %vm3475 = vweird.f32 %v3408
    %vm3476 = vweird.f32 %v3469
    %vm3477 = vmor %vm3475, %vm3476
    %v3478 = vsel %vm3477, %v3469, %v3474
    %v3479 = vmul.f32 %v3418, %v3243
    %v3480 = vmul.f32 %v3428, %v3243
    %v3481 = vmul.f32 %v3438, %v3243
    %v3482 = vmul.f32 %v3448, %v3243
    %v3483 = vmul.f32 %v3458, %v3243
    %v3484 = vmul.f32 %v3468, %v3243
    %v3485 = vmul.f32 %v3478, %v3243
    %v3486 = vmul.f32 %v3360, %v3479
    %v3487 = vmul.f32 %v3361, %v3480
    %v3488 = vmul.f32 %v3362, %v3481
    %v3489 = vmul.f32 %v3363, %v3482
    %v3490 = vmul.f32 %v3364, %v3483
    %v3491 = vmul.f32 %v3365, %v3484
    %v3492 = vmul.f32 %v3366, %v3485
    %v3493 = vadd.f32 %v3486, %v3244
    %v3494 = vadd.f32 %v3487, %v3244
    %v3495 = vadd.f32 %v3488, %v3244
    %v3496 = vadd.f32 %v3489, %v3244
    %v3497 = vadd.f32 %v3490, %v3244
    %v3498 = vadd.f32 %v3491, %v3244
    %v3499 = vadd.f32 %v3492, %v3244
    %v3500 = vmax.f32 %v3493, 0.0
    %v3501 = vmax.f32 %v3494, 0.0
    %v3502 = vmax.f32 %v3495, 0.0
    %v3503 = vmax.f32 %v3496, 0.0
    %v3504 = vmax.f32 %v3497, 0.0
    %v3505 = vmax.f32 %v3498, 0.0
    %v3506 = vmax.f32 %v3499, 0.0
    %v3507 = vpack.c.bf16 %v3501, %v3500
    %v3508 = vpack.c.bf16 %v3503, %v3502
    %v3509 = vpack.c.bf16 %v3505, %v3504
    %v3510 = vpack.c.bf16 %v3506, %v3506
    %v3511 = vld [vmem:[%s11] sm:$0xf]
    %v3512 = vld [vmem:[%s11 + $0x4] sm:$0xf]
    %v3513 = vld [vmem:[%s11 + $0x8] sm:$0xf]
    %v3514 = vld [vmem:[%s11 + $0xc] sm:$0xf]
    %v3519 = vunpack.c.l.b16 %v3511
    %v3520 = vunpack.c.l.b16 %v3512
    %v3521 = vunpack.c.l.b16 %v3513
    %v3522 = vunpack.c.l.b16 %v3514
    %v3523 = vpack.c.b16 %v3520, %v3519
    %v3524 = vpack.c.b16 %v3522, %v3521
    %v3528 = vsel %vm133, %v3507, 0
    %v3531 = vsel %vm133, %v3508, 0
    %v3534 = vsel %vm133, %v3509, 0
    %v3537 = vsel %vm133, %v3510, 0
    %3539 = vmatpush.bf16.msra.mxu0 0
    %3540 = vmatpush.bf16.msra.mxu0 0
    %3541 = vmatpush.bf16.msra.mxu0 0
    %3542 = vmatpush.bf16.msra.mxu0 0
    %3543 = vmatpush.bf16.msra.mxu0 0
    %3544 = vmatpush.bf16.msra.mxu0 0
    %3545 = vmatpush.bf16.msra.mxu0 %v3524
    %3546 = vmatpush.bf16.msra.mxu0 %v3523
    %3547 = vmatmul.bf16.gmra.mxu0 %v3528
    %v3548 = vpop.f32.mrf.mxu0
    %v3549 = vadd.f32 0.0, %v3548
    %v3550 = vpop.f32.mrf.mxu0
    %v3551 = vadd.f32 0.0, %v3550
    %3552 = vmatmul.bf16.gmra.mxu0 %v3531
    %v3553 = vpop.f32.mrf.mxu0
    %v3554 = vadd.f32 0.0, %v3553
    %v3555 = vpop.f32.mrf.mxu0
    %v3556 = vadd.f32 0.0, %v3555
    %3557 = vmatmul.bf16.gmra.mxu0 %v3534
    %v3558 = vpop.f32.mrf.mxu0
    %v3559 = vadd.f32 0.0, %v3558
    %v3560 = vpop.f32.mrf.mxu0
    %v3561 = vadd.f32 0.0, %v3560
    %3562 = vmatmul.bf16.gmra.mxu0 %v3537
    %v3563 = vpop.f32.mrf.mxu0
    %v3564 = vadd.f32 0.0, %v3563
    %v3565 = vpop.f32.mrf.mxu0
    %3566 = vdwg.mxu0
    %v3567 = vsel %vm133, %v3549, 0.0
    %3568 = vadd.xlane.f32.xlu0 %v3567
    %v3569 = vpop.xlane.xlu0 %3568
    %v3570 = vsel %vm133, %v3551, 0.0
    %3571 = vadd.xlane.f32.xlu0 %v3570
    %v3572 = vpop.xlane.xlu0 %3571
    %v3573 = vsel %vm133, %v3554, 0.0
    %3574 = vadd.xlane.f32.xlu0 %v3573
    %v3575 = vpop.xlane.xlu0 %3574
    %v3576 = vsel %vm133, %v3556, 0.0
    %3577 = vadd.xlane.f32.xlu0 %v3576
    %v3578 = vpop.xlane.xlu0 %3577
    %v3579 = vsel %vm133, %v3559, 0.0
    %3580 = vadd.xlane.f32.xlu0 %v3579
    %v3581 = vpop.xlane.xlu0 %3580
    %v3582 = vsel %vm133, %v3561, 0.0
    %3583 = vadd.xlane.f32.xlu0 %v3582
    %v3584 = vpop.xlane.xlu0 %3583
    %v3585 = vsel %vm133, %v3564, 0.0
    %3586 = vadd.xlane.f32.xlu0 %v3585
    %v3587 = vpop.xlane.xlu0 %3586
    %v3588 = vmul.f32 %v3569, %v3352
    %v3589 = vmul.f32 %v3572, %v3352
    %v3590 = vmul.f32 %v3575, %v3352
    %v3591 = vmul.f32 %v3578, %v3352
    %v3592 = vmul.f32 %v3581, %v3352
    %v3593 = vmul.f32 %v3584, %v3352
    %v3594 = vmul.f32 %v3587, %v3352
    %v3595 = vsub.f32 %v3549, %v3588
    %v3596 = vsub.f32 %v3551, %v3589
    %v3597 = vsub.f32 %v3554, %v3590
    %v3598 = vsub.f32 %v3556, %v3591
    %v3599 = vsub.f32 %v3559, %v3592
    %v3600 = vsub.f32 %v3561, %v3593
    %v3601 = vsub.f32 %v3564, %v3594
    %v3602 = vmul.f32 %v3595, %v3595
    %v3603 = vmul.f32 %v3596, %v3596
    %v3604 = vmul.f32 %v3597, %v3597
    %v3605 = vmul.f32 %v3598, %v3598
    %v3606 = vmul.f32 %v3599, %v3599
    %v3607 = vmul.f32 %v3600, %v3600
    %v3608 = vmul.f32 %v3601, %v3601
    %v3609 = vsel %vm133, %v3602, 0.0
    %3610 = vadd.xlane.f32.xlu0 %v3609
    %v3611 = vpop.xlane.xlu0 %3610
    %v3612 = vsel %vm133, %v3603, 0.0
    %3613 = vadd.xlane.f32.xlu0 %v3612
    %v3614 = vpop.xlane.xlu0 %3613
    %v3615 = vsel %vm133, %v3604, 0.0
    %3616 = vadd.xlane.f32.xlu0 %v3615
    %v3617 = vpop.xlane.xlu0 %3616
    %v3618 = vsel %vm133, %v3605, 0.0
    %3619 = vadd.xlane.f32.xlu0 %v3618
    %v3620 = vpop.xlane.xlu0 %3619
    %v3621 = vsel %vm133, %v3606, 0.0
    %3622 = vadd.xlane.f32.xlu0 %v3621
    %v3623 = vpop.xlane.xlu0 %3622
    %v3624 = vsel %vm133, %v3607, 0.0
    %3625 = vadd.xlane.f32.xlu0 %v3624
    %v3626 = vpop.xlane.xlu0 %3625
    %v3627 = vsel %vm133, %v3608, 0.0
    %3628 = vadd.xlane.f32.xlu0 %v3627
    %v3629 = vpop.xlane.xlu0 %3628
    %v3630 = vmul.f32 %v3611, %v3352
    %v3631 = vmul.f32 %v3614, %v3352
    %v3632 = vmul.f32 %v3617, %v3352
    %v3633 = vmul.f32 %v3620, %v3352
    %v3634 = vmul.f32 %v3623, %v3352
    %v3635 = vmul.f32 %v3626, %v3352
    %v3636 = vmul.f32 %v3629, %v3352
    %v3637 = vadd.f32 %v3630, 1e-05
    %v3638 = vadd.f32 %v3631, 1e-05
    %v3639 = vadd.f32 %v3632, 1e-05
    %v3640 = vadd.f32 %v3633, 1e-05
    %v3641 = vadd.f32 %v3634, 1e-05
    %v3642 = vadd.f32 %v3635, 1e-05
    %v3643 = vadd.f32 %v3636, 1e-05
    %v3644 = vrsqrt.pop %v3637
    %v3645 = vmul.f32 %v3644, %v3637
    %v3646 = vmul.f32 %v3645, %v3644
    %v3647 = vmul.f32 0.5, %v3646
    %v3648 = vsub.f32 1.5, %v3647
    %v3649 = vmul.f32 %v3644, %v3648
    %vm3650 = vweird.f32 %v3637
    %vm3651 = vweird.f32 %v3644
    %vm3652 = vmor %vm3650, %vm3651
    %v3653 = vsel %vm3652, %v3644, %v3649
    %v3654 = vrsqrt.pop %v3638
    %v3655 = vmul.f32 %v3654, %v3638
    %v3656 = vmul.f32 %v3655, %v3654
    %v3657 = vmul.f32 0.5, %v3656
    %v3658 = vsub.f32 1.5, %v3657
    %v3659 = vmul.f32 %v3654, %v3658
    %vm3660 = vweird.f32 %v3638
    %vm3661 = vweird.f32 %v3654
    %vm3662 = vmor %vm3660, %vm3661
    %v3663 = vsel %vm3662, %v3654, %v3659
    %v3664 = vrsqrt.pop %v3639
    %v3665 = vmul.f32 %v3664, %v3639
    %v3666 = vmul.f32 %v3665, %v3664
    %v3667 = vmul.f32 0.5, %v3666
    %v3668 = vsub.f32 1.5, %v3667
    %v3669 = vmul.f32 %v3664, %v3668
    %vm3670 = vweird.f32 %v3639
    %vm3671 = vweird.f32 %v3664
    %vm3672 = vmor %vm3670, %vm3671
    %v3673 = vsel %vm3672, %v3664, %v3669
    %v3674 = vrsqrt.pop %v3640
    %v3675 = vmul.f32 %v3674, %v3640
    %v3676 = vmul.f32 %v3675, %v3674
    %v3677 = vmul.f32 0.5, %v3676
    %v3678 = vsub.f32 1.5, %v3677
    %v3679 = vmul.f32 %v3674, %v3678
    %vm3680 = vweird.f32 %v3640
    %vm3681 = vweird.f32 %v3674
    %vm3682 = vmor %vm3680, %vm3681
    %v3683 = vsel %vm3682, %v3674, %v3679
    %v3684 = vrsqrt.pop %v3641
    %v3685 = vmul.f32 %v3684, %v3641
    %v3686 = vmul.f32 %v3685, %v3684
    %v3687 = vmul.f32 0.5, %v3686
    %v3688 = vsub.f32 1.5, %v3687
    %v3689 = vmul.f32 %v3684, %v3688
    %vm3690 = vweird.f32 %v3641
    %vm3691 = vweird.f32 %v3684
    %vm3692 = vmor %vm3690, %vm3691
    %v3693 = vsel %vm3692, %v3684, %v3689
    %v3694 = vrsqrt.pop %v3642
    %v3695 = vmul.f32 %v3694, %v3642
    %v3696 = vmul.f32 %v3695, %v3694
    %v3697 = vmul.f32 0.5, %v3696
    %v3698 = vsub.f32 1.5, %v3697
    %v3699 = vmul.f32 %v3694, %v3698
    %vm3700 = vweird.f32 %v3642
    %vm3701 = vweird.f32 %v3694
    %vm3702 = vmor %vm3700, %vm3701
    %v3703 = vsel %vm3702, %v3694, %v3699
    %v3704 = vrsqrt.pop %v3643
    %v3705 = vmul.f32 %v3704, %v3643
    %v3706 = vmul.f32 %v3705, %v3704
    %v3707 = vmul.f32 0.5, %v3706
    %v3708 = vsub.f32 1.5, %v3707
    %v3709 = vmul.f32 %v3704, %v3708
    %vm3710 = vweird.f32 %v3643
    %vm3711 = vweird.f32 %v3704
    %vm3712 = vmor %vm3710, %vm3711
    %v3713 = vsel %vm3712, %v3704, %v3709
    %v3714 = vmul.f32 %v3653, %v3245
    %v3715 = vmul.f32 %v3663, %v3245
    %v3716 = vmul.f32 %v3673, %v3245
    %v3717 = vmul.f32 %v3683, %v3245
    %v3718 = vmul.f32 %v3693, %v3245
    %v3719 = vmul.f32 %v3703, %v3245
    %v3720 = vmul.f32 %v3713, %v3245
    %v3721 = vmul.f32 %v3595, %v3714
    %v3722 = vmul.f32 %v3596, %v3715
    %v3723 = vmul.f32 %v3597, %v3716
    %v3724 = vmul.f32 %v3598, %v3717
    %v3725 = vmul.f32 %v3599, %v3718
    %v3726 = vmul.f32 %v3600, %v3719
    %v3727 = vmul.f32 %v3601, %v3720
    %v3728 = vadd.f32 %v3721, %v3246
    %v3729 = vadd.f32 %v3722, %v3246
    %v3730 = vadd.f32 %v3723, %v3246
    %v3731 = vadd.f32 %v3724, %v3246
    %v3732 = vadd.f32 %v3725, %v3246
    %v3733 = vadd.f32 %v3726, %v3246
    %v3734 = vadd.f32 %v3727, %v3246
    %v3735 = vld [vmem:[%s10] sm:$0xf]
    %v3736 = vld [vmem:[%s10 + $0x4] sm:$0xf]
    %v3737 = vld [vmem:[%s10 + $0x8] sm:$0xf]
    %v3738 = vld [vmem:[%s10 + $0xc] sm:$0xf]
    %v3739 = vld [vmem:[%s10 + $0x10] sm:$0xf]
    %v3740 = vld [vmem:[%s10 + $0x14] sm:$0xf]
    %v3741 = vld [vmem:[%s10 + $0x18] sm:$0xf]
    %v3742 = vld [vmem:[%s10 + $0x1c] sm:$0xf]
    %v3751 = vunpack.c.l.b16 %v3735
    %v3752 = vunpack.c.l.b16 %v3736
    %v3753 = vunpack.c.l.b16 %v3737
    %v3754 = vunpack.c.l.b16 %v3738
    %v3755 = vunpack.c.l.b16 %v3739
    %v3756 = vunpack.c.l.b16 %v3740
    %v3757 = vunpack.c.l.b16 %v3741
    %v3758 = vunpack.c.l.b16 %v3742
    %v3759 = vpack.c.b16 %v3752, %v3751
    %v3760 = vpack.c.b16 %v3754, %v3753
    %v3761 = vpack.c.b16 %v3756, %v3755
    %v3762 = vpack.c.b16 %v3758, %v3757
    %3767 = vmatpush.bf16.msra.mxu0 0
    %3768 = vmatpush.bf16.msra.mxu0 0
    %3769 = vmatpush.bf16.msra.mxu0 0
    %3770 = vmatpush.bf16.msra.mxu0 0
    %3771 = vmatpush.bf16.msra.mxu0 %v3762
    %3772 = vmatpush.bf16.msra.mxu0 %v3761
    %3773 = vmatpush.bf16.msra.mxu0 %v3760
    %3774 = vmatpush.bf16.msra.mxu0 %v3759
    %3775 = vmatmul.bf16.gmra.mxu0 %v3286
    %v3776 = vpop.f32.mrf.mxu0
    %v3777 = vadd.f32 0.0, %v3776
    %v3778 = vpop.f32.mrf.mxu0
    %v3779 = vadd.f32 0.0, %v3778
    %3780 = vmatmul.bf16.gmra.mxu0 %v3289
    %v3781 = vpop.f32.mrf.mxu0
    %v3782 = vadd.f32 0.0, %v3781
    %v3783 = vpop.f32.mrf.mxu0
    %v3784 = vadd.f32 0.0, %v3783
    %3785 = vmatmul.bf16.gmra.mxu0 %v3292
    %v3786 = vpop.f32.mrf.mxu0
    %v3787 = vadd.f32 0.0, %v3786
    %v3788 = vpop.f32.mrf.mxu0
    %v3789 = vadd.f32 0.0, %v3788
    %3790 = vmatmul.bf16.gmra.mxu0 %v3295
    %v3791 = vpop.f32.mrf.mxu0
    %v3792 = vadd.f32 0.0, %v3791
    %v3793 = vpop.f32.mrf.mxu0
    %3794 = vdwg.mxu0
    %v3795 = vsel %vm133, %v3777, 0.0
    %3796 = vadd.xlane.f32.xlu0 %v3795
    %v3797 = vpop.xlane.xlu0 %3796
    %v3798 = vsel %vm133, %v3779, 0.0
    %3799 = vadd.xlane.f32.xlu0 %v3798
    %v3800 = vpop.xlane.xlu0 %3799
    %v3801 = vsel %vm133, %v3782, 0.0
    %3802 = vadd.xlane.f32.xlu0 %v3801
    %v3803 = vpop.xlane.xlu0 %3802
    %v3804 = vsel %vm133, %v3784, 0.0
    %3805 = vadd.xlane.f32.xlu0 %v3804
    %v3806 = vpop.xlane.xlu0 %3805
    %v3807 = vsel %vm133, %v3787, 0.0
    %3808 = vadd.xlane.f32.xlu0 %v3807
    %v3809 = vpop.xlane.xlu0 %3808
    %v3810 = vsel %vm133, %v3789, 0.0
    %3811 = vadd.xlane.f32.xlu0 %v3810
    %v3812 = vpop.xlane.xlu0 %3811
    %v3813 = vsel %vm133, %v3792, 0.0
    %3814 = vadd.xlane.f32.xlu0 %v3813
    %v3815 = vpop.xlane.xlu0 %3814
    %v3816 = vmul.f32 %v3797, %v3352
    %v3817 = vmul.f32 %v3800, %v3352
    %v3818 = vmul.f32 %v3803, %v3352
    %v3819 = vmul.f32 %v3806, %v3352
    %v3820 = vmul.f32 %v3809, %v3352
    %v3821 = vmul.f32 %v3812, %v3352
    %v3822 = vmul.f32 %v3815, %v3352
    %v3823 = vsub.f32 %v3777, %v3816
    %v3824 = vsub.f32 %v3779, %v3817
    %v3825 = vsub.f32 %v3782, %v3818
    %v3826 = vsub.f32 %v3784, %v3819
    %v3827 = vsub.f32 %v3787, %v3820
    %v3828 = vsub.f32 %v3789, %v3821
    %v3829 = vsub.f32 %v3792, %v3822
    %v3830 = vmul.f32 %v3823, %v3823
    %v3831 = vmul.f32 %v3824, %v3824
    %v3832 = vmul.f32 %v3825, %v3825
    %v3833 = vmul.f32 %v3826, %v3826
    %v3834 = vmul.f32 %v3827, %v3827
    %v3835 = vmul.f32 %v3828, %v3828
    %v3836 = vmul.f32 %v3829, %v3829
    %v3837 = vsel %vm133, %v3830, 0.0
    %3838 = vadd.xlane.f32.xlu0 %v3837
    %v3839 = vpop.xlane.xlu0 %3838
    %v3840 = vsel %vm133, %v3831, 0.0
    %3841 = vadd.xlane.f32.xlu0 %v3840
    %v3842 = vpop.xlane.xlu0 %3841
    %v3843 = vsel %vm133, %v3832, 0.0
    %3844 = vadd.xlane.f32.xlu0 %v3843
    %v3845 = vpop.xlane.xlu0 %3844
    %v3846 = vsel %vm133, %v3833, 0.0
    %3847 = vadd.xlane.f32.xlu0 %v3846
    %v3848 = vpop.xlane.xlu0 %3847
    %v3849 = vsel %vm133, %v3834, 0.0
    %3850 = vadd.xlane.f32.xlu0 %v3849
    %v3851 = vpop.xlane.xlu0 %3850
    %v3852 = vsel %vm133, %v3835, 0.0
    %3853 = vadd.xlane.f32.xlu0 %v3852
    %v3854 = vpop.xlane.xlu0 %3853
    %v3855 = vsel %vm133, %v3836, 0.0
    %3856 = vadd.xlane.f32.xlu0 %v3855
    %v3857 = vpop.xlane.xlu0 %3856
    %v3858 = vmul.f32 %v3839, %v3352
    %v3859 = vmul.f32 %v3842, %v3352
    %v3860 = vmul.f32 %v3845, %v3352
    %v3861 = vmul.f32 %v3848, %v3352
    %v3862 = vmul.f32 %v3851, %v3352
    %v3863 = vmul.f32 %v3854, %v3352
    %v3864 = vmul.f32 %v3857, %v3352
    %v3865 = vadd.f32 %v3858, 1e-05
    %v3866 = vadd.f32 %v3859, 1e-05
    %v3867 = vadd.f32 %v3860, 1e-05
    %v3868 = vadd.f32 %v3861, 1e-05
    %v3869 = vadd.f32 %v3862, 1e-05
    %v3870 = vadd.f32 %v3863, 1e-05
    %v3871 = vadd.f32 %v3864, 1e-05
    %v3872 = vrsqrt.pop %v3865
    %v3873 = vmul.f32 %v3872, %v3865
    %v3874 = vmul.f32 %v3873, %v3872
    %v3875 = vmul.f32 0.5, %v3874
    %v3876 = vsub.f32 1.5, %v3875
    %v3877 = vmul.f32 %v3872, %v3876
    %vm3878 = vweird.f32 %v3865
    %vm3879 = vweird.f32 %v3872
    %vm3880 = vmor %vm3878, %vm3879
    %v3881 = vsel %vm3880, %v3872, %v3877
    %v3882 = vrsqrt.pop %v3866
    %v3883 = vmul.f32 %v3882, %v3866
    %v3884 = vmul.f32 %v3883, %v3882
    %v3885 = vmul.f32 0.5, %v3884
    %v3886 = vsub.f32 1.5, %v3885
    %v3887 = vmul.f32 %v3882, %v3886
    %vm3888 = vweird.f32 %v3866
    %vm3889 = vweird.f32 %v3882
    %vm3890 = vmor %vm3888, %vm3889
    %v3891 = vsel %vm3890, %v3882, %v3887
    %v3892 = vrsqrt.pop %v3867
    %v3893 = vmul.f32 %v3892, %v3867
    %v3894 = vmul.f32 %v3893, %v3892
    %v3895 = vmul.f32 0.5, %v3894
    %v3896 = vsub.f32 1.5, %v3895
    %v3897 = vmul.f32 %v3892, %v3896
    %vm3898 = vweird.f32 %v3867
    %vm3899 = vweird.f32 %v3892
    %vm3900 = vmor %vm3898, %vm3899
    %v3901 = vsel %vm3900, %v3892, %v3897
    %v3902 = vrsqrt.pop %v3868
    %v3903 = vmul.f32 %v3902, %v3868
    %v3904 = vmul.f32 %v3903, %v3902
    %v3905 = vmul.f32 0.5, %v3904
    %v3906 = vsub.f32 1.5, %v3905
    %v3907 = vmul.f32 %v3902, %v3906
    %vm3908 = vweird.f32 %v3868
    %vm3909 = vweird.f32 %v3902
    %vm3910 = vmor %vm3908, %vm3909
    %v3911 = vsel %vm3910, %v3902, %v3907
    %v3912 = vrsqrt.pop %v3869
    %v3913 = vmul.f32 %v3912, %v3869
    %v3914 = vmul.f32 %v3913, %v3912
    %v3915 = vmul.f32 0.5, %v3914
    %v3916 = vsub.f32 1.5, %v3915
    %v3917 = vmul.f32 %v3912, %v3916
    %vm3918 = vweird.f32 %v3869
    %vm3919 = vweird.f32 %v3912
    %vm3920 = vmor %vm3918, %vm3919
    %v3921 = vsel %vm3920, %v3912, %v3917
    %v3922 = vrsqrt.pop %v3870
    %v3923 = vmul.f32 %v3922, %v3870
    %v3924 = vmul.f32 %v3923, %v3922
    %v3925 = vmul.f32 0.5, %v3924
    %v3926 = vsub.f32 1.5, %v3925
    %v3927 = vmul.f32 %v3922, %v3926
    %vm3928 = vweird.f32 %v3870
    %vm3929 = vweird.f32 %v3922
    %vm3930 = vmor %vm3928, %vm3929
    %v3931 = vsel %vm3930, %v3922, %v3927
    %v3932 = vrsqrt.pop %v3871
    %v3933 = vmul.f32 %v3932, %v3871
    %v3934 = vmul.f32 %v3933, %v3932
    %v3935 = vmul.f32 0.5, %v3934
    %v3936 = vsub.f32 1.5, %v3935
    %v3937 = vmul.f32 %v3932, %v3936
    %vm3938 = vweird.f32 %v3871
    %vm3939 = vweird.f32 %v3932
    %vm3940 = vmor %vm3938, %vm3939
    %v3941 = vsel %vm3940, %v3932, %v3937
    %v3942 = vmul.f32 %v3881, %v3247
    %v3943 = vmul.f32 %v3891, %v3247
    %v3944 = vmul.f32 %v3901, %v3247
    %v3945 = vmul.f32 %v3911, %v3247
    %v3946 = vmul.f32 %v3921, %v3247
    %v3947 = vmul.f32 %v3931, %v3247
    %v3948 = vmul.f32 %v3941, %v3247
    %v3949 = vmul.f32 %v3823, %v3942
    %v3950 = vmul.f32 %v3824, %v3943
    %v3951 = vmul.f32 %v3825, %v3944
    %v3952 = vmul.f32 %v3826, %v3945
    %v3953 = vmul.f32 %v3827, %v3946
    %v3954 = vmul.f32 %v3828, %v3947
    %v3955 = vmul.f32 %v3829, %v3948
    %v3956 = vadd.f32 %v3949, %v3248
    %v3957 = vadd.f32 %v3950, %v3248
    %v3958 = vadd.f32 %v3951, %v3248
    %v3959 = vadd.f32 %v3952, %v3248
    %v3960 = vadd.f32 %v3953, %v3248
    %v3961 = vadd.f32 %v3954, %v3248
    %v3962 = vadd.f32 %v3955, %v3248
    %v3963 = vadd.f32 %v3728, %v3956
    %v3964 = vadd.f32 %v3729, %v3957
    %v3965 = vadd.f32 %v3730, %v3958
    %v3966 = vadd.f32 %v3731, %v3959
    %v3967 = vadd.f32 %v3732, %v3960
    %v3968 = vadd.f32 %v3733, %v3961
    %v3969 = vadd.f32 %v3734, %v3962
    %v3970 = vmax.f32 %v3963, 0.0
    %v3971 = vmax.f32 %v3964, 0.0
    %v3972 = vmax.f32 %v3965, 0.0
    %v3973 = vmax.f32 %v3966, 0.0
    %v3974 = vmax.f32 %v3967, 0.0
    %v3975 = vmax.f32 %v3968, 0.0
    %v3976 = vmax.f32 %v3969, 0.0
    %v3977 = vpack.c.bf16 %v3971, %v3970
    %v3978 = vpack.c.bf16 %v3973, %v3972
    %v3979 = vpack.c.bf16 %v3975, %v3974
    %v3980 = vpack.c.bf16 %v3976, %v3976
    %v3981 = vld [vmem:[%s12] sm:$0xf]
    %v3982 = vld [vmem:[%s12 + $0x4] sm:$0xf]
    %v3983 = vld [vmem:[%s12 + $0x8] sm:$0xf]
    %v3984 = vld [vmem:[%s12 + $0xc] sm:$0xf]
    %v3985 = vld [vmem:[%s13 + $0x30] ss:$0 sm:$0xff]
    %v3990 = vunpack.c.l.b16 %v3981
    %v3991 = vunpack.c.l.b16 %v3982
    %v3992 = vunpack.c.l.b16 %v3983
    %v3993 = vunpack.c.l.b16 %v3984
    %v3994 = vpack.c.b16 %v3991, %v3990
    %v3995 = vpack.c.b16 %v3993, %v3992
    %v3999 = vsel %vm133, %v3977, 0
    %v4002 = vsel %vm133, %v3978, 0
    %v4005 = vsel %vm133, %v3979, 0
    %v4008 = vsel %vm133, %v3980, 0
    %4010 = vmatpush.bf16.msra.mxu0 0
    %4011 = vmatpush.bf16.msra.mxu0 0
    %4012 = vmatpush.bf16.msra.mxu0 0
    %4013 = vmatpush.bf16.msra.mxu0 0
    %4014 = vmatpush.bf16.msra.mxu0 0
    %4015 = vmatpush.bf16.msra.mxu0 0
    %4016 = vmatpush.bf16.msra.mxu0 %v3995
    %4017 = vmatpush.bf16.msra.mxu0 %v3994
    %4018 = vmatmul.bf16.gmra.mxu0 %v3999
    %v4019 = vpop.f32.mrf.mxu0
    %v4020 = vadd.f32 %v3985, %v4019
    %v4021 = vpop.f32.mrf.mxu0
    %v4022 = vadd.f32 %v3985, %v4021
    %4023 = vmatmul.bf16.gmra.mxu0 %v4002
    %v4024 = vpop.f32.mrf.mxu0
    %v4025 = vadd.f32 %v3985, %v4024
    %v4026 = vpop.f32.mrf.mxu0
    %v4027 = vadd.f32 %v3985, %v4026
    %4028 = vmatmul.bf16.gmra.mxu0 %v4005
    %v4029 = vpop.f32.mrf.mxu0
    %v4030 = vadd.f32 %v3985, %v4029
    %v4031 = vpop.f32.mrf.mxu0
    %v4032 = vadd.f32 %v3985, %v4031
    %4033 = vmatmul.bf16.gmra.mxu0 %v4008
    %v4034 = vpop.f32.mrf.mxu0
    %v4035 = vadd.f32 %v3985, %v4034
    %v4036 = vpop.f32.mrf.mxu0
    %4037 = vdwg.mxu0
    %4038 = vst [vmem:[%s14] sm:$0xff] %v4020
    %4039 = vst [vmem:[%s14 + $0x8] sm:$0xff] %v4022
    %4040 = vst [vmem:[%s14 + $0x10] sm:$0xff] %v4025
    %4041 = vst [vmem:[%s14 + $0x18] sm:$0xff] %v4027
    %4042 = vst [vmem:[%s14 + $0x20] sm:$0xff] %v4030
    %4043 = vst [vmem:[%s14 + $0x28] sm:$0xff] %v4032
    %4044 = vst [vmem:[%s14 + $0x30] sm:$0xff] %v4035
    // Predicated region
    $region70: #{mapper_forward.1} parent=1 // pred_check
      _
    $region71: #{mapper_forward.1} parent=1 // pred_check_branch
      %4046 = sbr.rel (0) target = $region73
    $region72: #{mapper_forward.1} parent=1 // pred_region
      _
    $region73: #{mapper_forward.1} parent=1 // pred_fallthru
      _
    // Predicated region
    $region74: #{mapper_forward.1} parent=1 // pred_check
      _
    $region75: #{mapper_forward.1} parent=1 // pred_check_branch
      %4048 = sbr.rel (0) target = $region77
    $region76: #{mapper_forward.1} parent=1 // pred_region
      _
    $region77: #{mapper_forward.1} parent=1 // pred_fallthru
      _
    %4049 = vsyncpa [#allocation3], 1
    %4050 = vsyncpa [#allocation5], 1

</llo_original>
